<compile_context>
chip_gen: v6e
topology: v6e:2x2x1
jax: 0.10.0
libtpu: 0.0.40
codegen_flags: <defaults>
</compile_context>

<pallas_src>
import jax
import jax.numpy as jnp
from jax.experimental import pallas as pl
from jax.experimental.pallas import tpu as pltpu


def _round_up(x, m):
    return ((x + m - 1) // m) * m


# ----------------------------- fused LSTM kernel ------------------------------
def _make_fused_lstm_kernel(T, B, F, Hp, num_layers):
    """Kernel over refs:
        refs[0]                    x2:   (T*B, F)   time-major rows (row = t*B + b)
        refs[1+3l], refs[2+3l],    w_ih: (F or Hp, 4*Hp), w_hh: (Hp, 4*Hp)
        refs[3+3l]                 bias: (1, 4*Hp)           (per layer l)
        refs[1+3L], refs[2+3L]     w_lc: (Hp, O), b_lc: (1, O)
        refs[3+3L]                 out:  (B, O)
        refs[4+3L]                 hseq: (T*B, Hp) VMEM scratch (inter-layer)
    """
    Gp = 4 * Hp

    def kernel(*refs):
        wlc_ref = refs[1 + 3 * num_layers]
        blc_ref = refs[2 + 3 * num_layers]
        out_ref = refs[3 + 3 * num_layers]
        hseq_ref = refs[4 + 3 * num_layers]

        layer_in = refs[0][...].astype(jnp.float32)          # (T*B, F) for layer 0
        h = None
        for l in range(num_layers):
            wih = refs[1 + 3 * l][...]                        # (in_p, Gp)
            whh = refs[2 + 3 * l][...]                        # (Hp,  Gp)
            b = refs[3 + 3 * l][...]                          # (1,   Gp)

            # Input projection for ALL timesteps at once: one big MXU matmul
            # (M = T*B) instead of T tiny ones on the serial chain.
            xg = jnp.dot(layer_in, wih,
                         preferred_element_type=jnp.float32) + b   # (T*B, Gp)

            h = jnp.zeros((B, Hp), jnp.float32)
            c = jnp.zeros((B, Hp), jnp.float32)
            for t in range(T):                                # static, fully unrolled
                gates = xg[t * B:(t + 1) * B, :] + jnp.dot(
                    h, whh, preferred_element_type=jnp.float32)    # (B, Gp)
                # All slices below are at lane offsets that are multiples of
                # 128 (Hp), i.e. whole-vreg slices; transcendentals run on
                # full vregs.
                i_g = jax.nn.sigmoid(gates[:, 0 * Hp:1 * Hp])
                f_g = jax.nn.sigmoid(gates[:, 1 * Hp:2 * Hp])
                g_g = jnp.tanh(gates[:, 2 * Hp:3 * Hp])
                o_g = jax.nn.sigmoid(gates[:, 3 * Hp:4 * Hp])
                c = f_g * c + i_g * g_g
                h = o_g * jnp.tanh(c)
                if l < num_layers - 1:
                    hseq_ref[t * B:(t + 1) * B, :] = h        # VMEM only, no HBM
            if l < num_layers - 1:
                layer_in = hseq_ref[...]                      # (T*B, Hp)

        # Linear head on last timestep of last layer (dropout eval == identity).
        out = jnp.dot(h, wlc_ref[...],
                      preferred_element_type=jnp.float32) + blc_ref[...]
        out_ref[...] = out.astype(out_ref.dtype)

    return kernel


def fused_lstm_forward(params, x_btf):
    """x_btf: (B, T, F) batch-first, like the PyTorch module's forward."""
    B, T, F = x_btf.shape
    num_layers = len(params["lstm"])
    Gp = params["lstm"][0]["bias"].shape[1]
    Hp = Gp // 4
    O = params["lc"]["bias"].shape[1]

    # Time-major flatten so each timestep is a contiguous (B, *) row block.
    x2 = jnp.transpose(x_btf.astype(jnp.float32), (1, 0, 2)).reshape(T * B, F)

    inputs = [x2]
    in_specs = [pl.BlockSpec((T * B, F), lambda: (0, 0))]
    for lp in params["lstm"]:
        for arr in (lp["w_ih_t"], lp["w_hh_t"], lp["bias"]):
            inputs.append(arr)
            in_specs.append(pl.BlockSpec(arr.shape, lambda: (0, 0)))
    for arr in (params["lc"]["w_t"], params["lc"]["bias"]):
        inputs.append(arr)
        in_specs.append(pl.BlockSpec(arr.shape, lambda: (0, 0)))

    kernel = _make_fused_lstm_kernel(T, B, F, Hp, num_layers)
    return pl.pallas_call(
        kernel,
        out_shape=jax.ShapeDtypeStruct((B, O), jnp.float32),
        in_specs=in_specs,
        out_specs=pl.BlockSpec((B, O), lambda: (0, 0)),
        scratch_shapes=[pltpu.VMEM((T * B, Hp), jnp.float32)],
    )(*inputs)


# ------------------------------ parameter init --------------------------------
def _pack_gate_weight(w, H, Hp, in_dim, in_dim_p):
    """w: PyTorch layout (4H, in_dim). Returns transposed (in_dim_p, 4*Hp) with
    gate k occupying lanes [k*Hp, k*Hp + H); all padding is exactly zero."""
    out = jnp.zeros((in_dim_p, 4 * Hp), jnp.float32)
    for k in range(4):
        out = out.at[:in_dim, k * Hp:k * Hp + H].set(w[k * H:(k + 1) * H, :].T)
    return out


def _pack_gate_bias(bias, H, Hp):
    out = jnp.zeros((1, 4 * Hp), jnp.float32)
    for k in range(4):
        out = out.at[0, k * Hp:k * Hp + H].set(bias[k * H:(k + 1) * H])
    return out


def init_params(key, hidden_size, feature_size, num_layers, output_size):
    """PyTorch-style init: uniform(-1/sqrt(H), 1/sqrt(H)), then repacked into
    the lane-padded gate layout used by the fused kernel."""
    H = hidden_size
    Hp = _round_up(H, 128)
    bound = 1.0 / float(H) ** 0.5
    params = {"lstm": [], "lc": None}
    for layer in range(num_layers):
        in_sz = feature_size if layer == 0 else hidden_size
        in_sz_p = feature_size if layer == 0 else Hp
        key, k1, k2, k3, k4 = jax.random.split(key, 5)
        w_ih = jax.random.uniform(k1, (4 * H, in_sz), jnp.float32, -bound, bound)
        w_hh = jax.random.uniform(k2, (4 * H, H), jnp.float32, -bound, bound)
        b_ih = jax.random.uniform(k3, (4 * H,), jnp.float32, -bound, bound)
        b_hh = jax.random.uniform(k4, (4 * H,), jnp.float32, -bound, bound)
        params["lstm"].append({
            "w_ih_t": _pack_gate_weight(w_ih, H, Hp, in_sz, in_sz_p),  # (in_p, 4Hp)
            "w_hh_t": _pack_gate_weight(w_hh, H, Hp, H, Hp),           # (Hp, 4Hp)
            "bias": _pack_gate_bias(b_ih + b_hh, H, Hp),               # (1, 4Hp)
        })
    key, k1, k2 = jax.random.split(key, 3)
    w_lc = jax.random.uniform(k1, (output_size, H), jnp.float32, -bound, bound)
    b_lc = jax.random.uniform(k2, (output_size,), jnp.float32, -bound, bound)
    params["lc"] = {
        "w_t": jnp.zeros((Hp, output_size), jnp.float32).at[:H, :].set(w_lc.T),
        "bias": b_lc[None, :],
    }
    return params


if __name__ == "__main__":
    # Small shapes consistent with the module's forward.
    B, T = 2, 8
    feature_size, hidden_size, num_layers, output_size = 16, 32, 2, 4

    key = jax.random.PRNGKey(0)
    key_p, key_x = jax.random.split(key)
    params = init_params(key_p, hidden_size, feature_size, num_layers, output_size)
    x = jax.random.normal(key_x, (B, T, feature_size), jnp.float32)

    out = jax.jit(fused_lstm_forward)(params, x)
    out = jax.block_until_ready(out)
    assert out.shape == (B, output_size)
    print("KERNEL_OK")
</pallas_src>

<mosaic_0001>
module attributes {stable_mosaic.version = 11 : i64} {
  func.func @kernel(%arg0: memref<16x16xf32, #tpu.memory_space<vmem>>, %arg1: memref<16x512xf32, #tpu.memory_space<vmem>>, %arg2: memref<128x512xf32, #tpu.memory_space<vmem>>, %arg3: memref<1x512xf32, #tpu.memory_space<vmem>>, %arg4: memref<128x512xf32, #tpu.memory_space<vmem>>, %arg5: memref<128x512xf32, #tpu.memory_space<vmem>>, %arg6: memref<1x512xf32, #tpu.memory_space<vmem>>, %arg7: memref<128x4xf32, #tpu.memory_space<vmem>>, %arg8: memref<1x4xf32, #tpu.memory_space<vmem>>, %arg9: memref<2x4xf32, #tpu.memory_space<vmem>>, %arg10: memref<16x128xf32, #tpu.memory_space<vmem>>) attributes {dimension_semantics = [], scalar_prefetch = 0 : i64, scratch_operands = 1 : i64, tpu.core_type = #tpu.core_type<tc>} {
    %c0 = arith.constant 0 : index
    %c0_0 = arith.constant 0 : index
    %0 = vector.load %arg0[%c0, %c0_0] : memref<16x16xf32, #tpu.memory_space<vmem>>, vector<16x16xf32>
    %c0_1 = arith.constant 0 : index
    %c0_2 = arith.constant 0 : index
    %1 = vector.load %arg1[%c0_1, %c0_2] : memref<16x512xf32, #tpu.memory_space<vmem>>, vector<16x512xf32>
    %c0_3 = arith.constant 0 : index
    %c0_4 = arith.constant 0 : index
    %2 = vector.load %arg2[%c0_3, %c0_4] : memref<128x512xf32, #tpu.memory_space<vmem>>, vector<128x512xf32>
    %c0_5 = arith.constant 0 : index
    %c0_6 = arith.constant 0 : index
    %3 = vector.load %arg3[%c0_5, %c0_6] : memref<1x512xf32, #tpu.memory_space<vmem>>, vector<1x512xf32>
    %cst = arith.constant dense<0.000000e+00> : vector<16x512xf32>
    %4 = tpu.matmul %0, %1, %cst {dimension_numbers = #tpu.dot_dimension_numbers<[1], [0], [0], [1], [0, 0, 1, 1], [], []>} : vector<16x16xf32>, vector<16x512xf32>, vector<16x512xf32> -> vector<16x512xf32>
    %5 = vector.broadcast %3 : vector<1x512xf32> to vector<16x512xf32>
    %6 = arith.addf %4, %5 : vector<16x512xf32>
    %cst_7 = arith.constant 0.000000e+00 : f32
    %7 = vector.broadcast %cst_7 : f32 to vector<2x128xf32>
    %cst_8 = arith.constant 0.000000e+00 : f32
    %8 = vector.broadcast %cst_8 : f32 to vector<2x128xf32>
    %9 = vector.extract_strided_slice %6 {offsets = [0, 0], sizes = [2, 512], strides = [1, 1]} : vector<16x512xf32> to vector<2x512xf32>
    %cst_9 = arith.constant dense<0.000000e+00> : vector<2x512xf32>
    %10 = tpu.matmul %7, %2, %cst_9 {dimension_numbers = #tpu.dot_dimension_numbers<[1], [0], [0], [1], [0, 0, 1, 1], [], []>} : vector<2x128xf32>, vector<128x512xf32>, vector<2x512xf32> -> vector<2x512xf32>
    %11 = arith.addf %9, %10 : vector<2x512xf32>
    %12 = vector.extract_strided_slice %11 {offsets = [0, 0], sizes = [2, 128], strides = [1, 1]} : vector<2x512xf32> to vector<2x128xf32>
    %13 = arith.negf %12 : vector<2x128xf32>
    %14 = math.exp %13 : vector<2x128xf32>
    %cst_10 = arith.constant 1.000000e+00 : f32
    %15 = vector.broadcast %cst_10 : f32 to vector<2x128xf32>
    %16 = arith.addf %15, %14 : vector<2x128xf32>
    %17 = arith.divf %15, %16 : vector<2x128xf32>
    %18 = vector.extract_strided_slice %11 {offsets = [0, 128], sizes = [2, 128], strides = [1, 1]} : vector<2x512xf32> to vector<2x128xf32>
    %19 = arith.negf %18 : vector<2x128xf32>
    %20 = math.exp %19 : vector<2x128xf32>
    %cst_11 = arith.constant 1.000000e+00 : f32
    %21 = vector.broadcast %cst_11 : f32 to vector<2x128xf32>
    %22 = arith.addf %21, %20 : vector<2x128xf32>
    %23 = arith.divf %21, %22 : vector<2x128xf32>
    %24 = vector.extract_strided_slice %11 {offsets = [0, 256], sizes = [2, 128], strides = [1, 1]} : vector<2x512xf32> to vector<2x128xf32>
    %25 = math.tanh %24 : vector<2x128xf32>
    %26 = vector.extract_strided_slice %11 {offsets = [0, 384], sizes = [2, 128], strides = [1, 1]} : vector<2x512xf32> to vector<2x128xf32>
    %27 = arith.negf %26 : vector<2x128xf32>
    %28 = math.exp %27 : vector<2x128xf32>
    %cst_12 = arith.constant 1.000000e+00 : f32
    %29 = vector.broadcast %cst_12 : f32 to vector<2x128xf32>
    %30 = arith.addf %29, %28 : vector<2x128xf32>
    %31 = arith.divf %29, %30 : vector<2x128xf32>
    %32 = arith.mulf %23, %8 : vector<2x128xf32>
    %33 = arith.mulf %17, %25 : vector<2x128xf32>
    %34 = arith.addf %32, %33 : vector<2x128xf32>
    %35 = math.tanh %34 : vector<2x128xf32>
    %36 = arith.mulf %31, %35 : vector<2x128xf32>
    %c0_13 = arith.constant 0 : index
    %c0_14 = arith.constant 0 : index
    %37 = vector.load %arg10[%c0_13, %c0_14] : memref<16x128xf32, #tpu.memory_space<vmem>>, vector<2x128xf32>
    tpu.vector_store %arg10[%c0_13, %c0_14], %36 {strides = array<i32>} : memref<16x128xf32, #tpu.memory_space<vmem>>, vector<2x128xf32>,
    %38 = vector.extract_strided_slice %6 {offsets = [2, 0], sizes = [2, 512], strides = [1, 1]} : vector<16x512xf32> to vector<2x512xf32>
    %cst_15 = arith.constant dense<0.000000e+00> : vector<2x512xf32>
    %39 = tpu.matmul %36, %2, %cst_15 {dimension_numbers = #tpu.dot_dimension_numbers<[1], [0], [0], [1], [0, 0, 1, 1], [], []>} : vector<2x128xf32>, vector<128x512xf32>, vector<2x512xf32> -> vector<2x512xf32>
    %40 = arith.addf %38, %39 : vector<2x512xf32>
    %41 = vector.extract_strided_slice %40 {offsets = [0, 0], sizes = [2, 128], strides = [1, 1]} : vector<2x512xf32> to vector<2x128xf32>
    %42 = arith.negf %41 : vector<2x128xf32>
    %43 = math.exp %42 : vector<2x128xf32>
    %cst_16 = arith.constant 1.000000e+00 : f32
    %44 = vector.broadcast %cst_16 : f32 to vector<2x128xf32>
    %45 = arith.addf %44, %43 : vector<2x128xf32>
    %46 = arith.divf %44, %45 : vector<2x128xf32>
    %47 = vector.extract_strided_slice %40 {offsets = [0, 128], sizes = [2, 128], strides = [1, 1]} : vector<2x512xf32> to vector<2x128xf32>
    %48 = arith.negf %47 : vector<2x128xf32>
    %49 = math.exp %48 : vector<2x128xf32>
    %cst_17 = arith.constant 1.000000e+00 : f32
    %50 = vector.broadcast %cst_17 : f32 to vector<2x128xf32>
    %51 = arith.addf %50, %49 : vector<2x128xf32>
    %52 = arith.divf %50, %51 : vector<2x128xf32>
    %53 = vector.extract_strided_slice %40 {offsets = [0, 256], sizes = [2, 128], strides = [1, 1]} : vector<2x512xf32> to vector<2x128xf32>
    %54 = math.tanh %53 : vector<2x128xf32>
    %55 = vector.extract_strided_slice %40 {offsets = [0, 384], sizes = [2, 128], strides = [1, 1]} : vector<2x512xf32> to vector<2x128xf32>
    %56 = arith.negf %55 : vector<2x128xf32>
    %57 = math.exp %56 : vector<2x128xf32>
    %cst_18 = arith.constant 1.000000e+00 : f32
    %58 = vector.broadcast %cst_18 : f32 to vector<2x128xf32>
    %59 = arith.addf %58, %57 : vector<2x128xf32>
    %60 = arith.divf %58, %59 : vector<2x128xf32>
    %61 = arith.mulf %52, %34 : vector<2x128xf32>
    %62 = arith.mulf %46, %54 : vector<2x128xf32>
    %63 = arith.addf %61, %62 : vector<2x128xf32>
    %64 = math.tanh %63 : vector<2x128xf32>
    %65 = arith.mulf %60, %64 : vector<2x128xf32>
    %c2 = arith.constant 2 : index
    %c0_19 = arith.constant 0 : index
    %66 = vector.load %arg10[%c2, %c0_19] : memref<16x128xf32, #tpu.memory_space<vmem>>, vector<2x128xf32>
    tpu.vector_store %arg10[%c2, %c0_19], %65 {strides = array<i32>} : memref<16x128xf32, #tpu.memory_space<vmem>>, vector<2x128xf32>,
    %67 = vector.extract_strided_slice %6 {offsets = [4, 0], sizes = [2, 512], strides = [1, 1]} : vector<16x512xf32> to vector<2x512xf32>
    %cst_20 = arith.constant dense<0.000000e+00> : vector<2x512xf32>
    %68 = tpu.matmul %65, %2, %cst_20 {dimension_numbers = #tpu.dot_dimension_numbers<[1], [0], [0], [1], [0, 0, 1, 1], [], []>} : vector<2x128xf32>, vector<128x512xf32>, vector<2x512xf32> -> vector<2x512xf32>
    %69 = arith.addf %67, %68 : vector<2x512xf32>
    %70 = vector.extract_strided_slice %69 {offsets = [0, 0], sizes = [2, 128], strides = [1, 1]} : vector<2x512xf32> to vector<2x128xf32>
    %71 = arith.negf %70 : vector<2x128xf32>
    %72 = math.exp %71 : vector<2x128xf32>
    %cst_21 = arith.constant 1.000000e+00 : f32
    %73 = vector.broadcast %cst_21 : f32 to vector<2x128xf32>
    %74 = arith.addf %73, %72 : vector<2x128xf32>
    %75 = arith.divf %73, %74 : vector<2x128xf32>
    %76 = vector.extract_strided_slice %69 {offsets = [0, 128], sizes = [2, 128], strides = [1, 1]} : vector<2x512xf32> to vector<2x128xf32>
    %77 = arith.negf %76 : vector<2x128xf32>
    %78 = math.exp %77 : vector<2x128xf32>
    %cst_22 = arith.constant 1.000000e+00 : f32
    %79 = vector.broadcast %cst_22 : f32 to vector<2x128xf32>
    %80 = arith.addf %79, %78 : vector<2x128xf32>
    %81 = arith.divf %79, %80 : vector<2x128xf32>
    %82 = vector.extract_strided_slice %69 {offsets = [0, 256], sizes = [2, 128], strides = [1, 1]} : vector<2x512xf32> to vector<2x128xf32>
    %83 = math.tanh %82 : vector<2x128xf32>
    %84 = vector.extract_strided_slice %69 {offsets = [0, 384], sizes = [2, 128], strides = [1, 1]} : vector<2x512xf32> to vector<2x128xf32>
    %85 = arith.negf %84 : vector<2x128xf32>
    %86 = math.exp %85 : vector<2x128xf32>
    %cst_23 = arith.constant 1.000000e+00 : f32
    %87 = vector.broadcast %cst_23 : f32 to vector<2x128xf32>
    %88 = arith.addf %87, %86 : vector<2x128xf32>
    %89 = arith.divf %87, %88 : vector<2x128xf32>
    %90 = arith.mulf %81, %63 : vector<2x128xf32>
    %91 = arith.mulf %75, %83 : vector<2x128xf32>
    %92 = arith.addf %90, %91 : vector<2x128xf32>
    %93 = math.tanh %92 : vector<2x128xf32>
    %94 = arith.mulf %89, %93 : vector<2x128xf32>
    %c4 = arith.constant 4 : index
    %c0_24 = arith.constant 0 : index
    %95 = vector.load %arg10[%c4, %c0_24] : memref<16x128xf32, #tpu.memory_space<vmem>>, vector<2x128xf32>
    tpu.vector_store %arg10[%c4, %c0_24], %94 {strides = array<i32>} : memref<16x128xf32, #tpu.memory_space<vmem>>, vector<2x128xf32>,
    %96 = vector.extract_strided_slice %6 {offsets = [6, 0], sizes = [2, 512], strides = [1, 1]} : vector<16x512xf32> to vector<2x512xf32>
    %cst_25 = arith.constant dense<0.000000e+00> : vector<2x512xf32>
    %97 = tpu.matmul %94, %2, %cst_25 {dimension_numbers = #tpu.dot_dimension_numbers<[1], [0], [0], [1], [0, 0, 1, 1], [], []>} : vector<2x128xf32>, vector<128x512xf32>, vector<2x512xf32> -> vector<2x512xf32>
    %98 = arith.addf %96, %97 : vector<2x512xf32>
    %99 = vector.extract_strided_slice %98 {offsets = [0, 0], sizes = [2, 128], strides = [1, 1]} : vector<2x512xf32> to vector<2x128xf32>
    %100 = arith.negf %99 : vector<2x128xf32>
    %101 = math.exp %100 : vector<2x128xf32>
    %cst_26 = arith.constant 1.000000e+00 : f32
    %102 = vector.broadcast %cst_26 : f32 to vector<2x128xf32>
    %103 = arith.addf %102, %101 : vector<2x128xf32>
    %104 = arith.divf %102, %103 : vector<2x128xf32>
    %105 = vector.extract_strided_slice %98 {offsets = [0, 128], sizes = [2, 128], strides = [1, 1]} : vector<2x512xf32> to vector<2x128xf32>
    %106 = arith.negf %105 : vector<2x128xf32>
    %107 = math.exp %106 : vector<2x128xf32>
    %cst_27 = arith.constant 1.000000e+00 : f32
    %108 = vector.broadcast %cst_27 : f32 to vector<2x128xf32>
    %109 = arith.addf %108, %107 : vector<2x128xf32>
    %110 = arith.divf %108, %109 : vector<2x128xf32>
    %111 = vector.extract_strided_slice %98 {offsets = [0, 256], sizes = [2, 128], strides = [1, 1]} : vector<2x512xf32> to vector<2x128xf32>
    %112 = math.tanh %111 : vector<2x128xf32>
    %113 = vector.extract_strided_slice %98 {offsets = [0, 384], sizes = [2, 128], strides = [1, 1]} : vector<2x512xf32> to vector<2x128xf32>
    %114 = arith.negf %113 : vector<2x128xf32>
    %115 = math.exp %114 : vector<2x128xf32>
    %cst_28 = arith.constant 1.000000e+00 : f32
    %116 = vector.broadcast %cst_28 : f32 to vector<2x128xf32>
    %117 = arith.addf %116, %115 : vector<2x128xf32>
    %118 = arith.divf %116, %117 : vector<2x128xf32>
    %119 = arith.mulf %110, %92 : vector<2x128xf32>
    %120 = arith.mulf %104, %112 : vector<2x128xf32>
    %121 = arith.addf %119, %120 : vector<2x128xf32>
    %122 = math.tanh %121 : vector<2x128xf32>
    %123 = arith.mulf %118, %122 : vector<2x128xf32>
    %c6 = arith.constant 6 : index
    %c0_29 = arith.constant 0 : index
    %124 = vector.load %arg10[%c6, %c0_29] : memref<16x128xf32, #tpu.memory_space<vmem>>, vector<2x128xf32>
    tpu.vector_store %arg10[%c6, %c0_29], %123 {strides = array<i32>} : memref<16x128xf32, #tpu.memory_space<vmem>>, vector<2x128xf32>,
    %125 = vector.extract_strided_slice %6 {offsets = [8, 0], sizes = [2, 512], strides = [1, 1]} : vector<16x512xf32> to vector<2x512xf32>
    %cst_30 = arith.constant dense<0.000000e+00> : vector<2x512xf32>
    %126 = tpu.matmul %123, %2, %cst_30 {dimension_numbers = #tpu.dot_dimension_numbers<[1], [0], [0], [1], [0, 0, 1, 1], [], []>} : vector<2x128xf32>, vector<128x512xf32>, vector<2x512xf32> -> vector<2x512xf32>
    %127 = arith.addf %125, %126 : vector<2x512xf32>
    %128 = vector.extract_strided_slice %127 {offsets = [0, 0], sizes = [2, 128], strides = [1, 1]} : vector<2x512xf32> to vector<2x128xf32>
    %129 = arith.negf %128 : vector<2x128xf32>
    %130 = math.exp %129 : vector<2x128xf32>
    %cst_31 = arith.constant 1.000000e+00 : f32
    %131 = vector.broadcast %cst_31 : f32 to vector<2x128xf32>
    %132 = arith.addf %131, %130 : vector<2x128xf32>
    %133 = arith.divf %131, %132 : vector<2x128xf32>
    %134 = vector.extract_strided_slice %127 {offsets = [0, 128], sizes = [2, 128], strides = [1, 1]} : vector<2x512xf32> to vector<2x128xf32>
    %135 = arith.negf %134 : vector<2x128xf32>
    %136 = math.exp %135 : vector<2x128xf32>
    %cst_32 = arith.constant 1.000000e+00 : f32
    %137 = vector.broadcast %cst_32 : f32 to vector<2x128xf32>
    %138 = arith.addf %137, %136 : vector<2x128xf32>
    %139 = arith.divf %137, %138 : vector<2x128xf32>
    %140 = vector.extract_strided_slice %127 {offsets = [0, 256], sizes = [2, 128], strides = [1, 1]} : vector<2x512xf32> to vector<2x128xf32>
    %141 = math.tanh %140 : vector<2x128xf32>
    %142 = vector.extract_strided_slice %127 {offsets = [0, 384], sizes = [2, 128], strides = [1, 1]} : vector<2x512xf32> to vector<2x128xf32>
    %143 = arith.negf %142 : vector<2x128xf32>
    %144 = math.exp %143 : vector<2x128xf32>
    %cst_33 = arith.constant 1.000000e+00 : f32
    %145 = vector.broadcast %cst_33 : f32 to vector<2x128xf32>
    %146 = arith.addf %145, %144 : vector<2x128xf32>
    %147 = arith.divf %145, %146 : vector<2x128xf32>
    %148 = arith.mulf %139, %121 : vector<2x128xf32>
    %149 = arith.mulf %133, %141 : vector<2x128xf32>
    %150 = arith.addf %148, %149 : vector<2x128xf32>
    %151 = math.tanh %150 : vector<2x128xf32>
    %152 = arith.mulf %147, %151 : vector<2x128xf32>
    %c8 = arith.constant 8 : index
    %c0_34 = arith.constant 0 : index
    %153 = vector.load %arg10[%c8, %c0_34] : memref<16x128xf32, #tpu.memory_space<vmem>>, vector<2x128xf32>
    tpu.vector_store %arg10[%c8, %c0_34], %152 {strides = array<i32>} : memref<16x128xf32, #tpu.memory_space<vmem>>, vector<2x128xf32>,
    %154 = vector.extract_strided_slice %6 {offsets = [10, 0], sizes = [2, 512], strides = [1, 1]} : vector<16x512xf32> to vector<2x512xf32>
    %cst_35 = arith.constant dense<0.000000e+00> : vector<2x512xf32>
    %155 = tpu.matmul %152, %2, %cst_35 {dimension_numbers = #tpu.dot_dimension_numbers<[1], [0], [0], [1], [0, 0, 1, 1], [], []>} : vector<2x128xf32>, vector<128x512xf32>, vector<2x512xf32> -> vector<2x512xf32>
    %156 = arith.addf %154, %155 : vector<2x512xf32>
    %157 = vector.extract_strided_slice %156 {offsets = [0, 0], sizes = [2, 128], strides = [1, 1]} : vector<2x512xf32> to vector<2x128xf32>
    %158 = arith.negf %157 : vector<2x128xf32>
    %159 = math.exp %158 : vector<2x128xf32>
    %cst_36 = arith.constant 1.000000e+00 : f32
    %160 = vector.broadcast %cst_36 : f32 to vector<2x128xf32>
    %161 = arith.addf %160, %159 : vector<2x128xf32>
    %162 = arith.divf %160, %161 : vector<2x128xf32>
    %163 = vector.extract_strided_slice %156 {offsets = [0, 128], sizes = [2, 128], strides = [1, 1]} : vector<2x512xf32> to vector<2x128xf32>
    %164 = arith.negf %163 : vector<2x128xf32>
    %165 = math.exp %164 : vector<2x128xf32>
    %cst_37 = arith.constant 1.000000e+00 : f32
    %166 = vector.broadcast %cst_37 : f32 to vector<2x128xf32>
    %167 = arith.addf %166, %165 : vector<2x128xf32>
    %168 = arith.divf %166, %167 : vector<2x128xf32>
    %169 = vector.extract_strided_slice %156 {offsets = [0, 256], sizes = [2, 128], strides = [1, 1]} : vector<2x512xf32> to vector<2x128xf32>
    %170 = math.tanh %169 : vector<2x128xf32>
    %171 = vector.extract_strided_slice %156 {offsets = [0, 384], sizes = [2, 128], strides = [1, 1]} : vector<2x512xf32> to vector<2x128xf32>
    %172 = arith.negf %171 : vector<2x128xf32>
    %173 = math.exp %172 : vector<2x128xf32>
    %cst_38 = arith.constant 1.000000e+00 : f32
    %174 = vector.broadcast %cst_38 : f32 to vector<2x128xf32>
    %175 = arith.addf %174, %173 : vector<2x128xf32>
    %176 = arith.divf %174, %175 : vector<2x128xf32>
    %177 = arith.mulf %168, %150 : vector<2x128xf32>
    %178 = arith.mulf %162, %170 : vector<2x128xf32>
    %179 = arith.addf %177, %178 : vector<2x128xf32>
    %180 = math.tanh %179 : vector<2x128xf32>
    %181 = arith.mulf %176, %180 : vector<2x128xf32>
    %c10 = arith.constant 10 : index
    %c0_39 = arith.constant 0 : index
    %182 = vector.load %arg10[%c10, %c0_39] : memref<16x128xf32, #tpu.memory_space<vmem>>, vector<2x128xf32>
    tpu.vector_store %arg10[%c10, %c0_39], %181 {strides = array<i32>} : memref<16x128xf32, #tpu.memory_space<vmem>>, vector<2x128xf32>,
    %183 = vector.extract_strided_slice %6 {offsets = [12, 0], sizes = [2, 512], strides = [1, 1]} : vector<16x512xf32> to vector<2x512xf32>
    %cst_40 = arith.constant dense<0.000000e+00> : vector<2x512xf32>
    %184 = tpu.matmul %181, %2, %cst_40 {dimension_numbers = #tpu.dot_dimension_numbers<[1], [0], [0], [1], [0, 0, 1, 1], [], []>} : vector<2x128xf32>, vector<128x512xf32>, vector<2x512xf32> -> vector<2x512xf32>
    %185 = arith.addf %183, %184 : vector<2x512xf32>
    %186 = vector.extract_strided_slice %185 {offsets = [0, 0], sizes = [2, 128], strides = [1, 1]} : vector<2x512xf32> to vector<2x128xf32>
    %187 = arith.negf %186 : vector<2x128xf32>
    %188 = math.exp %187 : vector<2x128xf32>
    %cst_41 = arith.constant 1.000000e+00 : f32
    %189 = vector.broadcast %cst_41 : f32 to vector<2x128xf32>
    %190 = arith.addf %189, %188 : vector<2x128xf32>
    %191 = arith.divf %189, %190 : vector<2x128xf32>
    %192 = vector.extract_strided_slice %185 {offsets = [0, 128], sizes = [2, 128], strides = [1, 1]} : vector<2x512xf32> to vector<2x128xf32>
    %193 = arith.negf %192 : vector<2x128xf32>
    %194 = math.exp %193 : vector<2x128xf32>
    %cst_42 = arith.constant 1.000000e+00 : f32
    %195 = vector.broadcast %cst_42 : f32 to vector<2x128xf32>
    %196 = arith.addf %195, %194 : vector<2x128xf32>
    %197 = arith.divf %195, %196 : vector<2x128xf32>
    %198 = vector.extract_strided_slice %185 {offsets = [0, 256], sizes = [2, 128], strides = [1, 1]} : vector<2x512xf32> to vector<2x128xf32>
    %199 = math.tanh %198 : vector<2x128xf32>
    %200 = vector.extract_strided_slice %185 {offsets = [0, 384], sizes = [2, 128], strides = [1, 1]} : vector<2x512xf32> to vector<2x128xf32>
    %201 = arith.negf %200 : vector<2x128xf32>
    %202 = math.exp %201 : vector<2x128xf32>
    %cst_43 = arith.constant 1.000000e+00 : f32
    %203 = vector.broadcast %cst_43 : f32 to vector<2x128xf32>
    %204 = arith.addf %203, %202 : vector<2x128xf32>
    %205 = arith.divf %203, %204 : vector<2x128xf32>
    %206 = arith.mulf %197, %179 : vector<2x128xf32>
    %207 = arith.mulf %191, %199 : vector<2x128xf32>
    %208 = arith.addf %206, %207 : vector<2x128xf32>
    %209 = math.tanh %208 : vector<2x128xf32>
    %210 = arith.mulf %205, %209 : vector<2x128xf32>
    %c12 = arith.constant 12 : index
    %c0_44 = arith.constant 0 : index
    %211 = vector.load %arg10[%c12, %c0_44] : memref<16x128xf32, #tpu.memory_space<vmem>>, vector<2x128xf32>
    tpu.vector_store %arg10[%c12, %c0_44], %210 {strides = array<i32>} : memref<16x128xf32, #tpu.memory_space<vmem>>, vector<2x128xf32>,
    %212 = vector.extract_strided_slice %6 {offsets = [14, 0], sizes = [2, 512], strides = [1, 1]} : vector<16x512xf32> to vector<2x512xf32>
    %cst_45 = arith.constant dense<0.000000e+00> : vector<2x512xf32>
    %213 = tpu.matmul %210, %2, %cst_45 {dimension_numbers = #tpu.dot_dimension_numbers<[1], [0], [0], [1], [0, 0, 1, 1], [], []>} : vector<2x128xf32>, vector<128x512xf32>, vector<2x512xf32> -> vector<2x512xf32>
    %214 = arith.addf %212, %213 : vector<2x512xf32>
    %215 = vector.extract_strided_slice %214 {offsets = [0, 0], sizes = [2, 128], strides = [1, 1]} : vector<2x512xf32> to vector<2x128xf32>
    %216 = arith.negf %215 : vector<2x128xf32>
    %217 = math.exp %216 : vector<2x128xf32>
    %cst_46 = arith.constant 1.000000e+00 : f32
    %218 = vector.broadcast %cst_46 : f32 to vector<2x128xf32>
    %219 = arith.addf %218, %217 : vector<2x128xf32>
    %220 = arith.divf %218, %219 : vector<2x128xf32>
    %221 = vector.extract_strided_slice %214 {offsets = [0, 128], sizes = [2, 128], strides = [1, 1]} : vector<2x512xf32> to vector<2x128xf32>
    %222 = arith.negf %221 : vector<2x128xf32>
    %223 = math.exp %222 : vector<2x128xf32>
    %cst_47 = arith.constant 1.000000e+00 : f32
    %224 = vector.broadcast %cst_47 : f32 to vector<2x128xf32>
    %225 = arith.addf %224, %223 : vector<2x128xf32>
    %226 = arith.divf %224, %225 : vector<2x128xf32>
    %227 = vector.extract_strided_slice %214 {offsets = [0, 256], sizes = [2, 128], strides = [1, 1]} : vector<2x512xf32> to vector<2x128xf32>
    %228 = math.tanh %227 : vector<2x128xf32>
    %229 = vector.extract_strided_slice %214 {offsets = [0, 384], sizes = [2, 128], strides = [1, 1]} : vector<2x512xf32> to vector<2x128xf32>
    %230 = arith.negf %229 : vector<2x128xf32>
    %231 = math.exp %230 : vector<2x128xf32>
    %cst_48 = arith.constant 1.000000e+00 : f32
    %232 = vector.broadcast %cst_48 : f32 to vector<2x128xf32>
    %233 = arith.addf %232, %231 : vector<2x128xf32>
    %234 = arith.divf %232, %233 : vector<2x128xf32>
    %235 = arith.mulf %226, %208 : vector<2x128xf32>
    %236 = arith.mulf %220, %228 : vector<2x128xf32>
    %237 = arith.addf %235, %236 : vector<2x128xf32>
    %238 = math.tanh %237 : vector<2x128xf32>
    %239 = arith.mulf %234, %238 : vector<2x128xf32>
    %c14 = arith.constant 14 : index
    %c0_49 = arith.constant 0 : index
    %240 = vector.load %arg10[%c14, %c0_49] : memref<16x128xf32, #tpu.memory_space<vmem>>, vector<2x128xf32>
    tpu.vector_store %arg10[%c14, %c0_49], %239 {strides = array<i32>} : memref<16x128xf32, #tpu.memory_space<vmem>>, vector<2x128xf32>,
    %c0_50 = arith.constant 0 : index
    %c0_51 = arith.constant 0 : index
    %241 = vector.load %arg10[%c0_50, %c0_51] : memref<16x128xf32, #tpu.memory_space<vmem>>, vector<16x128xf32>
    %c0_52 = arith.constant 0 : index
    %c0_53 = arith.constant 0 : index
    %242 = vector.load %arg4[%c0_52, %c0_53] : memref<128x512xf32, #tpu.memory_space<vmem>>, vector<128x512xf32>
    %c0_54 = arith.constant 0 : index
    %c0_55 = arith.constant 0 : index
    %243 = vector.load %arg5[%c0_54, %c0_55] : memref<128x512xf32, #tpu.memory_space<vmem>>, vector<128x512xf32>
    %c0_56 = arith.constant 0 : index
    %c0_57 = arith.constant 0 : index
    %244 = vector.load %arg6[%c0_56, %c0_57] : memref<1x512xf32, #tpu.memory_space<vmem>>, vector<1x512xf32>
    %cst_58 = arith.constant dense<0.000000e+00> : vector<16x512xf32>
    %245 = tpu.matmul %241, %242, %cst_58 {dimension_numbers = #tpu.dot_dimension_numbers<[1], [0], [0], [1], [0, 0, 1, 1], [], []>} : vector<16x128xf32>, vector<128x512xf32>, vector<16x512xf32> -> vector<16x512xf32>
    %246 = vector.broadcast %244 : vector<1x512xf32> to vector<16x512xf32>
    %247 = arith.addf %245, %246 : vector<16x512xf32>
    %cst_59 = arith.constant 0.000000e+00 : f32
    %248 = vector.broadcast %cst_59 : f32 to vector<2x128xf32>
    %cst_60 = arith.constant 0.000000e+00 : f32
    %249 = vector.broadcast %cst_60 : f32 to vector<2x128xf32>
    %250 = vector.extract_strided_slice %247 {offsets = [0, 0], sizes = [2, 512], strides = [1, 1]} : vector<16x512xf32> to vector<2x512xf32>
    %cst_61 = arith.constant dense<0.000000e+00> : vector<2x512xf32>
    %251 = tpu.matmul %248, %243, %cst_61 {dimension_numbers = #tpu.dot_dimension_numbers<[1], [0], [0], [1], [0, 0, 1, 1], [], []>} : vector<2x128xf32>, vector<128x512xf32>, vector<2x512xf32> -> vector<2x512xf32>
    %252 = arith.addf %250, %251 : vector<2x512xf32>
    %253 = vector.extract_strided_slice %252 {offsets = [0, 0], sizes = [2, 128], strides = [1, 1]} : vector<2x512xf32> to vector<2x128xf32>
    %254 = arith.negf %253 : vector<2x128xf32>
    %255 = math.exp %254 : vector<2x128xf32>
    %cst_62 = arith.constant 1.000000e+00 : f32
    %256 = vector.broadcast %cst_62 : f32 to vector<2x128xf32>
    %257 = arith.addf %256, %255 : vector<2x128xf32>
    %258 = arith.divf %256, %257 : vector<2x128xf32>
    %259 = vector.extract_strided_slice %252 {offsets = [0, 128], sizes = [2, 128], strides = [1, 1]} : vector<2x512xf32> to vector<2x128xf32>
    %260 = arith.negf %259 : vector<2x128xf32>
    %261 = math.exp %260 : vector<2x128xf32>
    %cst_63 = arith.constant 1.000000e+00 : f32
    %262 = vector.broadcast %cst_63 : f32 to vector<2x128xf32>
    %263 = arith.addf %262, %261 : vector<2x128xf32>
    %264 = arith.divf %262, %263 : vector<2x128xf32>
    %265 = vector.extract_strided_slice %252 {offsets = [0, 256], sizes = [2, 128], strides = [1, 1]} : vector<2x512xf32> to vector<2x128xf32>
    %266 = math.tanh %265 : vector<2x128xf32>
    %267 = vector.extract_strided_slice %252 {offsets = [0, 384], sizes = [2, 128], strides = [1, 1]} : vector<2x512xf32> to vector<2x128xf32>
    %268 = arith.negf %267 : vector<2x128xf32>
    %269 = math.exp %268 : vector<2x128xf32>
    %cst_64 = arith.constant 1.000000e+00 : f32
    %270 = vector.broadcast %cst_64 : f32 to vector<2x128xf32>
    %271 = arith.addf %270, %269 : vector<2x128xf32>
    %272 = arith.divf %270, %271 : vector<2x128xf32>
    %273 = arith.mulf %264, %249 : vector<2x128xf32>
    %274 = arith.mulf %258, %266 : vector<2x128xf32>
    %275 = arith.addf %273, %274 : vector<2x128xf32>
    %276 = math.tanh %275 : vector<2x128xf32>
    %277 = arith.mulf %272, %276 : vector<2x128xf32>
    %278 = vector.extract_strided_slice %247 {offsets = [2, 0], sizes = [2, 512], strides = [1, 1]} : vector<16x512xf32> to vector<2x512xf32>
    %cst_65 = arith.constant dense<0.000000e+00> : vector<2x512xf32>
    %279 = tpu.matmul %277, %243, %cst_65 {dimension_numbers = #tpu.dot_dimension_numbers<[1], [0], [0], [1], [0, 0, 1, 1], [], []>} : vector<2x128xf32>, vector<128x512xf32>, vector<2x512xf32> -> vector<2x512xf32>
    %280 = arith.addf %278, %279 : vector<2x512xf32>
    %281 = vector.extract_strided_slice %280 {offsets = [0, 0], sizes = [2, 128], strides = [1, 1]} : vector<2x512xf32> to vector<2x128xf32>
    %282 = arith.negf %281 : vector<2x128xf32>
    %283 = math.exp %282 : vector<2x128xf32>
    %cst_66 = arith.constant 1.000000e+00 : f32
    %284 = vector.broadcast %cst_66 : f32 to vector<2x128xf32>
    %285 = arith.addf %284, %283 : vector<2x128xf32>
    %286 = arith.divf %284, %285 : vector<2x128xf32>
    %287 = vector.extract_strided_slice %280 {offsets = [0, 128], sizes = [2, 128], strides = [1, 1]} : vector<2x512xf32> to vector<2x128xf32>
    %288 = arith.negf %287 : vector<2x128xf32>
    %289 = math.exp %288 : vector<2x128xf32>
    %cst_67 = arith.constant 1.000000e+00 : f32
    %290 = vector.broadcast %cst_67 : f32 to vector<2x128xf32>
    %291 = arith.addf %290, %289 : vector<2x128xf32>
    %292 = arith.divf %290, %291 : vector<2x128xf32>
    %293 = vector.extract_strided_slice %280 {offsets = [0, 256], sizes = [2, 128], strides = [1, 1]} : vector<2x512xf32> to vector<2x128xf32>
    %294 = math.tanh %293 : vector<2x128xf32>
    %295 = vector.extract_strided_slice %280 {offsets = [0, 384], sizes = [2, 128], strides = [1, 1]} : vector<2x512xf32> to vector<2x128xf32>
    %296 = arith.negf %295 : vector<2x128xf32>
    %297 = math.exp %296 : vector<2x128xf32>
    %cst_68 = arith.constant 1.000000e+00 : f32
    %298 = vector.broadcast %cst_68 : f32 to vector<2x128xf32>
    %299 = arith.addf %298, %297 : vector<2x128xf32>
    %300 = arith.divf %298, %299 : vector<2x128xf32>
    %301 = arith.mulf %292, %275 : vector<2x128xf32>
    %302 = arith.mulf %286, %294 : vector<2x128xf32>
    %303 = arith.addf %301, %302 : vector<2x128xf32>
    %304 = math.tanh %303 : vector<2x128xf32>
    %305 = arith.mulf %300, %304 : vector<2x128xf32>
    %306 = vector.extract_strided_slice %247 {offsets = [4, 0], sizes = [2, 512], strides = [1, 1]} : vector<16x512xf32> to vector<2x512xf32>
    %cst_69 = arith.constant dense<0.000000e+00> : vector<2x512xf32>
    %307 = tpu.matmul %305, %243, %cst_69 {dimension_numbers = #tpu.dot_dimension_numbers<[1], [0], [0], [1], [0, 0, 1, 1], [], []>} : vector<2x128xf32>, vector<128x512xf32>, vector<2x512xf32> -> vector<2x512xf32>
    %308 = arith.addf %306, %307 : vector<2x512xf32>
    %309 = vector.extract_strided_slice %308 {offsets = [0, 0], sizes = [2, 128], strides = [1, 1]} : vector<2x512xf32> to vector<2x128xf32>
    %310 = arith.negf %309 : vector<2x128xf32>
    %311 = math.exp %310 : vector<2x128xf32>
    %cst_70 = arith.constant 1.000000e+00 : f32
    %312 = vector.broadcast %cst_70 : f32 to vector<2x128xf32>
    %313 = arith.addf %312, %311 : vector<2x128xf32>
    %314 = arith.divf %312, %313 : vector<2x128xf32>
    %315 = vector.extract_strided_slice %308 {offsets = [0, 128], sizes = [2, 128], strides = [1, 1]} : vector<2x512xf32> to vector<2x128xf32>
    %316 = arith.negf %315 : vector<2x128xf32>
    %317 = math.exp %316 : vector<2x128xf32>
    %cst_71 = arith.constant 1.000000e+00 : f32
    %318 = vector.broadcast %cst_71 : f32 to vector<2x128xf32>
    %319 = arith.addf %318, %317 : vector<2x128xf32>
    %320 = arith.divf %318, %319 : vector<2x128xf32>
    %321 = vector.extract_strided_slice %308 {offsets = [0, 256], sizes = [2, 128], strides = [1, 1]} : vector<2x512xf32> to vector<2x128xf32>
    %322 = math.tanh %321 : vector<2x128xf32>
    %323 = vector.extract_strided_slice %308 {offsets = [0, 384], sizes = [2, 128], strides = [1, 1]} : vector<2x512xf32> to vector<2x128xf32>
    %324 = arith.negf %323 : vector<2x128xf32>
    %325 = math.exp %324 : vector<2x128xf32>
    %cst_72 = arith.constant 1.000000e+00 : f32
    %326 = vector.broadcast %cst_72 : f32 to vector<2x128xf32>
    %327 = arith.addf %326, %325 : vector<2x128xf32>
    %328 = arith.divf %326, %327 : vector<2x128xf32>
    %329 = arith.mulf %320, %303 : vector<2x128xf32>
    %330 = arith.mulf %314, %322 : vector<2x128xf32>
    %331 = arith.addf %329, %330 : vector<2x128xf32>
    %332 = math.tanh %331 : vector<2x128xf32>
    %333 = arith.mulf %328, %332 : vector<2x128xf32>
    %334 = vector.extract_strided_slice %247 {offsets = [6, 0], sizes = [2, 512], strides = [1, 1]} : vector<16x512xf32> to vector<2x512xf32>
    %cst_73 = arith.constant dense<0.000000e+00> : vector<2x512xf32>
    %335 = tpu.matmul %333, %243, %cst_73 {dimension_numbers = #tpu.dot_dimension_numbers<[1], [0], [0], [1], [0, 0, 1, 1], [], []>} : vector<2x128xf32>, vector<128x512xf32>, vector<2x512xf32> -> vector<2x512xf32>
    %336 = arith.addf %334, %335 : vector<2x512xf32>
    %337 = vector.extract_strided_slice %336 {offsets = [0, 0], sizes = [2, 128], strides = [1, 1]} : vector<2x512xf32> to vector<2x128xf32>
    %338 = arith.negf %337 : vector<2x128xf32>
    %339 = math.exp %338 : vector<2x128xf32>
    %cst_74 = arith.constant 1.000000e+00 : f32
    %340 = vector.broadcast %cst_74 : f32 to vector<2x128xf32>
    %341 = arith.addf %340, %339 : vector<2x128xf32>
    %342 = arith.divf %340, %341 : vector<2x128xf32>
    %343 = vector.extract_strided_slice %336 {offsets = [0, 128], sizes = [2, 128], strides = [1, 1]} : vector<2x512xf32> to vector<2x128xf32>
    %344 = arith.negf %343 : vector<2x128xf32>
    %345 = math.exp %344 : vector<2x128xf32>
    %cst_75 = arith.constant 1.000000e+00 : f32
    %346 = vector.broadcast %cst_75 : f32 to vector<2x128xf32>
    %347 = arith.addf %346, %345 : vector<2x128xf32>
    %348 = arith.divf %346, %347 : vector<2x128xf32>
    %349 = vector.extract_strided_slice %336 {offsets = [0, 256], sizes = [2, 128], strides = [1, 1]} : vector<2x512xf32> to vector<2x128xf32>
    %350 = math.tanh %349 : vector<2x128xf32>
    %351 = vector.extract_strided_slice %336 {offsets = [0, 384], sizes = [2, 128], strides = [1, 1]} : vector<2x512xf32> to vector<2x128xf32>
    %352 = arith.negf %351 : vector<2x128xf32>
    %353 = math.exp %352 : vector<2x128xf32>
    %cst_76 = arith.constant 1.000000e+00 : f32
    %354 = vector.broadcast %cst_76 : f32 to vector<2x128xf32>
    %355 = arith.addf %354, %353 : vector<2x128xf32>
    %356 = arith.divf %354, %355 : vector<2x128xf32>
    %357 = arith.mulf %348, %331 : vector<2x128xf32>
    %358 = arith.mulf %342, %350 : vector<2x128xf32>
    %359 = arith.addf %357, %358 : vector<2x128xf32>
    %360 = math.tanh %359 : vector<2x128xf32>
    %361 = arith.mulf %356, %360 : vector<2x128xf32>
    %362 = vector.extract_strided_slice %247 {offsets = [8, 0], sizes = [2, 512], strides = [1, 1]} : vector<16x512xf32> to vector<2x512xf32>
    %cst_77 = arith.constant dense<0.000000e+00> : vector<2x512xf32>
    %363 = tpu.matmul %361, %243, %cst_77 {dimension_numbers = #tpu.dot_dimension_numbers<[1], [0], [0], [1], [0, 0, 1, 1], [], []>} : vector<2x128xf32>, vector<128x512xf32>, vector<2x512xf32> -> vector<2x512xf32>
    %364 = arith.addf %362, %363 : vector<2x512xf32>
    %365 = vector.extract_strided_slice %364 {offsets = [0, 0], sizes = [2, 128], strides = [1, 1]} : vector<2x512xf32> to vector<2x128xf32>
    %366 = arith.negf %365 : vector<2x128xf32>
    %367 = math.exp %366 : vector<2x128xf32>
    %cst_78 = arith.constant 1.000000e+00 : f32
    %368 = vector.broadcast %cst_78 : f32 to vector<2x128xf32>
    %369 = arith.addf %368, %367 : vector<2x128xf32>
    %370 = arith.divf %368, %369 : vector<2x128xf32>
    %371 = vector.extract_strided_slice %364 {offsets = [0, 128], sizes = [2, 128], strides = [1, 1]} : vector<2x512xf32> to vector<2x128xf32>
    %372 = arith.negf %371 : vector<2x128xf32>
    %373 = math.exp %372 : vector<2x128xf32>
    %cst_79 = arith.constant 1.000000e+00 : f32
    %374 = vector.broadcast %cst_79 : f32 to vector<2x128xf32>
    %375 = arith.addf %374, %373 : vector<2x128xf32>
    %376 = arith.divf %374, %375 : vector<2x128xf32>
    %377 = vector.extract_strided_slice %364 {offsets = [0, 256], sizes = [2, 128], strides = [1, 1]} : vector<2x512xf32> to vector<2x128xf32>
    %378 = math.tanh %377 : vector<2x128xf32>
    %379 = vector.extract_strided_slice %364 {offsets = [0, 384], sizes = [2, 128], strides = [1, 1]} : vector<2x512xf32> to vector<2x128xf32>
    %380 = arith.negf %379 : vector<2x128xf32>
    %381 = math.exp %380 : vector<2x128xf32>
    %cst_80 = arith.constant 1.000000e+00 : f32
    %382 = vector.broadcast %cst_80 : f32 to vector<2x128xf32>
    %383 = arith.addf %382, %381 : vector<2x128xf32>
    %384 = arith.divf %382, %383 : vector<2x128xf32>
    %385 = arith.mulf %376, %359 : vector<2x128xf32>
    %386 = arith.mulf %370, %378 : vector<2x128xf32>
    %387 = arith.addf %385, %386 : vector<2x128xf32>
    %388 = math.tanh %387 : vector<2x128xf32>
    %389 = arith.mulf %384, %388 : vector<2x128xf32>
    %390 = vector.extract_strided_slice %247 {offsets = [10, 0], sizes = [2, 512], strides = [1, 1]} : vector<16x512xf32> to vector<2x512xf32>
    %cst_81 = arith.constant dense<0.000000e+00> : vector<2x512xf32>
    %391 = tpu.matmul %389, %243, %cst_81 {dimension_numbers = #tpu.dot_dimension_numbers<[1], [0], [0], [1], [0, 0, 1, 1], [], []>} : vector<2x128xf32>, vector<128x512xf32>, vector<2x512xf32> -> vector<2x512xf32>
    %392 = arith.addf %390, %391 : vector<2x512xf32>
    %393 = vector.extract_strided_slice %392 {offsets = [0, 0], sizes = [2, 128], strides = [1, 1]} : vector<2x512xf32> to vector<2x128xf32>
    %394 = arith.negf %393 : vector<2x128xf32>
    %395 = math.exp %394 : vector<2x128xf32>
    %cst_82 = arith.constant 1.000000e+00 : f32
    %396 = vector.broadcast %cst_82 : f32 to vector<2x128xf32>
    %397 = arith.addf %396, %395 : vector<2x128xf32>
    %398 = arith.divf %396, %397 : vector<2x128xf32>
    %399 = vector.extract_strided_slice %392 {offsets = [0, 128], sizes = [2, 128], strides = [1, 1]} : vector<2x512xf32> to vector<2x128xf32>
    %400 = arith.negf %399 : vector<2x128xf32>
    %401 = math.exp %400 : vector<2x128xf32>
    %cst_83 = arith.constant 1.000000e+00 : f32
    %402 = vector.broadcast %cst_83 : f32 to vector<2x128xf32>
    %403 = arith.addf %402, %401 : vector<2x128xf32>
    %404 = arith.divf %402, %403 : vector<2x128xf32>
    %405 = vector.extract_strided_slice %392 {offsets = [0, 256], sizes = [2, 128], strides = [1, 1]} : vector<2x512xf32> to vector<2x128xf32>
    %406 = math.tanh %405 : vector<2x128xf32>
    %407 = vector.extract_strided_slice %392 {offsets = [0, 384], sizes = [2, 128], strides = [1, 1]} : vector<2x512xf32> to vector<2x128xf32>
    %408 = arith.negf %407 : vector<2x128xf32>
    %409 = math.exp %408 : vector<2x128xf32>
    %cst_84 = arith.constant 1.000000e+00 : f32
    %410 = vector.broadcast %cst_84 : f32 to vector<2x128xf32>
    %411 = arith.addf %410, %409 : vector<2x128xf32>
    %412 = arith.divf %410, %411 : vector<2x128xf32>
    %413 = arith.mulf %404, %387 : vector<2x128xf32>
    %414 = arith.mulf %398, %406 : vector<2x128xf32>
    %415 = arith.addf %413, %414 : vector<2x128xf32>
    %416 = math.tanh %415 : vector<2x128xf32>
    %417 = arith.mulf %412, %416 : vector<2x128xf32>
    %418 = vector.extract_strided_slice %247 {offsets = [12, 0], sizes = [2, 512], strides = [1, 1]} : vector<16x512xf32> to vector<2x512xf32>
    %cst_85 = arith.constant dense<0.000000e+00> : vector<2x512xf32>
    %419 = tpu.matmul %417, %243, %cst_85 {dimension_numbers = #tpu.dot_dimension_numbers<[1], [0], [0], [1], [0, 0, 1, 1], [], []>} : vector<2x128xf32>, vector<128x512xf32>, vector<2x512xf32> -> vector<2x512xf32>
    %420 = arith.addf %418, %419 : vector<2x512xf32>
    %421 = vector.extract_strided_slice %420 {offsets = [0, 0], sizes = [2, 128], strides = [1, 1]} : vector<2x512xf32> to vector<2x128xf32>
    %422 = arith.negf %421 : vector<2x128xf32>
    %423 = math.exp %422 : vector<2x128xf32>
    %cst_86 = arith.constant 1.000000e+00 : f32
    %424 = vector.broadcast %cst_86 : f32 to vector<2x128xf32>
    %425 = arith.addf %424, %423 : vector<2x128xf32>
    %426 = arith.divf %424, %425 : vector<2x128xf32>
    %427 = vector.extract_strided_slice %420 {offsets = [0, 128], sizes = [2, 128], strides = [1, 1]} : vector<2x512xf32> to vector<2x128xf32>
    %428 = arith.negf %427 : vector<2x128xf32>
    %429 = math.exp %428 : vector<2x128xf32>
    %cst_87 = arith.constant 1.000000e+00 : f32
    %430 = vector.broadcast %cst_87 : f32 to vector<2x128xf32>
    %431 = arith.addf %430, %429 : vector<2x128xf32>
    %432 = arith.divf %430, %431 : vector<2x128xf32>
    %433 = vector.extract_strided_slice %420 {offsets = [0, 256], sizes = [2, 128], strides = [1, 1]} : vector<2x512xf32> to vector<2x128xf32>
    %434 = math.tanh %433 : vector<2x128xf32>
    %435 = vector.extract_strided_slice %420 {offsets = [0, 384], sizes = [2, 128], strides = [1, 1]} : vector<2x512xf32> to vector<2x128xf32>
    %436 = arith.negf %435 : vector<2x128xf32>
    %437 = math.exp %436 : vector<2x128xf32>
    %cst_88 = arith.constant 1.000000e+00 : f32
    %438 = vector.broadcast %cst_88 : f32 to vector<2x128xf32>
    %439 = arith.addf %438, %437 : vector<2x128xf32>
    %440 = arith.divf %438, %439 : vector<2x128xf32>
    %441 = arith.mulf %432, %415 : vector<2x128xf32>
    %442 = arith.mulf %426, %434 : vector<2x128xf32>
    %443 = arith.addf %441, %442 : vector<2x128xf32>
    %444 = math.tanh %443 : vector<2x128xf32>
    %445 = arith.mulf %440, %444 : vector<2x128xf32>
    %446 = vector.extract_strided_slice %247 {offsets = [14, 0], sizes = [2, 512], strides = [1, 1]} : vector<16x512xf32> to vector<2x512xf32>
    %cst_89 = arith.constant dense<0.000000e+00> : vector<2x512xf32>
    %447 = tpu.matmul %445, %243, %cst_89 {dimension_numbers = #tpu.dot_dimension_numbers<[1], [0], [0], [1], [0, 0, 1, 1], [], []>} : vector<2x128xf32>, vector<128x512xf32>, vector<2x512xf32> -> vector<2x512xf32>
    %448 = arith.addf %446, %447 : vector<2x512xf32>
    %449 = vector.extract_strided_slice %448 {offsets = [0, 0], sizes = [2, 128], strides = [1, 1]} : vector<2x512xf32> to vector<2x128xf32>
    %450 = arith.negf %449 : vector<2x128xf32>
    %451 = math.exp %450 : vector<2x128xf32>
    %cst_90 = arith.constant 1.000000e+00 : f32
    %452 = vector.broadcast %cst_90 : f32 to vector<2x128xf32>
    %453 = arith.addf %452, %451 : vector<2x128xf32>
    %454 = arith.divf %452, %453 : vector<2x128xf32>
    %455 = vector.extract_strided_slice %448 {offsets = [0, 128], sizes = [2, 128], strides = [1, 1]} : vector<2x512xf32> to vector<2x128xf32>
    %456 = arith.negf %455 : vector<2x128xf32>
    %457 = math.exp %456 : vector<2x128xf32>
    %cst_91 = arith.constant 1.000000e+00 : f32
    %458 = vector.broadcast %cst_91 : f32 to vector<2x128xf32>
    %459 = arith.addf %458, %457 : vector<2x128xf32>
    %460 = arith.divf %458, %459 : vector<2x128xf32>
    %461 = vector.extract_strided_slice %448 {offsets = [0, 256], sizes = [2, 128], strides = [1, 1]} : vector<2x512xf32> to vector<2x128xf32>
    %462 = math.tanh %461 : vector<2x128xf32>
    %463 = vector.extract_strided_slice %448 {offsets = [0, 384], sizes = [2, 128], strides = [1, 1]} : vector<2x512xf32> to vector<2x128xf32>
    %464 = arith.negf %463 : vector<2x128xf32>
    %465 = math.exp %464 : vector<2x128xf32>
    %cst_92 = arith.constant 1.000000e+00 : f32
    %466 = vector.broadcast %cst_92 : f32 to vector<2x128xf32>
    %467 = arith.addf %466, %465 : vector<2x128xf32>
    %468 = arith.divf %466, %467 : vector<2x128xf32>
    %469 = arith.mulf %460, %443 : vector<2x128xf32>
    %470 = arith.mulf %454, %462 : vector<2x128xf32>
    %471 = arith.addf %469, %470 : vector<2x128xf32>
    %472 = math.tanh %471 : vector<2x128xf32>
    %473 = arith.mulf %468, %472 : vector<2x128xf32>
    %c0_93 = arith.constant 0 : index
    %c0_94 = arith.constant 0 : index
    %474 = vector.load %arg7[%c0_93, %c0_94] : memref<128x4xf32, #tpu.memory_space<vmem>>, vector<128x4xf32>
    %cst_95 = arith.constant dense<0.000000e+00> : vector<2x4xf32>
    %475 = tpu.matmul %473, %474, %cst_95 {dimension_numbers = #tpu.dot_dimension_numbers<[1], [0], [0], [1], [0, 0, 1, 1], [], []>} : vector<2x128xf32>, vector<128x4xf32>, vector<2x4xf32> -> vector<2x4xf32>
    %c0_96 = arith.constant 0 : index
    %c0_97 = arith.constant 0 : index
    %476 = vector.load %arg8[%c0_96, %c0_97] : memref<1x4xf32, #tpu.memory_space<vmem>>, vector<1x4xf32>
    %477 = vector.broadcast %476 : vector<1x4xf32> to vector<2x4xf32>
    %478 = arith.addf %475, %477 : vector<2x4xf32>
    %c0_98 = arith.constant 0 : index
    %c0_99 = arith.constant 0 : index
    %479 = vector.load %arg9[%c0_98, %c0_99] : memref<2x4xf32, #tpu.memory_space<vmem>>, vector<2x4xf32>
    tpu.vector_store %arg9[%c0_98, %c0_99], %478 {strides = array<i32>} : memref<2x4xf32, #tpu.memory_space<vmem>>, vector<2x4xf32>,
    return
  }
}

</mosaic_0001>

<llo_original>
// kernel: fused_lstm_forward.1
$region0: #{fused_lstm_forward.1}
  #allocation0 [shape = 'u32[]', space=smem, size = 0x4, offset = 0x4, fixed_abs, tag = 'smem constant byte address 0x4 - core index']
  #allocation1 [shape = 'u32[144,128]{1,0:T(1,128)}', space=vmem, size = 0x12000, scoped, tag = 'internal scratch']
  #allocation2 [shape = 'f32[16,128]{1,0:T(8,128)}', space=vmem, size = 0x2000, scoped, tag = 'scratch operand']
  %s0 = inlined_call_operand.vmem [shape: f32[16,16], index: 0, kind: input, shape index: {}]
  %s1 = inlined_call_operand.vmem [shape: f32[16,512], index: 1, kind: input, shape index: {}]
  %s2 = inlined_call_operand.hbm [shape: f32[128,512], index: 2, kind: input, shape index: {}]
  %s3 = inlined_call_operand.vmem [shape: f32[1,512], index: 3, kind: input, shape index: {}]
  %s4 = inlined_call_operand.hbm [shape: f32[128,512], index: 4, kind: input, shape index: {}]
  %s5 = inlined_call_operand.hbm [shape: f32[128,512], index: 5, kind: input, shape index: {}]
  %s6 = inlined_call_operand.vmem [shape: f32[1,512], index: 6, kind: input, shape index: {}]
  %s7 = inlined_call_operand.vmem [shape: f32[128,4], index: 7, kind: input, shape index: {}]
  %s8 = inlined_call_operand.vmem [shape: f32[1,4], index: 8, kind: input, shape index: {}]
  %s9 = inlined_call_operand.hbm [shape: f32[2,4], index: 9, kind: output, shape index: {}]
  %s10 = sld [smem:[#allocation0]]
  $region58: #{fused_lstm_forward.1} parent=0
    _
  %s12 = ssub.s32 1, %s10
  %s13 = scalar_select 0, %s12, %s10
  $region1: #{fused_lstm_forward.1} parent=0
    #allocation3 [shape = 'u8[262144]{0}', space=vmem, size = 0x40000, scoped, tag = 'input window, operand 2, single buffered']
    #allocation4 [shape = 's32[1]{0}', space=sflag, size = 0x4, scoped, tag = 'scoped memory for fused_lstm_forward.1']
    #allocation5 [shape = 's32[1]{0}', space=sflag, size = 0x4, scoped, tag = 'scoped memory for fused_lstm_forward.1']
    #allocation6 [shape = 'u8[262144]{0}', space=vmem, size = 0x40000, scoped, tag = 'input window, operand 4, single buffered']
    #allocation7 [shape = 's32[1]{0}', space=sflag, size = 0x4, scoped, tag = 'scoped memory for fused_lstm_forward.1']
    #allocation8 [shape = 'u8[262144]{0}', space=vmem, size = 0x40000, scoped, tag = 'input window, operand 5, single buffered']
    #allocation9 [shape = 'u8[1024]{0}', space=vmem, size = 0x400, scoped, tag = 'output window, operand 0, single buffered']
    %14 = vsyncpa [#allocation4], 0
    %15 = vsyncpa [#allocation7], 0
    %16 = vsyncpa [#allocation5], 0
    // Predicated region
    $region2: #{fused_lstm_forward.1} parent=1 // pred_check
      _
    $region3: #{fused_lstm_forward.1} parent=1 // pred_check_branch
      %18 = sbr.rel (0) target = $region5
    $region4: #{fused_lstm_forward.1} parent=1 // pred_region
      _
    $region5: #{fused_lstm_forward.1} parent=1 // pred_fallthru
      _
    // Predicated region
    $region6: #{fused_lstm_forward.1} parent=1 // pred_check
      _
    $region7: #{fused_lstm_forward.1} parent=1 // pred_check_branch
      %20 = sbr.rel (0) target = $region9
    $region8: #{fused_lstm_forward.1} parent=1 // pred_region
      _
    $region9: #{fused_lstm_forward.1} parent=1 // pred_fallthru
      _
    // Predicated region
    $region10: #{fused_lstm_forward.1} parent=1 // pred_check
      _
    $region11: #{fused_lstm_forward.1} parent=1 // pred_check_branch
      %22 = sbr.rel (0) target = $region13
    $region12: #{fused_lstm_forward.1} parent=1 // pred_region
      %s24 = ssub.s32 8192, 8192
      %25 = vsyncadd [#allocation4], %s24
      %s26 = sshll.u32 [#allocation3], 4
      %s27 = int_to_ptr.vmem [resolvable:$true] %s26
      %32 = dma.hbm_to_vmem [thread:$0]  %s2, 8192, %s27, [#allocation4], 512, 512, 32
    $region13: #{fused_lstm_forward.1} parent=1 // pred_fallthru
      _
    // Predicated region
    $region14: #{fused_lstm_forward.1} parent=1 // pred_check
      _
    $region15: #{fused_lstm_forward.1} parent=1 // pred_check_branch
      %34 = sbr.rel (0) target = $region17
    $region16: #{fused_lstm_forward.1} parent=1 // pred_region
      _
    $region17: #{fused_lstm_forward.1} parent=1 // pred_fallthru
      _
    // Predicated region
    $region18: #{fused_lstm_forward.1} parent=1 // pred_check
      _
    $region19: #{fused_lstm_forward.1} parent=1 // pred_check_branch
      %36 = sbr.rel (0) target = $region21
    $region20: #{fused_lstm_forward.1} parent=1 // pred_region
      %s38 = ssub.s32 8192, 8192
      %39 = vsyncadd [#allocation7], %s38
      %s40 = sshll.u32 [#allocation6], 4
      %s41 = int_to_ptr.vmem [resolvable:$true] %s40
      %46 = dma.hbm_to_vmem [thread:$0]  %s4, 8192, %s41, [#allocation7], 512, 512, 32
    $region21: #{fused_lstm_forward.1} parent=1 // pred_fallthru
      _
    // Predicated region
    $region22: #{fused_lstm_forward.1} parent=1 // pred_check
      _
    $region23: #{fused_lstm_forward.1} parent=1 // pred_check_branch
      %48 = sbr.rel (0) target = $region25
    $region24: #{fused_lstm_forward.1} parent=1 // pred_region
      %s50 = ssub.s32 8192, 8192
      %51 = vsyncadd [#allocation7], %s50
      %s52 = sshll.u32 [#allocation8], 4
      %s53 = int_to_ptr.vmem [resolvable:$true] %s52
      %58 = dma.hbm_to_vmem [thread:$0]  %s5, 8192, %s53, [#allocation7], 512, 512, 32
    $region25: #{fused_lstm_forward.1} parent=1 // pred_fallthru
      _
    // Predicated region
    $region26: #{fused_lstm_forward.1} parent=1 // pred_check
      _
    $region27: #{fused_lstm_forward.1} parent=1 // pred_check_branch
      %60 = sbr.rel (0) target = $region29
    $region28: #{fused_lstm_forward.1} parent=1 // pred_region
      _
    $region29: #{fused_lstm_forward.1} parent=1 // pred_fallthru
      _
    // Predicated region
    $region30: #{fused_lstm_forward.1} parent=1 // pred_check
      _
    $region31: #{fused_lstm_forward.1} parent=1 // pred_check_branch
      %62 = sbr.rel (0) target = $region33
    $region32: #{fused_lstm_forward.1} parent=1 // pred_region
      _
    $region33: #{fused_lstm_forward.1} parent=1 // pred_fallthru
      _
    // Predicated region
    $region34: #{fused_lstm_forward.1} parent=1 // pred_check
      _
    $region35: #{fused_lstm_forward.1} parent=1 // pred_check_branch
      %64 = sbr.rel (0) target = $region37
    $region36: #{fused_lstm_forward.1} parent=1 // pred_region
      _
    $region37: #{fused_lstm_forward.1} parent=1 // pred_fallthru
      _
    // Predicated region
    $region38: #{fused_lstm_forward.1} parent=1 // pred_check
      _
    $region39: #{fused_lstm_forward.1} parent=1 // pred_check_branch
      %66 = sbr.rel (0) target = $region41
    $region40: #{fused_lstm_forward.1} parent=1 // pred_region
      %67 = dma.done [#allocation4], 8192
    $region41: #{fused_lstm_forward.1} parent=1 // pred_fallthru
      _
    // Predicated region
    $region42: #{fused_lstm_forward.1} parent=1 // pred_check
      _
    $region43: #{fused_lstm_forward.1} parent=1 // pred_check_branch
      %69 = sbr.rel (0) target = $region45
    $region44: #{fused_lstm_forward.1} parent=1 // pred_region
      %70 = dma.done [#allocation7], 8192
    $region45: #{fused_lstm_forward.1} parent=1 // pred_fallthru
      _
    // Predicated region
    $region46: #{fused_lstm_forward.1} parent=1 // pred_check
      _
    $region47: #{fused_lstm_forward.1} parent=1 // pred_check_branch
      %72 = sbr.rel (0) target = $region49
    $region48: #{fused_lstm_forward.1} parent=1 // pred_region
      %73 = dma.done [#allocation7], 8192
    $region49: #{fused_lstm_forward.1} parent=1 // pred_fallthru
      _
    %v74 = vld [vmem:[%s0] sm:$0xff]
    %v75 = vld [vmem:[%s0 + $0x8] sm:$0xff]
    %v76 = vld [vmem:[%s1] sm:$0xff]
    %v77 = vld [vmem:[%s1 + $0x8] sm:$0xff]
    %v78 = vld [vmem:[%s1 + $0x10] sm:$0xff]
    %v79 = vld [vmem:[%s1 + $0x18] sm:$0xff]
    %v80 = vld [vmem:[%s1 + $0x20] sm:$0xff]
    %v81 = vld [vmem:[%s1 + $0x28] sm:$0xff]
    %v82 = vld [vmem:[%s1 + $0x30] sm:$0xff]
    %v83 = vld [vmem:[%s1 + $0x38] sm:$0xff]
    %v84 = vld [vmem:[#allocation3] sm:$0xff]
    %v85 = vld [vmem:[#allocation3 + $0x8] sm:$0xff]
    %v86 = vld [vmem:[#allocation3 + $0x10] sm:$0xff]
    %v87 = vld [vmem:[#allocation3 + $0x18] sm:$0xff]
    %v88 = vld [vmem:[#allocation3 + $0x20] sm:$0xff]
    %v89 = vld [vmem:[#allocation3 + $0x28] sm:$0xff]
    %v90 = vld [vmem:[#allocation3 + $0x30] sm:$0xff]
    %v91 = vld [vmem:[#allocation3 + $0x38] sm:$0xff]
    %v92 = vld [vmem:[#allocation3 + $0x40] sm:$0xff]
    %v93 = vld [vmem:[#allocation3 + $0x48] sm:$0xff]
    %v94 = vld [vmem:[#allocation3 + $0x50] sm:$0xff]
    %v95 = vld [vmem:[#allocation3 + $0x58] sm:$0xff]
    %v96 = vld [vmem:[#allocation3 + $0x60] sm:$0xff]
    %v97 = vld [vmem:[#allocation3 + $0x68] sm:$0xff]
    %v98 = vld [vmem:[#allocation3 + $0x70] sm:$0xff]
    %v99 = vld [vmem:[#allocation3 + $0x78] sm:$0xff]
    %v100 = vld [vmem:[#allocation3 + $0x80] sm:$0xff]
    %v101 = vld [vmem:[#allocation3 + $0x88] sm:$0xff]
    %v102 = vld [vmem:[#allocation3 + $0x90] sm:$0xff]
    %v103 = vld [vmem:[#allocation3 + $0x98] sm:$0xff]
    %v104 = vld [vmem:[#allocation3 + $0xa0] sm:$0xff]
    %v105 = vld [vmem:[#allocation3 + $0xa8] sm:$0xff]
    %v106 = vld [vmem:[#allocation3 + $0xb0] sm:$0xff]
    %v107 = vld [vmem:[#allocation3 + $0xb8] sm:$0xff]
    %v108 = vld [vmem:[#allocation3 + $0xc0] sm:$0xff]
    %v109 = vld [vmem:[#allocation3 + $0xc8] sm:$0xff]
    %v110 = vld [vmem:[#allocation3 + $0xd0] sm:$0xff]
    %v111 = vld [vmem:[#allocation3 + $0xd8] sm:$0xff]
    %v112 = vld [vmem:[#allocation3 + $0xe0] sm:$0xff]
    %v113 = vld [vmem:[#allocation3 + $0xe8] sm:$0xff]
    %v114 = vld [vmem:[#allocation3 + $0xf0] sm:$0xff]
    %v115 = vld [vmem:[#allocation3 + $0xf8] sm:$0xff]
    %v116 = vld [vmem:[#allocation3 + $0x100] sm:$0xff]
    %v117 = vld [vmem:[#allocation3 + $0x108] sm:$0xff]
    %v118 = vld [vmem:[#allocation3 + $0x110] sm:$0xff]
    %v119 = vld [vmem:[#allocation3 + $0x118] sm:$0xff]
    %v120 = vld [vmem:[#allocation3 + $0x120] sm:$0xff]
    %v121 = vld [vmem:[#allocation3 + $0x128] sm:$0xff]
    %v122 = vld [vmem:[#allocation3 + $0x130] sm:$0xff]
    %v123 = vld [vmem:[#allocation3 + $0x138] sm:$0xff]
    %v124 = vld [vmem:[#allocation3 + $0x140] sm:$0xff]
    %v125 = vld [vmem:[#allocation3 + $0x148] sm:$0xff]
    %v126 = vld [vmem:[#allocation3 + $0x150] sm:$0xff]
    %v127 = vld [vmem:[#allocation3 + $0x158] sm:$0xff]
    %v128 = vld [vmem:[#allocation3 + $0x160] sm:$0xff]
    %v129 = vld [vmem:[#allocation3 + $0x168] sm:$0xff]
    %v130 = vld [vmem:[#allocation3 + $0x170] sm:$0xff]
    %v131 = vld [vmem:[#allocation3 + $0x178] sm:$0xff]
    %v132 = vld [vmem:[#allocation3 + $0x180] sm:$0xff]
    %v133 = vld [vmem:[#allocation3 + $0x188] sm:$0xff]
    %v134 = vld [vmem:[#allocation3 + $0x190] sm:$0xff]
    %v135 = vld [vmem:[#allocation3 + $0x198] sm:$0xff]
    %v136 = vld [vmem:[#allocation3 + $0x1a0] sm:$0xff]
    %v137 = vld [vmem:[#allocation3 + $0x1a8] sm:$0xff]
    %v138 = vld [vmem:[#allocation3 + $0x1b0] sm:$0xff]
    %v139 = vld [vmem:[#allocation3 + $0x1b8] sm:$0xff]
    %v140 = vld [vmem:[#allocation3 + $0x1c0] sm:$0xff]
    %v141 = vld [vmem:[#allocation3 + $0x1c8] sm:$0xff]
    %v142 = vld [vmem:[#allocation3 + $0x1d0] sm:$0xff]
    %v143 = vld [vmem:[#allocation3 + $0x1d8] sm:$0xff]
    %v144 = vld [vmem:[#allocation3 + $0x1e0] sm:$0xff]
    %v145 = vld [vmem:[#allocation3 + $0x1e8] sm:$0xff]
    %v146 = vld [vmem:[#allocation3 + $0x1f0] sm:$0xff]
    %v147 = vld [vmem:[#allocation3 + $0x1f8] sm:$0xff]
    %v148 = vld [vmem:[%s3] sm:$0xf]
    %v150 = vlaneseq
    %v151 = vshrl.u32 %v150, 7
    %v152 = vsub.s32 0, %v151
    %v153 = vrot.slane %v148, %v152
    %v154 = vlaneseq
    %v155 = vshrl.u32 %v154, 7
    %v156 = vsub.s32 1, %v155
    %v157 = vrot.slane %v148, %v156
    %v158 = vlaneseq
    %v159 = vshrl.u32 %v158, 7
    %v160 = vsub.s32 2, %v159
    %v161 = vrot.slane %v148, %v160
    %v162 = vlaneseq
    %v163 = vshrl.u32 %v162, 7
    %v164 = vsub.s32 3, %v163
    %v165 = vrot.slane %v148, %v164
    %vm170 = vcmask 130048
    %v172 = vsel %vm170, %v74, 0
    %v175 = vsel %vm170, %v75, 0
    %177 = vmatprep.subr.mxu0 0.0
    %178 = vmatpush1.msra.mxu0 0.0
    %179 = vmatprep.subr.mxu0 0.0
    %180 = vmatpush1.msra.mxu0 0.0
    %181 = vmatprep.subr.mxu0 0.0
    %182 = vmatpush1.msra.mxu0 0.0
    %183 = vmatprep.subr.mxu0 0.0
    %184 = vmatpush1.msra.mxu0 0.0
    %185 = vmatprep.subr.mxu0 0.0
    %186 = vmatpush1.msra.mxu0 0.0
    %187 = vmatprep.subr.mxu0 0.0
    %188 = vmatpush1.msra.mxu0 0.0
    %189 = vmatprep.subr.mxu0 0.0
    %190 = vmatpush1.msra.mxu0 0.0
    %191 = vmatprep.subr.mxu0 0.0
    %192 = vmatpush1.msra.mxu0 0.0
    %193 = vmatprep.subr.mxu0 0.0
    %194 = vmatpush1.msra.mxu0 0.0
    %195 = vmatprep.subr.mxu0 0.0
    %196 = vmatpush1.msra.mxu0 0.0
    %197 = vmatprep.subr.mxu0 0.0
    %198 = vmatpush1.msra.mxu0 0.0
    %199 = vmatprep.subr.mxu0 0.0
    %200 = vmatpush1.msra.mxu0 0.0
    %201 = vmatprep.subr.mxu0 0.0
    %202 = vmatpush1.msra.mxu0 0.0
    %203 = vmatprep.subr.mxu0 0.0
    %204 = vmatpush1.msra.mxu0 0.0
    %205 = vmatprep.subr.mxu0 %v81
    %206 = vmatpush1.msra.mxu0 %v80
    %207 = vmatprep.subr.mxu0 %v77
    %208 = vmatpush1.msra.mxu0 %v76
    %209 = vmatprep.subr.mxu0 0.0
    %210 = vmatpush2.msra.mxu0 0.0
    %211 = vmatprep.subr.mxu0 0.0
    %212 = vmatpush2.msra.mxu0 0.0
    %213 = vmatprep.subr.mxu0 0.0
    %214 = vmatpush2.msra.mxu0 0.0
    %215 = vmatprep.subr.mxu0 0.0
    %216 = vmatpush2.msra.mxu0 0.0
    %217 = vmatprep.subr.mxu0 0.0
    %218 = vmatpush2.msra.mxu0 0.0
    %219 = vmatprep.subr.mxu0 0.0
    %220 = vmatpush2.msra.mxu0 0.0
    %221 = vmatprep.subr.mxu0 0.0
    %222 = vmatpush2.msra.mxu0 0.0
    %223 = vmatprep.subr.mxu0 0.0
    %224 = vmatpush2.msra.mxu0 0.0
    %225 = vmatprep.subr.mxu0 0.0
    %226 = vmatpush2.msra.mxu0 0.0
    %227 = vmatprep.subr.mxu0 0.0
    %228 = vmatpush2.msra.mxu0 0.0
    %229 = vmatprep.subr.mxu0 0.0
    %230 = vmatpush2.msra.mxu0 0.0
    %231 = vmatprep.subr.mxu0 0.0
    %232 = vmatpush2.msra.mxu0 0.0
    %233 = vmatprep.subr.mxu0 0.0
    %234 = vmatpush2.msra.mxu0 0.0
    %235 = vmatprep.subr.mxu0 0.0
    %236 = vmatpush2.msra.mxu0 0.0
    %237 = vmatprep.subr.mxu0 0.0
    %238 = vmatpush2.msra.mxu0 0.0
    %239 = vmatprep.subr.mxu0 0.0
    %240 = vmatpush2.msra.mxu0 0.0
    %241 = vmatprep.mubr.f32.mxu0 0.0
    %242 = vmatmul.mubr.f32.gmra.mxu0 %v172
    %v243 = vpop.f32.mrf.mxu0
    %v244 = vadd.f32 %v153, %v243
    %v245 = vpop.f32.mrf.mxu0
    %v246 = vadd.f32 %v157, %v245
    %247 = vmatprep.mubr.f32.mxu0 0.0
    %248 = vmatmul.mubr.f32.gmra.mxu0 %v175
    %v249 = vpop.f32.mrf.mxu0
    %v250 = vadd.f32 %v153, %v249
    %v251 = vpop.f32.mrf.mxu0
    %v252 = vadd.f32 %v157, %v251
    %253 = vdwg.mxu0
    %254 = vmatprep.subr.mxu0 0.0
    %255 = vmatpush1.msra.mxu0 0.0
    %256 = vmatprep.subr.mxu0 0.0
    %257 = vmatpush1.msra.mxu0 0.0
    %258 = vmatprep.subr.mxu0 0.0
    %259 = vmatpush1.msra.mxu0 0.0
    %260 = vmatprep.subr.mxu0 0.0
    %261 = vmatpush1.msra.mxu0 0.0
    %262 = vmatprep.subr.mxu0 0.0
    %263 = vmatpush1.msra.mxu0 0.0
    %264 = vmatprep.subr.mxu0 0.0
    %265 = vmatpush1.msra.mxu0 0.0
    %266 = vmatprep.subr.mxu0 0.0
    %267 = vmatpush1.msra.mxu0 0.0
    %268 = vmatprep.subr.mxu0 0.0
    %269 = vmatpush1.msra.mxu0 0.0
    %270 = vmatprep.subr.mxu0 0.0
    %271 = vmatpush1.msra.mxu0 0.0
    %272 = vmatprep.subr.mxu0 0.0
    %273 = vmatpush1.msra.mxu0 0.0
    %274 = vmatprep.subr.mxu0 0.0
    %275 = vmatpush1.msra.mxu0 0.0
    %276 = vmatprep.subr.mxu0 0.0
    %277 = vmatpush1.msra.mxu0 0.0
    %278 = vmatprep.subr.mxu0 0.0
    %279 = vmatpush1.msra.mxu0 0.0
    %280 = vmatprep.subr.mxu0 0.0
    %281 = vmatpush1.msra.mxu0 0.0
    %282 = vmatprep.subr.mxu0 %v83
    %283 = vmatpush1.msra.mxu0 %v82
    %284 = vmatprep.subr.mxu0 %v79
    %285 = vmatpush1.msra.mxu0 %v78
    %286 = vmatprep.subr.mxu0 0.0
    %287 = vmatpush2.msra.mxu0 0.0
    %288 = vmatprep.subr.mxu0 0.0
    %289 = vmatpush2.msra.mxu0 0.0
    %290 = vmatprep.subr.mxu0 0.0
    %291 = vmatpush2.msra.mxu0 0.0
    %292 = vmatprep.subr.mxu0 0.0
    %293 = vmatpush2.msra.mxu0 0.0
    %294 = vmatprep.subr.mxu0 0.0
    %295 = vmatpush2.msra.mxu0 0.0
    %296 = vmatprep.subr.mxu0 0.0
    %297 = vmatpush2.msra.mxu0 0.0
    %298 = vmatprep.subr.mxu0 0.0
    %299 = vmatpush2.msra.mxu0 0.0
    %300 = vmatprep.subr.mxu0 0.0
    %301 = vmatpush2.msra.mxu0 0.0
    %302 = vmatprep.subr.mxu0 0.0
    %303 = vmatpush2.msra.mxu0 0.0
    %304 = vmatprep.subr.mxu0 0.0
    %305 = vmatpush2.msra.mxu0 0.0
    %306 = vmatprep.subr.mxu0 0.0
    %307 = vmatpush2.msra.mxu0 0.0
    %308 = vmatprep.subr.mxu0 0.0
    %309 = vmatpush2.msra.mxu0 0.0
    %310 = vmatprep.subr.mxu0 0.0
    %311 = vmatpush2.msra.mxu0 0.0
    %312 = vmatprep.subr.mxu0 0.0
    %313 = vmatpush2.msra.mxu0 0.0
    %314 = vmatprep.subr.mxu0 0.0
    %315 = vmatpush2.msra.mxu0 0.0
    %316 = vmatprep.subr.mxu0 0.0
    %317 = vmatpush2.msra.mxu0 0.0
    %318 = vmatprep.mubr.f32.mxu0 0.0
    %319 = vmatmul.mubr.f32.gmra.mxu0 %v172
    %v320 = vpop.f32.mrf.mxu0
    %v321 = vadd.f32 %v161, %v320
    %v322 = vpop.f32.mrf.mxu0
    %v323 = vadd.f32 %v165, %v322
    %324 = vmatprep.mubr.f32.mxu0 0.0
    %325 = vmatmul.mubr.f32.gmra.mxu0 %v175
    %v326 = vpop.f32.mrf.mxu0
    %v327 = vadd.f32 %v161, %v326
    %v328 = vpop.f32.mrf.mxu0
    %v329 = vadd.f32 %v165, %v328
    %330 = vdwg.mxu0
    %331 = vmatprep.subr.mxu0 %v145
    %332 = vmatpush1.msra.mxu0 %v144
    %333 = vmatprep.subr.mxu0 %v141
    %334 = vmatpush1.msra.mxu0 %v140
    %335 = vmatprep.subr.mxu0 %v137
    %336 = vmatpush1.msra.mxu0 %v136
    %337 = vmatprep.subr.mxu0 %v133
    %338 = vmatpush1.msra.mxu0 %v132
    %339 = vmatprep.subr.mxu0 %v129
    %340 = vmatpush1.msra.mxu0 %v128
    %341 = vmatprep.subr.mxu0 %v125
    %342 = vmatpush1.msra.mxu0 %v124
    %343 = vmatprep.subr.mxu0 %v121
    %344 = vmatpush1.msra.mxu0 %v120
    %345 = vmatprep.subr.mxu0 %v117
    %346 = vmatpush1.msra.mxu0 %v116
    %347 = vmatprep.subr.mxu0 %v113
    %348 = vmatpush1.msra.mxu0 %v112
    %349 = vmatprep.subr.mxu0 %v109
    %350 = vmatpush1.msra.mxu0 %v108
    %351 = vmatprep.subr.mxu0 %v105
    %352 = vmatpush1.msra.mxu0 %v104
    %353 = vmatprep.subr.mxu0 %v101
    %354 = vmatpush1.msra.mxu0 %v100
    %355 = vmatprep.subr.mxu0 %v97
    %356 = vmatpush1.msra.mxu0 %v96
    %357 = vmatprep.subr.mxu0 %v93
    %358 = vmatpush1.msra.mxu0 %v92
    %359 = vmatprep.subr.mxu0 %v89
    %360 = vmatpush1.msra.mxu0 %v88
    %361 = vmatprep.subr.mxu0 %v85
    %362 = vmatpush1.msra.mxu0 %v84
    %363 = vmatprep.subr.mxu0 0.0
    %364 = vmatpush2.msra.mxu0 0.0
    %365 = vmatprep.subr.mxu0 0.0
    %366 = vmatpush2.msra.mxu0 0.0
    %367 = vmatprep.subr.mxu0 0.0
    %368 = vmatpush2.msra.mxu0 0.0
    %369 = vmatprep.subr.mxu0 0.0
    %370 = vmatpush2.msra.mxu0 0.0
    %371 = vmatprep.subr.mxu0 0.0
    %372 = vmatpush2.msra.mxu0 0.0
    %373 = vmatprep.subr.mxu0 0.0
    %374 = vmatpush2.msra.mxu0 0.0
    %375 = vmatprep.subr.mxu0 0.0
    %376 = vmatpush2.msra.mxu0 0.0
    %377 = vmatprep.subr.mxu0 0.0
    %378 = vmatpush2.msra.mxu0 0.0
    %379 = vmatprep.subr.mxu0 0.0
    %380 = vmatpush2.msra.mxu0 0.0
    %381 = vmatprep.subr.mxu0 0.0
    %382 = vmatpush2.msra.mxu0 0.0
    %383 = vmatprep.subr.mxu0 0.0
    %384 = vmatpush2.msra.mxu0 0.0
    %385 = vmatprep.subr.mxu0 0.0
    %386 = vmatpush2.msra.mxu0 0.0
    %387 = vmatprep.subr.mxu0 0.0
    %388 = vmatpush2.msra.mxu0 0.0
    %389 = vmatprep.subr.mxu0 0.0
    %390 = vmatpush2.msra.mxu0 0.0
    %391 = vmatprep.subr.mxu0 0.0
    %392 = vmatpush2.msra.mxu0 0.0
    %393 = vmatprep.subr.mxu0 0.0
    %394 = vmatpush2.msra.mxu0 0.0
    %395 = vmatprep.mubr.f32.mxu0 0.0
    %396 = vmatmul.mubr.f32.gmra.mxu0 0.0
    %v397 = vpop.f32.mrf.mxu0
    %v398 = vadd.f32 0.0, %v397
    %v399 = vpop.f32.mrf.mxu0
    %v400 = vadd.f32 0.0, %v399
    %401 = vdwg.mxu0
    %402 = vmatprep.subr.mxu0 %v147
    %403 = vmatpush1.msra.mxu0 %v146
    %404 = vmatprep.subr.mxu0 %v143
    %405 = vmatpush1.msra.mxu0 %v142
    %406 = vmatprep.subr.mxu0 %v139
    %407 = vmatpush1.msra.mxu0 %v138
    %408 = vmatprep.subr.mxu0 %v135
    %409 = vmatpush1.msra.mxu0 %v134
    %410 = vmatprep.subr.mxu0 %v131
    %411 = vmatpush1.msra.mxu0 %v130
    %412 = vmatprep.subr.mxu0 %v127
    %413 = vmatpush1.msra.mxu0 %v126
    %414 = vmatprep.subr.mxu0 %v123
    %415 = vmatpush1.msra.mxu0 %v122
    %416 = vmatprep.subr.mxu0 %v119
    %417 = vmatpush1.msra.mxu0 %v118
    %418 = vmatprep.subr.mxu0 %v115
    %419 = vmatpush1.msra.mxu0 %v114
    %420 = vmatprep.subr.mxu0 %v111
    %421 = vmatpush1.msra.mxu0 %v110
    %422 = vmatprep.subr.mxu0 %v107
    %423 = vmatpush1.msra.mxu0 %v106
    %424 = vmatprep.subr.mxu0 %v103
    %425 = vmatpush1.msra.mxu0 %v102
    %426 = vmatprep.subr.mxu0 %v99
    %427 = vmatpush1.msra.mxu0 %v98
    %428 = vmatprep.subr.mxu0 %v95
    %429 = vmatpush1.msra.mxu0 %v94
    %430 = vmatprep.subr.mxu0 %v91
    %431 = vmatpush1.msra.mxu0 %v90
    %432 = vmatprep.subr.mxu0 %v87
    %433 = vmatpush1.msra.mxu0 %v86
    %434 = vmatprep.subr.mxu0 0.0
    %435 = vmatpush2.msra.mxu0 0.0
    %436 = vmatprep.subr.mxu0 0.0
    %437 = vmatpush2.msra.mxu0 0.0
    %438 = vmatprep.subr.mxu0 0.0
    %439 = vmatpush2.msra.mxu0 0.0
    %440 = vmatprep.subr.mxu0 0.0
    %441 = vmatpush2.msra.mxu0 0.0
    %442 = vmatprep.subr.mxu0 0.0
    %443 = vmatpush2.msra.mxu0 0.0
    %444 = vmatprep.subr.mxu0 0.0
    %445 = vmatpush2.msra.mxu0 0.0
    %446 = vmatprep.subr.mxu0 0.0
    %447 = vmatpush2.msra.mxu0 0.0
    %448 = vmatprep.subr.mxu0 0.0
    %449 = vmatpush2.msra.mxu0 0.0
    %450 = vmatprep.subr.mxu0 0.0
    %451 = vmatpush2.msra.mxu0 0.0
    %452 = vmatprep.subr.mxu0 0.0
    %453 = vmatpush2.msra.mxu0 0.0
    %454 = vmatprep.subr.mxu0 0.0
    %455 = vmatpush2.msra.mxu0 0.0
    %456 = vmatprep.subr.mxu0 0.0
    %457 = vmatpush2.msra.mxu0 0.0
    %458 = vmatprep.subr.mxu0 0.0
    %459 = vmatpush2.msra.mxu0 0.0
    %460 = vmatprep.subr.mxu0 0.0
    %461 = vmatpush2.msra.mxu0 0.0
    %462 = vmatprep.subr.mxu0 0.0
    %463 = vmatpush2.msra.mxu0 0.0
    %464 = vmatprep.subr.mxu0 0.0
    %465 = vmatpush2.msra.mxu0 0.0
    %466 = vmatprep.mubr.f32.mxu0 0.0
    %467 = vmatmul.mubr.f32.gmra.mxu0 0.0
    %v468 = vpop.f32.mrf.mxu0
    %v469 = vadd.f32 0.0, %v468
    %v470 = vpop.f32.mrf.mxu0
    %v471 = vadd.f32 0.0, %v470
    %472 = vdwg.mxu0
    %v473 = vadd.f32 %v244, %v398
    %v474 = vadd.f32 %v246, %v400
    %v475 = vadd.f32 %v321, %v469
    %v476 = vadd.f32 %v323, %v471
    %v477 = vxor.u32 %v473, 2147483648
    %v478 = vmul.f32 %v477, 1.442695
    %v479 = vpow.pop %v478
    %v480 = vadd.f32 %v479, 1.0
    %v481 = vrcp.pop %v480
    %v482 = vmul.f32 1.0, %v481
    %v483 = vxor.u32 %v474, 2147483648
    %v484 = vmul.f32 %v483, 1.442695
    %v485 = vpow.pop %v484
    %v486 = vadd.f32 %v485, 1.0
    %v487 = vrcp.pop %v486
    %v488 = vmul.f32 1.0, %v487
    %v489 = vtanh.pop %v475
    %v490 = vxor.u32 %v476, 2147483648
    %v491 = vmul.f32 %v490, 1.442695
    %v492 = vpow.pop %v491
    %v493 = vadd.f32 %v492, 1.0
    %v494 = vrcp.pop %v493
    %v495 = vmul.f32 1.0, %v494
    %v496 = vmul.f32 %v488, 0.0
    %v497 = vmul.f32 %v482, %v489
    %v498 = vadd.f32 %v496, %v497
    %v499 = vtanh.pop %v498
    %v500 = vmul.f32 %v495, %v499
    %501 = vst [vmem:[#allocation2] sm:$0x3] %v500
    %502 = vmatprep.subr.mxu0 %v145
    %503 = vmatpush1.msra.mxu0 %v144
    %504 = vmatprep.subr.mxu0 %v141
    %505 = vmatpush1.msra.mxu0 %v140
    %506 = vmatprep.subr.mxu0 %v137
    %507 = vmatpush1.msra.mxu0 %v136
    %508 = vmatprep.subr.mxu0 %v133
    %509 = vmatpush1.msra.mxu0 %v132
    %510 = vmatprep.subr.mxu0 %v129
    %511 = vmatpush1.msra.mxu0 %v128
    %512 = vmatprep.subr.mxu0 %v125
    %513 = vmatpush1.msra.mxu0 %v124
    %514 = vmatprep.subr.mxu0 %v121
    %515 = vmatpush1.msra.mxu0 %v120
    %516 = vmatprep.subr.mxu0 %v117
    %517 = vmatpush1.msra.mxu0 %v116
    %518 = vmatprep.subr.mxu0 %v113
    %519 = vmatpush1.msra.mxu0 %v112
    %520 = vmatprep.subr.mxu0 %v109
    %521 = vmatpush1.msra.mxu0 %v108
    %522 = vmatprep.subr.mxu0 %v105
    %523 = vmatpush1.msra.mxu0 %v104
    %524 = vmatprep.subr.mxu0 %v101
    %525 = vmatpush1.msra.mxu0 %v100
    %526 = vmatprep.subr.mxu0 %v97
    %527 = vmatpush1.msra.mxu0 %v96
    %528 = vmatprep.subr.mxu0 %v93
    %529 = vmatpush1.msra.mxu0 %v92
    %530 = vmatprep.subr.mxu0 %v89
    %531 = vmatpush1.msra.mxu0 %v88
    %532 = vmatprep.subr.mxu0 %v85
    %533 = vmatpush1.msra.mxu0 %v84
    %534 = vmatprep.subr.mxu0 0.0
    %535 = vmatpush2.msra.mxu0 0.0
    %536 = vmatprep.subr.mxu0 0.0
    %537 = vmatpush2.msra.mxu0 0.0
    %538 = vmatprep.subr.mxu0 0.0
    %539 = vmatpush2.msra.mxu0 0.0
    %540 = vmatprep.subr.mxu0 0.0
    %541 = vmatpush2.msra.mxu0 0.0
    %542 = vmatprep.subr.mxu0 0.0
    %543 = vmatpush2.msra.mxu0 0.0
    %544 = vmatprep.subr.mxu0 0.0
    %545 = vmatpush2.msra.mxu0 0.0
    %546 = vmatprep.subr.mxu0 0.0
    %547 = vmatpush2.msra.mxu0 0.0
    %548 = vmatprep.subr.mxu0 0.0
    %549 = vmatpush2.msra.mxu0 0.0
    %550 = vmatprep.subr.mxu0 0.0
    %551 = vmatpush2.msra.mxu0 0.0
    %552 = vmatprep.subr.mxu0 0.0
    %553 = vmatpush2.msra.mxu0 0.0
    %554 = vmatprep.subr.mxu0 0.0
    %555 = vmatpush2.msra.mxu0 0.0
    %556 = vmatprep.subr.mxu0 0.0
    %557 = vmatpush2.msra.mxu0 0.0
    %558 = vmatprep.subr.mxu0 0.0
    %559 = vmatpush2.msra.mxu0 0.0
    %560 = vmatprep.subr.mxu0 0.0
    %561 = vmatpush2.msra.mxu0 0.0
    %562 = vmatprep.subr.mxu0 0.0
    %563 = vmatpush2.msra.mxu0 0.0
    %564 = vmatprep.subr.mxu0 0.0
    %565 = vmatpush2.msra.mxu0 0.0
    %566 = vmatprep.mubr.f32.mxu0 0.0
    %567 = vmatmul.mubr.f32.gmra.mxu0 %v500
    %v568 = vpop.f32.mrf.mxu0
    %v569 = vadd.f32 0.0, %v568
    %v570 = vpop.f32.mrf.mxu0
    %v571 = vadd.f32 0.0, %v570
    %572 = vdwg.mxu0
    %573 = vmatprep.subr.mxu0 %v147
    %574 = vmatpush1.msra.mxu0 %v146
    %575 = vmatprep.subr.mxu0 %v143
    %576 = vmatpush1.msra.mxu0 %v142
    %577 = vmatprep.subr.mxu0 %v139
    %578 = vmatpush1.msra.mxu0 %v138
    %579 = vmatprep.subr.mxu0 %v135
    %580 = vmatpush1.msra.mxu0 %v134
    %581 = vmatprep.subr.mxu0 %v131
    %582 = vmatpush1.msra.mxu0 %v130
    %583 = vmatprep.subr.mxu0 %v127
    %584 = vmatpush1.msra.mxu0 %v126
    %585 = vmatprep.subr.mxu0 %v123
    %586 = vmatpush1.msra.mxu0 %v122
    %587 = vmatprep.subr.mxu0 %v119
    %588 = vmatpush1.msra.mxu0 %v118
    %589 = vmatprep.subr.mxu0 %v115
    %590 = vmatpush1.msra.mxu0 %v114
    %591 = vmatprep.subr.mxu0 %v111
    %592 = vmatpush1.msra.mxu0 %v110
    %593 = vmatprep.subr.mxu0 %v107
    %594 = vmatpush1.msra.mxu0 %v106
    %595 = vmatprep.subr.mxu0 %v103
    %596 = vmatpush1.msra.mxu0 %v102
    %597 = vmatprep.subr.mxu0 %v99
    %598 = vmatpush1.msra.mxu0 %v98
    %599 = vmatprep.subr.mxu0 %v95
    %600 = vmatpush1.msra.mxu0 %v94
    %601 = vmatprep.subr.mxu0 %v91
    %602 = vmatpush1.msra.mxu0 %v90
    %603 = vmatprep.subr.mxu0 %v87
    %604 = vmatpush1.msra.mxu0 %v86
    %605 = vmatprep.subr.mxu0 0.0
    %606 = vmatpush2.msra.mxu0 0.0
    %607 = vmatprep.subr.mxu0 0.0
    %608 = vmatpush2.msra.mxu0 0.0
    %609 = vmatprep.subr.mxu0 0.0
    %610 = vmatpush2.msra.mxu0 0.0
    %611 = vmatprep.subr.mxu0 0.0
    %612 = vmatpush2.msra.mxu0 0.0
    %613 = vmatprep.subr.mxu0 0.0
    %614 = vmatpush2.msra.mxu0 0.0
    %615 = vmatprep.subr.mxu0 0.0
    %616 = vmatpush2.msra.mxu0 0.0
    %617 = vmatprep.subr.mxu0 0.0
    %618 = vmatpush2.msra.mxu0 0.0
    %619 = vmatprep.subr.mxu0 0.0
    %620 = vmatpush2.msra.mxu0 0.0
    %621 = vmatprep.subr.mxu0 0.0
    %622 = vmatpush2.msra.mxu0 0.0
    %623 = vmatprep.subr.mxu0 0.0
    %624 = vmatpush2.msra.mxu0 0.0
    %625 = vmatprep.subr.mxu0 0.0
    %626 = vmatpush2.msra.mxu0 0.0
    %627 = vmatprep.subr.mxu0 0.0
    %628 = vmatpush2.msra.mxu0 0.0
    %629 = vmatprep.subr.mxu0 0.0
    %630 = vmatpush2.msra.mxu0 0.0
    %631 = vmatprep.subr.mxu0 0.0
    %632 = vmatpush2.msra.mxu0 0.0
    %633 = vmatprep.subr.mxu0 0.0
    %634 = vmatpush2.msra.mxu0 0.0
    %635 = vmatprep.subr.mxu0 0.0
    %636 = vmatpush2.msra.mxu0 0.0
    %637 = vmatprep.mubr.f32.mxu0 0.0
    %638 = vmatmul.mubr.f32.gmra.mxu0 %v500
    %v639 = vpop.f32.mrf.mxu0
    %v640 = vadd.f32 0.0, %v639
    %v641 = vpop.f32.mrf.mxu0
    %v642 = vadd.f32 0.0, %v641
    %643 = vdwg.mxu0
    %v648 = vrot.slane %v569, 6
    %v649 = vrot.slane %v571, 6
    %v650 = vrot.slane %v640, 6
    %v651 = vrot.slane %v642, 6
    %v656 = vadd.f32 %v244, %v648
    %v657 = vadd.f32 %v246, %v649
    %v658 = vadd.f32 %v321, %v650
    %v659 = vadd.f32 %v323, %v651
    %v660 = vxor.u32 %v656, 2147483648
    %v661 = vmul.f32 %v660, 1.442695
    %v662 = vpow.pop %v661
    %v663 = vadd.f32 %v662, 1.0
    %v664 = vrcp.pop %v663
    %v665 = vmul.f32 1.0, %v664
    %v666 = vxor.u32 %v657, 2147483648
    %v667 = vmul.f32 %v666, 1.442695
    %v668 = vpow.pop %v667
    %v669 = vadd.f32 %v668, 1.0
    %v670 = vrcp.pop %v669
    %v671 = vmul.f32 1.0, %v670
    %v672 = vtanh.pop %v658
    %v673 = vxor.u32 %v659, 2147483648
    %v674 = vmul.f32 %v673, 1.442695
    %v675 = vpow.pop %v674
    %v676 = vadd.f32 %v675, 1.0
    %v677 = vrcp.pop %v676
    %v678 = vmul.f32 1.0, %v677
    %v680 = vrot.slane %v498, 6
    %v682 = vmul.f32 %v671, %v680
    %v683 = vmul.f32 %v665, %v672
    %v684 = vadd.f32 %v682, %v683
    %v685 = vtanh.pop %v684
    %v686 = vmul.f32 %v678, %v685
    %687 = vst [vmem:[#allocation2] sm:$0xc] %v686
    %v689 = vrot.slane %v686, 2
    %691 = vmatprep.subr.mxu0 %v145
    %692 = vmatpush1.msra.mxu0 %v144
    %693 = vmatprep.subr.mxu0 %v141
    %694 = vmatpush1.msra.mxu0 %v140
    %695 = vmatprep.subr.mxu0 %v137
    %696 = vmatpush1.msra.mxu0 %v136
    %697 = vmatprep.subr.mxu0 %v133
    %698 = vmatpush1.msra.mxu0 %v132
    %699 = vmatprep.subr.mxu0 %v129
    %700 = vmatpush1.msra.mxu0 %v128
    %701 = vmatprep.subr.mxu0 %v125
    %702 = vmatpush1.msra.mxu0 %v124
    %703 = vmatprep.subr.mxu0 %v121
    %704 = vmatpush1.msra.mxu0 %v120
    %705 = vmatprep.subr.mxu0 %v117
    %706 = vmatpush1.msra.mxu0 %v116
    %707 = vmatprep.subr.mxu0 %v113
    %708 = vmatpush1.msra.mxu0 %v112
    %709 = vmatprep.subr.mxu0 %v109
    %710 = vmatpush1.msra.mxu0 %v108
    %711 = vmatprep.subr.mxu0 %v105
    %712 = vmatpush1.msra.mxu0 %v104
    %713 = vmatprep.subr.mxu0 %v101
    %714 = vmatpush1.msra.mxu0 %v100
    %715 = vmatprep.subr.mxu0 %v97
    %716 = vmatpush1.msra.mxu0 %v96
    %717 = vmatprep.subr.mxu0 %v93
    %718 = vmatpush1.msra.mxu0 %v92
    %719 = vmatprep.subr.mxu0 %v89
    %720 = vmatpush1.msra.mxu0 %v88
    %721 = vmatprep.subr.mxu0 %v85
    %722 = vmatpush1.msra.mxu0 %v84
    %723 = vmatprep.subr.mxu0 0.0
    %724 = vmatpush2.msra.mxu0 0.0
    %725 = vmatprep.subr.mxu0 0.0
    %726 = vmatpush2.msra.mxu0 0.0
    %727 = vmatprep.subr.mxu0 0.0
    %728 = vmatpush2.msra.mxu0 0.0
    %729 = vmatprep.subr.mxu0 0.0
    %730 = vmatpush2.msra.mxu0 0.0
    %731 = vmatprep.subr.mxu0 0.0
    %732 = vmatpush2.msra.mxu0 0.0
    %733 = vmatprep.subr.mxu0 0.0
    %734 = vmatpush2.msra.mxu0 0.0
    %735 = vmatprep.subr.mxu0 0.0
    %736 = vmatpush2.msra.mxu0 0.0
    %737 = vmatprep.subr.mxu0 0.0
    %738 = vmatpush2.msra.mxu0 0.0
    %739 = vmatprep.subr.mxu0 0.0
    %740 = vmatpush2.msra.mxu0 0.0
    %741 = vmatprep.subr.mxu0 0.0
    %742 = vmatpush2.msra.mxu0 0.0
    %743 = vmatprep.subr.mxu0 0.0
    %744 = vmatpush2.msra.mxu0 0.0
    %745 = vmatprep.subr.mxu0 0.0
    %746 = vmatpush2.msra.mxu0 0.0
    %747 = vmatprep.subr.mxu0 0.0
    %748 = vmatpush2.msra.mxu0 0.0
    %749 = vmatprep.subr.mxu0 0.0
    %750 = vmatpush2.msra.mxu0 0.0
    %751 = vmatprep.subr.mxu0 0.0
    %752 = vmatpush2.msra.mxu0 0.0
    %753 = vmatprep.subr.mxu0 0.0
    %754 = vmatpush2.msra.mxu0 0.0
    %755 = vmatprep.mubr.f32.mxu0 0.0
    %756 = vmatmul.mubr.f32.gmra.mxu0 %v689
    %v757 = vpop.f32.mrf.mxu0
    %v758 = vadd.f32 0.0, %v757
    %v759 = vpop.f32.mrf.mxu0
    %v760 = vadd.f32 0.0, %v759
    %761 = vdwg.mxu0
    %762 = vmatprep.subr.mxu0 %v147
    %763 = vmatpush1.msra.mxu0 %v146
    %764 = vmatprep.subr.mxu0 %v143
    %765 = vmatpush1.msra.mxu0 %v142
    %766 = vmatprep.subr.mxu0 %v139
    %767 = vmatpush1.msra.mxu0 %v138
    %768 = vmatprep.subr.mxu0 %v135
    %769 = vmatpush1.msra.mxu0 %v134
    %770 = vmatprep.subr.mxu0 %v131
    %771 = vmatpush1.msra.mxu0 %v130
    %772 = vmatprep.subr.mxu0 %v127
    %773 = vmatpush1.msra.mxu0 %v126
    %774 = vmatprep.subr.mxu0 %v123
    %775 = vmatpush1.msra.mxu0 %v122
    %776 = vmatprep.subr.mxu0 %v119
    %777 = vmatpush1.msra.mxu0 %v118
    %778 = vmatprep.subr.mxu0 %v115
    %779 = vmatpush1.msra.mxu0 %v114
    %780 = vmatprep.subr.mxu0 %v111
    %781 = vmatpush1.msra.mxu0 %v110
    %782 = vmatprep.subr.mxu0 %v107
    %783 = vmatpush1.msra.mxu0 %v106
    %784 = vmatprep.subr.mxu0 %v103
    %785 = vmatpush1.msra.mxu0 %v102
    %786 = vmatprep.subr.mxu0 %v99
    %787 = vmatpush1.msra.mxu0 %v98
    %788 = vmatprep.subr.mxu0 %v95
    %789 = vmatpush1.msra.mxu0 %v94
    %790 = vmatprep.subr.mxu0 %v91
    %791 = vmatpush1.msra.mxu0 %v90
    %792 = vmatprep.subr.mxu0 %v87
    %793 = vmatpush1.msra.mxu0 %v86
    %794 = vmatprep.subr.mxu0 0.0
    %795 = vmatpush2.msra.mxu0 0.0
    %796 = vmatprep.subr.mxu0 0.0
    %797 = vmatpush2.msra.mxu0 0.0
    %798 = vmatprep.subr.mxu0 0.0
    %799 = vmatpush2.msra.mxu0 0.0
    %800 = vmatprep.subr.mxu0 0.0
    %801 = vmatpush2.msra.mxu0 0.0
    %802 = vmatprep.subr.mxu0 0.0
    %803 = vmatpush2.msra.mxu0 0.0
    %804 = vmatprep.subr.mxu0 0.0
    %805 = vmatpush2.msra.mxu0 0.0
    %806 = vmatprep.subr.mxu0 0.0
    %807 = vmatpush2.msra.mxu0 0.0
    %808 = vmatprep.subr.mxu0 0.0
    %809 = vmatpush2.msra.mxu0 0.0
    %810 = vmatprep.subr.mxu0 0.0
    %811 = vmatpush2.msra.mxu0 0.0
    %812 = vmatprep.subr.mxu0 0.0
    %813 = vmatpush2.msra.mxu0 0.0
    %814 = vmatprep.subr.mxu0 0.0
    %815 = vmatpush2.msra.mxu0 0.0
    %816 = vmatprep.subr.mxu0 0.0
    %817 = vmatpush2.msra.mxu0 0.0
    %818 = vmatprep.subr.mxu0 0.0
    %819 = vmatpush2.msra.mxu0 0.0
    %820 = vmatprep.subr.mxu0 0.0
    %821 = vmatpush2.msra.mxu0 0.0
    %822 = vmatprep.subr.mxu0 0.0
    %823 = vmatpush2.msra.mxu0 0.0
    %824 = vmatprep.subr.mxu0 0.0
    %825 = vmatpush2.msra.mxu0 0.0
    %826 = vmatprep.mubr.f32.mxu0 0.0
    %827 = vmatmul.mubr.f32.gmra.mxu0 %v689
    %v828 = vpop.f32.mrf.mxu0
    %v829 = vadd.f32 0.0, %v828
    %v830 = vpop.f32.mrf.mxu0
    %v831 = vadd.f32 0.0, %v830
    %832 = vdwg.mxu0
    %v837 = vrot.slane %v758, 4
    %v838 = vrot.slane %v760, 4
    %v839 = vrot.slane %v829, 4
    %v840 = vrot.slane %v831, 4
    %v845 = vadd.f32 %v244, %v837
    %v846 = vadd.f32 %v246, %v838
    %v847 = vadd.f32 %v321, %v839
    %v848 = vadd.f32 %v323, %v840
    %v849 = vxor.u32 %v845, 2147483648
    %v850 = vmul.f32 %v849, 1.442695
    %v851 = vpow.pop %v850
    %v852 = vadd.f32 %v851, 1.0
    %v853 = vrcp.pop %v852
    %v854 = vmul.f32 1.0, %v853
    %v855 = vxor.u32 %v846, 2147483648
    %v856 = vmul.f32 %v855, 1.442695
    %v857 = vpow.pop %v856
    %v858 = vadd.f32 %v857, 1.0
    %v859 = vrcp.pop %v858
    %v860 = vmul.f32 1.0, %v859
    %v861 = vtanh.pop %v847
    %v862 = vxor.u32 %v848, 2147483648
    %v863 = vmul.f32 %v862, 1.442695
    %v864 = vpow.pop %v863
    %v865 = vadd.f32 %v864, 1.0
    %v866 = vrcp.pop %v865
    %v867 = vmul.f32 1.0, %v866
    %v869 = vrot.slane %v684, 6
    %v871 = vmul.f32 %v860, %v869
    %v872 = vmul.f32 %v854, %v861
    %v873 = vadd.f32 %v871, %v872
    %v874 = vtanh.pop %v873
    %v875 = vmul.f32 %v867, %v874
    %876 = vst [vmem:[#allocation2] sm:$0x30] %v875
    %v878 = vrot.slane %v875, 4
    %880 = vmatprep.subr.mxu0 %v145
    %881 = vmatpush1.msra.mxu0 %v144
    %882 = vmatprep.subr.mxu0 %v141
    %883 = vmatpush1.msra.mxu0 %v140
    %884 = vmatprep.subr.mxu0 %v137
    %885 = vmatpush1.msra.mxu0 %v136
    %886 = vmatprep.subr.mxu0 %v133
    %887 = vmatpush1.msra.mxu0 %v132
    %888 = vmatprep.subr.mxu0 %v129
    %889 = vmatpush1.msra.mxu0 %v128
    %890 = vmatprep.subr.mxu0 %v125
    %891 = vmatpush1.msra.mxu0 %v124
    %892 = vmatprep.subr.mxu0 %v121
    %893 = vmatpush1.msra.mxu0 %v120
    %894 = vmatprep.subr.mxu0 %v117
    %895 = vmatpush1.msra.mxu0 %v116
    %896 = vmatprep.subr.mxu0 %v113
    %897 = vmatpush1.msra.mxu0 %v112
    %898 = vmatprep.subr.mxu0 %v109
    %899 = vmatpush1.msra.mxu0 %v108
    %900 = vmatprep.subr.mxu0 %v105
    %901 = vmatpush1.msra.mxu0 %v104
    %902 = vmatprep.subr.mxu0 %v101
    %903 = vmatpush1.msra.mxu0 %v100
    %904 = vmatprep.subr.mxu0 %v97
    %905 = vmatpush1.msra.mxu0 %v96
    %906 = vmatprep.subr.mxu0 %v93
    %907 = vmatpush1.msra.mxu0 %v92
    %908 = vmatprep.subr.mxu0 %v89
    %909 = vmatpush1.msra.mxu0 %v88
    %910 = vmatprep.subr.mxu0 %v85
    %911 = vmatpush1.msra.mxu0 %v84
    %912 = vmatprep.subr.mxu0 0.0
    %913 = vmatpush2.msra.mxu0 0.0
    %914 = vmatprep.subr.mxu0 0.0
    %915 = vmatpush2.msra.mxu0 0.0
    %916 = vmatprep.subr.mxu0 0.0
    %917 = vmatpush2.msra.mxu0 0.0
    %918 = vmatprep.subr.mxu0 0.0
    %919 = vmatpush2.msra.mxu0 0.0
    %920 = vmatprep.subr.mxu0 0.0
    %921 = vmatpush2.msra.mxu0 0.0
    %922 = vmatprep.subr.mxu0 0.0
    %923 = vmatpush2.msra.mxu0 0.0
    %924 = vmatprep.subr.mxu0 0.0
    %925 = vmatpush2.msra.mxu0 0.0
    %926 = vmatprep.subr.mxu0 0.0
    %927 = vmatpush2.msra.mxu0 0.0
    %928 = vmatprep.subr.mxu0 0.0
    %929 = vmatpush2.msra.mxu0 0.0
    %930 = vmatprep.subr.mxu0 0.0
    %931 = vmatpush2.msra.mxu0 0.0
    %932 = vmatprep.subr.mxu0 0.0
    %933 = vmatpush2.msra.mxu0 0.0
    %934 = vmatprep.subr.mxu0 0.0
    %935 = vmatpush2.msra.mxu0 0.0
    %936 = vmatprep.subr.mxu0 0.0
    %937 = vmatpush2.msra.mxu0 0.0
    %938 = vmatprep.subr.mxu0 0.0
    %939 = vmatpush2.msra.mxu0 0.0
    %940 = vmatprep.subr.mxu0 0.0
    %941 = vmatpush2.msra.mxu0 0.0
    %942 = vmatprep.subr.mxu0 0.0
    %943 = vmatpush2.msra.mxu0 0.0
    %944 = vmatprep.mubr.f32.mxu0 0.0
    %945 = vmatmul.mubr.f32.gmra.mxu0 %v878
    %v946 = vpop.f32.mrf.mxu0
    %v947 = vadd.f32 0.0, %v946
    %v948 = vpop.f32.mrf.mxu0
    %v949 = vadd.f32 0.0, %v948
    %950 = vdwg.mxu0
    %951 = vmatprep.subr.mxu0 %v147
    %952 = vmatpush1.msra.mxu0 %v146
    %953 = vmatprep.subr.mxu0 %v143
    %954 = vmatpush1.msra.mxu0 %v142
    %955 = vmatprep.subr.mxu0 %v139
    %956 = vmatpush1.msra.mxu0 %v138
    %957 = vmatprep.subr.mxu0 %v135
    %958 = vmatpush1.msra.mxu0 %v134
    %959 = vmatprep.subr.mxu0 %v131
    %960 = vmatpush1.msra.mxu0 %v130
    %961 = vmatprep.subr.mxu0 %v127
    %962 = vmatpush1.msra.mxu0 %v126
    %963 = vmatprep.subr.mxu0 %v123
    %964 = vmatpush1.msra.mxu0 %v122
    %965 = vmatprep.subr.mxu0 %v119
    %966 = vmatpush1.msra.mxu0 %v118
    %967 = vmatprep.subr.mxu0 %v115
    %968 = vmatpush1.msra.mxu0 %v114
    %969 = vmatprep.subr.mxu0 %v111
    %970 = vmatpush1.msra.mxu0 %v110
    %971 = vmatprep.subr.mxu0 %v107
    %972 = vmatpush1.msra.mxu0 %v106
    %973 = vmatprep.subr.mxu0 %v103
    %974 = vmatpush1.msra.mxu0 %v102
    %975 = vmatprep.subr.mxu0 %v99
    %976 = vmatpush1.msra.mxu0 %v98
    %977 = vmatprep.subr.mxu0 %v95
    %978 = vmatpush1.msra.mxu0 %v94
    %979 = vmatprep.subr.mxu0 %v91
    %980 = vmatpush1.msra.mxu0 %v90
    %981 = vmatprep.subr.mxu0 %v87
    %982 = vmatpush1.msra.mxu0 %v86
    %983 = vmatprep.subr.mxu0 0.0
    %984 = vmatpush2.msra.mxu0 0.0
    %985 = vmatprep.subr.mxu0 0.0
    %986 = vmatpush2.msra.mxu0 0.0
    %987 = vmatprep.subr.mxu0 0.0
    %988 = vmatpush2.msra.mxu0 0.0
    %989 = vmatprep.subr.mxu0 0.0
    %990 = vmatpush2.msra.mxu0 0.0
    %991 = vmatprep.subr.mxu0 0.0
    %992 = vmatpush2.msra.mxu0 0.0
    %993 = vmatprep.subr.mxu0 0.0
    %994 = vmatpush2.msra.mxu0 0.0
    %995 = vmatprep.subr.mxu0 0.0
    %996 = vmatpush2.msra.mxu0 0.0
    %997 = vmatprep.subr.mxu0 0.0
    %998 = vmatpush2.msra.mxu0 0.0
    %999 = vmatprep.subr.mxu0 0.0
    %1000 = vmatpush2.msra.mxu0 0.0
    %1001 = vmatprep.subr.mxu0 0.0
    %1002 = vmatpush2.msra.mxu0 0.0
    %1003 = vmatprep.subr.mxu0 0.0
    %1004 = vmatpush2.msra.mxu0 0.0
    %1005 = vmatprep.subr.mxu0 0.0
    %1006 = vmatpush2.msra.mxu0 0.0
    %1007 = vmatprep.subr.mxu0 0.0
    %1008 = vmatpush2.msra.mxu0 0.0
    %1009 = vmatprep.subr.mxu0 0.0
    %1010 = vmatpush2.msra.mxu0 0.0
    %1011 = vmatprep.subr.mxu0 0.0
    %1012 = vmatpush2.msra.mxu0 0.0
    %1013 = vmatprep.subr.mxu0 0.0
    %1014 = vmatpush2.msra.mxu0 0.0
    %1015 = vmatprep.mubr.f32.mxu0 0.0
    %1016 = vmatmul.mubr.f32.gmra.mxu0 %v878
    %v1017 = vpop.f32.mrf.mxu0
    %v1018 = vadd.f32 0.0, %v1017
    %v1019 = vpop.f32.mrf.mxu0
    %v1020 = vadd.f32 0.0, %v1019
    %1021 = vdwg.mxu0
    %v1026 = vrot.slane %v947, 2
    %v1027 = vrot.slane %v949, 2
    %v1028 = vrot.slane %v1018, 2
    %v1029 = vrot.slane %v1020, 2
    %v1034 = vadd.f32 %v244, %v1026
    %v1035 = vadd.f32 %v246, %v1027
    %v1036 = vadd.f32 %v321, %v1028
    %v1037 = vadd.f32 %v323, %v1029
    %v1038 = vxor.u32 %v1034, 2147483648
    %v1039 = vmul.f32 %v1038, 1.442695
    %v1040 = vpow.pop %v1039
    %v1041 = vadd.f32 %v1040, 1.0
    %v1042 = vrcp.pop %v1041
    %v1043 = vmul.f32 1.0, %v1042
    %v1044 = vxor.u32 %v1035, 2147483648
    %v1045 = vmul.f32 %v1044, 1.442695
    %v1046 = vpow.pop %v1045
    %v1047 = vadd.f32 %v1046, 1.0
    %v1048 = vrcp.pop %v1047
    %v1049 = vmul.f32 1.0, %v1048
    %v1050 = vtanh.pop %v1036
    %v1051 = vxor.u32 %v1037, 2147483648
    %v1052 = vmul.f32 %v1051, 1.442695
    %v1053 = vpow.pop %v1052
    %v1054 = vadd.f32 %v1053, 1.0
    %v1055 = vrcp.pop %v1054
    %v1056 = vmul.f32 1.0, %v1055
    %v1058 = vrot.slane %v873, 6
    %v1060 = vmul.f32 %v1049, %v1058
    %v1061 = vmul.f32 %v1043, %v1050
    %v1062 = vadd.f32 %v1060, %v1061
    %v1063 = vtanh.pop %v1062
    %v1064 = vmul.f32 %v1056, %v1063
    %1065 = vst [vmem:[#allocation2] sm:$0xc0] %v1064
    %v1067 = vrot.slane %v1064, 6
    %1069 = vmatprep.subr.mxu0 %v145
    %1070 = vmatpush1.msra.mxu0 %v144
    %1071 = vmatprep.subr.mxu0 %v141
    %1072 = vmatpush1.msra.mxu0 %v140
    %1073 = vmatprep.subr.mxu0 %v137
    %1074 = vmatpush1.msra.mxu0 %v136
    %1075 = vmatprep.subr.mxu0 %v133
    %1076 = vmatpush1.msra.mxu0 %v132
    %1077 = vmatprep.subr.mxu0 %v129
    %1078 = vmatpush1.msra.mxu0 %v128
    %1079 = vmatprep.subr.mxu0 %v125
    %1080 = vmatpush1.msra.mxu0 %v124
    %1081 = vmatprep.subr.mxu0 %v121
    %1082 = vmatpush1.msra.mxu0 %v120
    %1083 = vmatprep.subr.mxu0 %v117
    %1084 = vmatpush1.msra.mxu0 %v116
    %1085 = vmatprep.subr.mxu0 %v113
    %1086 = vmatpush1.msra.mxu0 %v112
    %1087 = vmatprep.subr.mxu0 %v109
    %1088 = vmatpush1.msra.mxu0 %v108
    %1089 = vmatprep.subr.mxu0 %v105
    %1090 = vmatpush1.msra.mxu0 %v104
    %1091 = vmatprep.subr.mxu0 %v101
    %1092 = vmatpush1.msra.mxu0 %v100
    %1093 = vmatprep.subr.mxu0 %v97
    %1094 = vmatpush1.msra.mxu0 %v96
    %1095 = vmatprep.subr.mxu0 %v93
    %1096 = vmatpush1.msra.mxu0 %v92
    %1097 = vmatprep.subr.mxu0 %v89
    %1098 = vmatpush1.msra.mxu0 %v88
    %1099 = vmatprep.subr.mxu0 %v85
    %1100 = vmatpush1.msra.mxu0 %v84
    %1101 = vmatprep.subr.mxu0 0.0
    %1102 = vmatpush2.msra.mxu0 0.0
    %1103 = vmatprep.subr.mxu0 0.0
    %1104 = vmatpush2.msra.mxu0 0.0
    %1105 = vmatprep.subr.mxu0 0.0
    %1106 = vmatpush2.msra.mxu0 0.0
    %1107 = vmatprep.subr.mxu0 0.0
    %1108 = vmatpush2.msra.mxu0 0.0
    %1109 = vmatprep.subr.mxu0 0.0
    %1110 = vmatpush2.msra.mxu0 0.0
    %1111 = vmatprep.subr.mxu0 0.0
    %1112 = vmatpush2.msra.mxu0 0.0
    %1113 = vmatprep.subr.mxu0 0.0
    %1114 = vmatpush2.msra.mxu0 0.0
    %1115 = vmatprep.subr.mxu0 0.0
    %1116 = vmatpush2.msra.mxu0 0.0
    %1117 = vmatprep.subr.mxu0 0.0
    %1118 = vmatpush2.msra.mxu0 0.0
    %1119 = vmatprep.subr.mxu0 0.0
    %1120 = vmatpush2.msra.mxu0 0.0
    %1121 = vmatprep.subr.mxu0 0.0
    %1122 = vmatpush2.msra.mxu0 0.0
    %1123 = vmatprep.subr.mxu0 0.0
    %1124 = vmatpush2.msra.mxu0 0.0
    %1125 = vmatprep.subr.mxu0 0.0
    %1126 = vmatpush2.msra.mxu0 0.0
    %1127 = vmatprep.subr.mxu0 0.0
    %1128 = vmatpush2.msra.mxu0 0.0
    %1129 = vmatprep.subr.mxu0 0.0
    %1130 = vmatpush2.msra.mxu0 0.0
    %1131 = vmatprep.subr.mxu0 0.0
    %1132 = vmatpush2.msra.mxu0 0.0
    %1133 = vmatprep.mubr.f32.mxu0 0.0
    %1134 = vmatmul.mubr.f32.gmra.mxu0 %v1067
    %v1135 = vpop.f32.mrf.mxu0
    %v1136 = vadd.f32 0.0, %v1135
    %v1137 = vpop.f32.mrf.mxu0
    %v1138 = vadd.f32 0.0, %v1137
    %1139 = vdwg.mxu0
    %1140 = vmatprep.subr.mxu0 %v147
    %1141 = vmatpush1.msra.mxu0 %v146
    %1142 = vmatprep.subr.mxu0 %v143
    %1143 = vmatpush1.msra.mxu0 %v142
    %1144 = vmatprep.subr.mxu0 %v139
    %1145 = vmatpush1.msra.mxu0 %v138
    %1146 = vmatprep.subr.mxu0 %v135
    %1147 = vmatpush1.msra.mxu0 %v134
    %1148 = vmatprep.subr.mxu0 %v131
    %1149 = vmatpush1.msra.mxu0 %v130
    %1150 = vmatprep.subr.mxu0 %v127
    %1151 = vmatpush1.msra.mxu0 %v126
    %1152 = vmatprep.subr.mxu0 %v123
    %1153 = vmatpush1.msra.mxu0 %v122
    %1154 = vmatprep.subr.mxu0 %v119
    %1155 = vmatpush1.msra.mxu0 %v118
    %1156 = vmatprep.subr.mxu0 %v115
    %1157 = vmatpush1.msra.mxu0 %v114
    %1158 = vmatprep.subr.mxu0 %v111
    %1159 = vmatpush1.msra.mxu0 %v110
    %1160 = vmatprep.subr.mxu0 %v107
    %1161 = vmatpush1.msra.mxu0 %v106
    %1162 = vmatprep.subr.mxu0 %v103
    %1163 = vmatpush1.msra.mxu0 %v102
    %1164 = vmatprep.subr.mxu0 %v99
    %1165 = vmatpush1.msra.mxu0 %v98
    %1166 = vmatprep.subr.mxu0 %v95
    %1167 = vmatpush1.msra.mxu0 %v94
    %1168 = vmatprep.subr.mxu0 %v91
    %1169 = vmatpush1.msra.mxu0 %v90
    %1170 = vmatprep.subr.mxu0 %v87
    %1171 = vmatpush1.msra.mxu0 %v86
    %1172 = vmatprep.subr.mxu0 0.0
    %1173 = vmatpush2.msra.mxu0 0.0
    %1174 = vmatprep.subr.mxu0 0.0
    %1175 = vmatpush2.msra.mxu0 0.0
    %1176 = vmatprep.subr.mxu0 0.0
    %1177 = vmatpush2.msra.mxu0 0.0
    %1178 = vmatprep.subr.mxu0 0.0
    %1179 = vmatpush2.msra.mxu0 0.0
    %1180 = vmatprep.subr.mxu0 0.0
    %1181 = vmatpush2.msra.mxu0 0.0
    %1182 = vmatprep.subr.mxu0 0.0
    %1183 = vmatpush2.msra.mxu0 0.0
    %1184 = vmatprep.subr.mxu0 0.0
    %1185 = vmatpush2.msra.mxu0 0.0
    %1186 = vmatprep.subr.mxu0 0.0
    %1187 = vmatpush2.msra.mxu0 0.0
    %1188 = vmatprep.subr.mxu0 0.0
    %1189 = vmatpush2.msra.mxu0 0.0
    %1190 = vmatprep.subr.mxu0 0.0
    %1191 = vmatpush2.msra.mxu0 0.0
    %1192 = vmatprep.subr.mxu0 0.0
    %1193 = vmatpush2.msra.mxu0 0.0
    %1194 = vmatprep.subr.mxu0 0.0
    %1195 = vmatpush2.msra.mxu0 0.0
    %1196 = vmatprep.subr.mxu0 0.0
    %1197 = vmatpush2.msra.mxu0 0.0
    %1198 = vmatprep.subr.mxu0 0.0
    %1199 = vmatpush2.msra.mxu0 0.0
    %1200 = vmatprep.subr.mxu0 0.0
    %1201 = vmatpush2.msra.mxu0 0.0
    %1202 = vmatprep.subr.mxu0 0.0
    %1203 = vmatpush2.msra.mxu0 0.0
    %1204 = vmatprep.mubr.f32.mxu0 0.0
    %1205 = vmatmul.mubr.f32.gmra.mxu0 %v1067
    %v1206 = vpop.f32.mrf.mxu0
    %v1207 = vadd.f32 0.0, %v1206
    %v1208 = vpop.f32.mrf.mxu0
    %v1209 = vadd.f32 0.0, %v1208
    %1210 = vdwg.mxu0
    %v1211 = vadd.f32 %v250, %v1136
    %v1212 = vadd.f32 %v252, %v1138
    %v1213 = vadd.f32 %v327, %v1207
    %v1214 = vadd.f32 %v329, %v1209
    %v1215 = vxor.u32 %v1211, 2147483648
    %v1216 = vmul.f32 %v1215, 1.442695
    %v1217 = vpow.pop %v1216
    %v1218 = vadd.f32 %v1217, 1.0
    %v1219 = vrcp.pop %v1218
    %v1220 = vmul.f32 1.0, %v1219
    %v1221 = vxor.u32 %v1212, 2147483648
    %v1222 = vmul.f32 %v1221, 1.442695
    %v1223 = vpow.pop %v1222
    %v1224 = vadd.f32 %v1223, 1.0
    %v1225 = vrcp.pop %v1224
    %v1226 = vmul.f32 1.0, %v1225
    %v1227 = vtanh.pop %v1213
    %v1228 = vxor.u32 %v1214, 2147483648
    %v1229 = vmul.f32 %v1228, 1.442695
    %v1230 = vpow.pop %v1229
    %v1231 = vadd.f32 %v1230, 1.0
    %v1232 = vrcp.pop %v1231
    %v1233 = vmul.f32 1.0, %v1232
    %v1235 = vrot.slane %v1062, 6
    %v1237 = vmul.f32 %v1226, %v1235
    %v1238 = vmul.f32 %v1220, %v1227
    %v1239 = vadd.f32 %v1237, %v1238
    %v1240 = vtanh.pop %v1239
    %v1241 = vmul.f32 %v1233, %v1240
    %1242 = vst [vmem:[#allocation2 + $0x8] sm:$0x3] %v1241
    %1243 = vmatprep.subr.mxu0 %v145
    %1244 = vmatpush1.msra.mxu0 %v144
    %1245 = vmatprep.subr.mxu0 %v141
    %1246 = vmatpush1.msra.mxu0 %v140
    %1247 = vmatprep.subr.mxu0 %v137
    %1248 = vmatpush1.msra.mxu0 %v136
    %1249 = vmatprep.subr.mxu0 %v133
    %1250 = vmatpush1.msra.mxu0 %v132
    %1251 = vmatprep.subr.mxu0 %v129
    %1252 = vmatpush1.msra.mxu0 %v128
    %1253 = vmatprep.subr.mxu0 %v125
    %1254 = vmatpush1.msra.mxu0 %v124
    %1255 = vmatprep.subr.mxu0 %v121
    %1256 = vmatpush1.msra.mxu0 %v120
    %1257 = vmatprep.subr.mxu0 %v117
    %1258 = vmatpush1.msra.mxu0 %v116
    %1259 = vmatprep.subr.mxu0 %v113
    %1260 = vmatpush1.msra.mxu0 %v112
    %1261 = vmatprep.subr.mxu0 %v109
    %1262 = vmatpush1.msra.mxu0 %v108
    %1263 = vmatprep.subr.mxu0 %v105
    %1264 = vmatpush1.msra.mxu0 %v104
    %1265 = vmatprep.subr.mxu0 %v101
    %1266 = vmatpush1.msra.mxu0 %v100
    %1267 = vmatprep.subr.mxu0 %v97
    %1268 = vmatpush1.msra.mxu0 %v96
    %1269 = vmatprep.subr.mxu0 %v93
    %1270 = vmatpush1.msra.mxu0 %v92
    %1271 = vmatprep.subr.mxu0 %v89
    %1272 = vmatpush1.msra.mxu0 %v88
    %1273 = vmatprep.subr.mxu0 %v85
    %1274 = vmatpush1.msra.mxu0 %v84
    %1275 = vmatprep.subr.mxu0 0.0
    %1276 = vmatpush2.msra.mxu0 0.0
    %1277 = vmatprep.subr.mxu0 0.0
    %1278 = vmatpush2.msra.mxu0 0.0
    %1279 = vmatprep.subr.mxu0 0.0
    %1280 = vmatpush2.msra.mxu0 0.0
    %1281 = vmatprep.subr.mxu0 0.0
    %1282 = vmatpush2.msra.mxu0 0.0
    %1283 = vmatprep.subr.mxu0 0.0
    %1284 = vmatpush2.msra.mxu0 0.0
    %1285 = vmatprep.subr.mxu0 0.0
    %1286 = vmatpush2.msra.mxu0 0.0
    %1287 = vmatprep.subr.mxu0 0.0
    %1288 = vmatpush2.msra.mxu0 0.0
    %1289 = vmatprep.subr.mxu0 0.0
    %1290 = vmatpush2.msra.mxu0 0.0
    %1291 = vmatprep.subr.mxu0 0.0
    %1292 = vmatpush2.msra.mxu0 0.0
    %1293 = vmatprep.subr.mxu0 0.0
    %1294 = vmatpush2.msra.mxu0 0.0
    %1295 = vmatprep.subr.mxu0 0.0
    %1296 = vmatpush2.msra.mxu0 0.0
    %1297 = vmatprep.subr.mxu0 0.0
    %1298 = vmatpush2.msra.mxu0 0.0
    %1299 = vmatprep.subr.mxu0 0.0
    %1300 = vmatpush2.msra.mxu0 0.0
    %1301 = vmatprep.subr.mxu0 0.0
    %1302 = vmatpush2.msra.mxu0 0.0
    %1303 = vmatprep.subr.mxu0 0.0
    %1304 = vmatpush2.msra.mxu0 0.0
    %1305 = vmatprep.subr.mxu0 0.0
    %1306 = vmatpush2.msra.mxu0 0.0
    %1307 = vmatprep.mubr.f32.mxu0 0.0
    %1308 = vmatmul.mubr.f32.gmra.mxu0 %v1241
    %v1309 = vpop.f32.mrf.mxu0
    %v1310 = vadd.f32 0.0, %v1309
    %v1311 = vpop.f32.mrf.mxu0
    %v1312 = vadd.f32 0.0, %v1311
    %1313 = vdwg.mxu0
    %1314 = vmatprep.subr.mxu0 %v147
    %1315 = vmatpush1.msra.mxu0 %v146
    %1316 = vmatprep.subr.mxu0 %v143
    %1317 = vmatpush1.msra.mxu0 %v142
    %1318 = vmatprep.subr.mxu0 %v139
    %1319 = vmatpush1.msra.mxu0 %v138
    %1320 = vmatprep.subr.mxu0 %v135
    %1321 = vmatpush1.msra.mxu0 %v134
    %1322 = vmatprep.subr.mxu0 %v131
    %1323 = vmatpush1.msra.mxu0 %v130
    %1324 = vmatprep.subr.mxu0 %v127
    %1325 = vmatpush1.msra.mxu0 %v126
    %1326 = vmatprep.subr.mxu0 %v123
    %1327 = vmatpush1.msra.mxu0 %v122
    %1328 = vmatprep.subr.mxu0 %v119
    %1329 = vmatpush1.msra.mxu0 %v118
    %1330 = vmatprep.subr.mxu0 %v115
    %1331 = vmatpush1.msra.mxu0 %v114
    %1332 = vmatprep.subr.mxu0 %v111
    %1333 = vmatpush1.msra.mxu0 %v110
    %1334 = vmatprep.subr.mxu0 %v107
    %1335 = vmatpush1.msra.mxu0 %v106
    %1336 = vmatprep.subr.mxu0 %v103
    %1337 = vmatpush1.msra.mxu0 %v102
    %1338 = vmatprep.subr.mxu0 %v99
    %1339 = vmatpush1.msra.mxu0 %v98
    %1340 = vmatprep.subr.mxu0 %v95
    %1341 = vmatpush1.msra.mxu0 %v94
    %1342 = vmatprep.subr.mxu0 %v91
    %1343 = vmatpush1.msra.mxu0 %v90
    %1344 = vmatprep.subr.mxu0 %v87
    %1345 = vmatpush1.msra.mxu0 %v86
    %1346 = vmatprep.subr.mxu0 0.0
    %1347 = vmatpush2.msra.mxu0 0.0
    %1348 = vmatprep.subr.mxu0 0.0
    %1349 = vmatpush2.msra.mxu0 0.0
    %1350 = vmatprep.subr.mxu0 0.0
    %1351 = vmatpush2.msra.mxu0 0.0
    %1352 = vmatprep.subr.mxu0 0.0
    %1353 = vmatpush2.msra.mxu0 0.0
    %1354 = vmatprep.subr.mxu0 0.0
    %1355 = vmatpush2.msra.mxu0 0.0
    %1356 = vmatprep.subr.mxu0 0.0
    %1357 = vmatpush2.msra.mxu0 0.0
    %1358 = vmatprep.subr.mxu0 0.0
    %1359 = vmatpush2.msra.mxu0 0.0
    %1360 = vmatprep.subr.mxu0 0.0
    %1361 = vmatpush2.msra.mxu0 0.0
    %1362 = vmatprep.subr.mxu0 0.0
    %1363 = vmatpush2.msra.mxu0 0.0
    %1364 = vmatprep.subr.mxu0 0.0
    %1365 = vmatpush2.msra.mxu0 0.0
    %1366 = vmatprep.subr.mxu0 0.0
    %1367 = vmatpush2.msra.mxu0 0.0
    %1368 = vmatprep.subr.mxu0 0.0
    %1369 = vmatpush2.msra.mxu0 0.0
    %1370 = vmatprep.subr.mxu0 0.0
    %1371 = vmatpush2.msra.mxu0 0.0
    %1372 = vmatprep.subr.mxu0 0.0
    %1373 = vmatpush2.msra.mxu0 0.0
    %1374 = vmatprep.subr.mxu0 0.0
    %1375 = vmatpush2.msra.mxu0 0.0
    %1376 = vmatprep.subr.mxu0 0.0
    %1377 = vmatpush2.msra.mxu0 0.0
    %1378 = vmatprep.mubr.f32.mxu0 0.0
    %1379 = vmatmul.mubr.f32.gmra.mxu0 %v1241
    %v1380 = vpop.f32.mrf.mxu0
    %v1381 = vadd.f32 0.0, %v1380
    %v1382 = vpop.f32.mrf.mxu0
    %v1383 = vadd.f32 0.0, %v1382
    %1384 = vdwg.mxu0
    %v1389 = vrot.slane %v1310, 6
    %v1390 = vrot.slane %v1312, 6
    %v1391 = vrot.slane %v1381, 6
    %v1392 = vrot.slane %v1383, 6
    %v1397 = vadd.f32 %v250, %v1389
    %v1398 = vadd.f32 %v252, %v1390
    %v1399 = vadd.f32 %v327, %v1391
    %v1400 = vadd.f32 %v329, %v1392
    %v1401 = vxor.u32 %v1397, 2147483648
    %v1402 = vmul.f32 %v1401, 1.442695
    %v1403 = vpow.pop %v1402
    %v1404 = vadd.f32 %v1403, 1.0
    %v1405 = vrcp.pop %v1404
    %v1406 = vmul.f32 1.0, %v1405
    %v1407 = vxor.u32 %v1398, 2147483648
    %v1408 = vmul.f32 %v1407, 1.442695
    %v1409 = vpow.pop %v1408
    %v1410 = vadd.f32 %v1409, 1.0
    %v1411 = vrcp.pop %v1410
    %v1412 = vmul.f32 1.0, %v1411
    %v1413 = vtanh.pop %v1399
    %v1414 = vxor.u32 %v1400, 2147483648
    %v1415 = vmul.f32 %v1414, 1.442695
    %v1416 = vpow.pop %v1415
    %v1417 = vadd.f32 %v1416, 1.0
    %v1418 = vrcp.pop %v1417
    %v1419 = vmul.f32 1.0, %v1418
    %v1421 = vrot.slane %v1239, 6
    %v1423 = vmul.f32 %v1412, %v1421
    %v1424 = vmul.f32 %v1406, %v1413
    %v1425 = vadd.f32 %v1423, %v1424
    %v1426 = vtanh.pop %v1425
    %v1427 = vmul.f32 %v1419, %v1426
    %1428 = vst [vmem:[#allocation2 + $0x8] sm:$0xc] %v1427
    %v1430 = vrot.slane %v1427, 2
    %1432 = vmatprep.subr.mxu0 %v145
    %1433 = vmatpush1.msra.mxu0 %v144
    %1434 = vmatprep.subr.mxu0 %v141
    %1435 = vmatpush1.msra.mxu0 %v140
    %1436 = vmatprep.subr.mxu0 %v137
    %1437 = vmatpush1.msra.mxu0 %v136
    %1438 = vmatprep.subr.mxu0 %v133
    %1439 = vmatpush1.msra.mxu0 %v132
    %1440 = vmatprep.subr.mxu0 %v129
    %1441 = vmatpush1.msra.mxu0 %v128
    %1442 = vmatprep.subr.mxu0 %v125
    %1443 = vmatpush1.msra.mxu0 %v124
    %1444 = vmatprep.subr.mxu0 %v121
    %1445 = vmatpush1.msra.mxu0 %v120
    %1446 = vmatprep.subr.mxu0 %v117
    %1447 = vmatpush1.msra.mxu0 %v116
    %1448 = vmatprep.subr.mxu0 %v113
    %1449 = vmatpush1.msra.mxu0 %v112
    %1450 = vmatprep.subr.mxu0 %v109
    %1451 = vmatpush1.msra.mxu0 %v108
    %1452 = vmatprep.subr.mxu0 %v105
    %1453 = vmatpush1.msra.mxu0 %v104
    %1454 = vmatprep.subr.mxu0 %v101
    %1455 = vmatpush1.msra.mxu0 %v100
    %1456 = vmatprep.subr.mxu0 %v97
    %1457 = vmatpush1.msra.mxu0 %v96
    %1458 = vmatprep.subr.mxu0 %v93
    %1459 = vmatpush1.msra.mxu0 %v92
    %1460 = vmatprep.subr.mxu0 %v89
    %1461 = vmatpush1.msra.mxu0 %v88
    %1462 = vmatprep.subr.mxu0 %v85
    %1463 = vmatpush1.msra.mxu0 %v84
    %1464 = vmatprep.subr.mxu0 0.0
    %1465 = vmatpush2.msra.mxu0 0.0
    %1466 = vmatprep.subr.mxu0 0.0
    %1467 = vmatpush2.msra.mxu0 0.0
    %1468 = vmatprep.subr.mxu0 0.0
    %1469 = vmatpush2.msra.mxu0 0.0
    %1470 = vmatprep.subr.mxu0 0.0
    %1471 = vmatpush2.msra.mxu0 0.0
    %1472 = vmatprep.subr.mxu0 0.0
    %1473 = vmatpush2.msra.mxu0 0.0
    %1474 = vmatprep.subr.mxu0 0.0
    %1475 = vmatpush2.msra.mxu0 0.0
    %1476 = vmatprep.subr.mxu0 0.0
    %1477 = vmatpush2.msra.mxu0 0.0
    %1478 = vmatprep.subr.mxu0 0.0
    %1479 = vmatpush2.msra.mxu0 0.0
    %1480 = vmatprep.subr.mxu0 0.0
    %1481 = vmatpush2.msra.mxu0 0.0
    %1482 = vmatprep.subr.mxu0 0.0
    %1483 = vmatpush2.msra.mxu0 0.0
    %1484 = vmatprep.subr.mxu0 0.0
    %1485 = vmatpush2.msra.mxu0 0.0
    %1486 = vmatprep.subr.mxu0 0.0
    %1487 = vmatpush2.msra.mxu0 0.0
    %1488 = vmatprep.subr.mxu0 0.0
    %1489 = vmatpush2.msra.mxu0 0.0
    %1490 = vmatprep.subr.mxu0 0.0
    %1491 = vmatpush2.msra.mxu0 0.0
    %1492 = vmatprep.subr.mxu0 0.0
    %1493 = vmatpush2.msra.mxu0 0.0
    %1494 = vmatprep.subr.mxu0 0.0
    %1495 = vmatpush2.msra.mxu0 0.0
    %1496 = vmatprep.mubr.f32.mxu0 0.0
    %1497 = vmatmul.mubr.f32.gmra.mxu0 %v1430
    %v1498 = vpop.f32.mrf.mxu0
    %v1499 = vadd.f32 0.0, %v1498
    %v1500 = vpop.f32.mrf.mxu0
    %v1501 = vadd.f32 0.0, %v1500
    %1502 = vdwg.mxu0
    %1503 = vmatprep.subr.mxu0 %v147
    %1504 = vmatpush1.msra.mxu0 %v146
    %1505 = vmatprep.subr.mxu0 %v143
    %1506 = vmatpush1.msra.mxu0 %v142
    %1507 = vmatprep.subr.mxu0 %v139
    %1508 = vmatpush1.msra.mxu0 %v138
    %1509 = vmatprep.subr.mxu0 %v135
    %1510 = vmatpush1.msra.mxu0 %v134
    %1511 = vmatprep.subr.mxu0 %v131
    %1512 = vmatpush1.msra.mxu0 %v130
    %1513 = vmatprep.subr.mxu0 %v127
    %1514 = vmatpush1.msra.mxu0 %v126
    %1515 = vmatprep.subr.mxu0 %v123
    %1516 = vmatpush1.msra.mxu0 %v122
    %1517 = vmatprep.subr.mxu0 %v119
    %1518 = vmatpush1.msra.mxu0 %v118
    %1519 = vmatprep.subr.mxu0 %v115
    %1520 = vmatpush1.msra.mxu0 %v114
    %1521 = vmatprep.subr.mxu0 %v111
    %1522 = vmatpush1.msra.mxu0 %v110
    %1523 = vmatprep.subr.mxu0 %v107
    %1524 = vmatpush1.msra.mxu0 %v106
    %1525 = vmatprep.subr.mxu0 %v103
    %1526 = vmatpush1.msra.mxu0 %v102
    %1527 = vmatprep.subr.mxu0 %v99
    %1528 = vmatpush1.msra.mxu0 %v98
    %1529 = vmatprep.subr.mxu0 %v95
    %1530 = vmatpush1.msra.mxu0 %v94
    %1531 = vmatprep.subr.mxu0 %v91
    %1532 = vmatpush1.msra.mxu0 %v90
    %1533 = vmatprep.subr.mxu0 %v87
    %1534 = vmatpush1.msra.mxu0 %v86
    %1535 = vmatprep.subr.mxu0 0.0
    %1536 = vmatpush2.msra.mxu0 0.0
    %1537 = vmatprep.subr.mxu0 0.0
    %1538 = vmatpush2.msra.mxu0 0.0
    %1539 = vmatprep.subr.mxu0 0.0
    %1540 = vmatpush2.msra.mxu0 0.0
    %1541 = vmatprep.subr.mxu0 0.0
    %1542 = vmatpush2.msra.mxu0 0.0
    %1543 = vmatprep.subr.mxu0 0.0
    %1544 = vmatpush2.msra.mxu0 0.0
    %1545 = vmatprep.subr.mxu0 0.0
    %1546 = vmatpush2.msra.mxu0 0.0
    %1547 = vmatprep.subr.mxu0 0.0
    %1548 = vmatpush2.msra.mxu0 0.0
    %1549 = vmatprep.subr.mxu0 0.0
    %1550 = vmatpush2.msra.mxu0 0.0
    %1551 = vmatprep.subr.mxu0 0.0
    %1552 = vmatpush2.msra.mxu0 0.0
    %1553 = vmatprep.subr.mxu0 0.0
    %1554 = vmatpush2.msra.mxu0 0.0
    %1555 = vmatprep.subr.mxu0 0.0
    %1556 = vmatpush2.msra.mxu0 0.0
    %1557 = vmatprep.subr.mxu0 0.0
    %1558 = vmatpush2.msra.mxu0 0.0
    %1559 = vmatprep.subr.mxu0 0.0
    %1560 = vmatpush2.msra.mxu0 0.0
    %1561 = vmatprep.subr.mxu0 0.0
    %1562 = vmatpush2.msra.mxu0 0.0
    %1563 = vmatprep.subr.mxu0 0.0
    %1564 = vmatpush2.msra.mxu0 0.0
    %1565 = vmatprep.subr.mxu0 0.0
    %1566 = vmatpush2.msra.mxu0 0.0
    %1567 = vmatprep.mubr.f32.mxu0 0.0
    %1568 = vmatmul.mubr.f32.gmra.mxu0 %v1430
    %v1569 = vpop.f32.mrf.mxu0
    %v1570 = vadd.f32 0.0, %v1569
    %v1571 = vpop.f32.mrf.mxu0
    %v1572 = vadd.f32 0.0, %v1571
    %1573 = vdwg.mxu0
    %v1578 = vrot.slane %v1499, 4
    %v1579 = vrot.slane %v1501, 4
    %v1580 = vrot.slane %v1570, 4
    %v1581 = vrot.slane %v1572, 4
    %v1586 = vadd.f32 %v250, %v1578
    %v1587 = vadd.f32 %v252, %v1579
    %v1588 = vadd.f32 %v327, %v1580
    %v1589 = vadd.f32 %v329, %v1581
    %v1590 = vxor.u32 %v1586, 2147483648
    %v1591 = vmul.f32 %v1590, 1.442695
    %v1592 = vpow.pop %v1591
    %v1593 = vadd.f32 %v1592, 1.0
    %v1594 = vrcp.pop %v1593
    %v1595 = vmul.f32 1.0, %v1594
    %v1596 = vxor.u32 %v1587, 2147483648
    %v1597 = vmul.f32 %v1596, 1.442695
    %v1598 = vpow.pop %v1597
    %v1599 = vadd.f32 %v1598, 1.0
    %v1600 = vrcp.pop %v1599
    %v1601 = vmul.f32 1.0, %v1600
    %v1602 = vtanh.pop %v1588
    %v1603 = vxor.u32 %v1589, 2147483648
    %v1604 = vmul.f32 %v1603, 1.442695
    %v1605 = vpow.pop %v1604
    %v1606 = vadd.f32 %v1605, 1.0
    %v1607 = vrcp.pop %v1606
    %v1608 = vmul.f32 1.0, %v1607
    %v1610 = vrot.slane %v1425, 6
    %v1612 = vmul.f32 %v1601, %v1610
    %v1613 = vmul.f32 %v1595, %v1602
    %v1614 = vadd.f32 %v1612, %v1613
    %v1615 = vtanh.pop %v1614
    %v1616 = vmul.f32 %v1608, %v1615
    %1617 = vst [vmem:[#allocation2 + $0x8] sm:$0x30] %v1616
    %v1619 = vrot.slane %v1616, 4
    %1621 = vmatprep.subr.mxu0 %v145
    %1622 = vmatpush1.msra.mxu0 %v144
    %1623 = vmatprep.subr.mxu0 %v141
    %1624 = vmatpush1.msra.mxu0 %v140
    %1625 = vmatprep.subr.mxu0 %v137
    %1626 = vmatpush1.msra.mxu0 %v136
    %1627 = vmatprep.subr.mxu0 %v133
    %1628 = vmatpush1.msra.mxu0 %v132
    %1629 = vmatprep.subr.mxu0 %v129
    %1630 = vmatpush1.msra.mxu0 %v128
    %1631 = vmatprep.subr.mxu0 %v125
    %1632 = vmatpush1.msra.mxu0 %v124
    %1633 = vmatprep.subr.mxu0 %v121
    %1634 = vmatpush1.msra.mxu0 %v120
    %1635 = vmatprep.subr.mxu0 %v117
    %1636 = vmatpush1.msra.mxu0 %v116
    %1637 = vmatprep.subr.mxu0 %v113
    %1638 = vmatpush1.msra.mxu0 %v112
    %1639 = vmatprep.subr.mxu0 %v109
    %1640 = vmatpush1.msra.mxu0 %v108
    %1641 = vmatprep.subr.mxu0 %v105
    %1642 = vmatpush1.msra.mxu0 %v104
    %1643 = vmatprep.subr.mxu0 %v101
    %1644 = vmatpush1.msra.mxu0 %v100
    %1645 = vmatprep.subr.mxu0 %v97
    %1646 = vmatpush1.msra.mxu0 %v96
    %1647 = vmatprep.subr.mxu0 %v93
    %1648 = vmatpush1.msra.mxu0 %v92
    %1649 = vmatprep.subr.mxu0 %v89
    %1650 = vmatpush1.msra.mxu0 %v88
    %1651 = vmatprep.subr.mxu0 %v85
    %1652 = vmatpush1.msra.mxu0 %v84
    %1653 = vmatprep.subr.mxu0 0.0
    %1654 = vmatpush2.msra.mxu0 0.0
    %1655 = vmatprep.subr.mxu0 0.0
    %1656 = vmatpush2.msra.mxu0 0.0
    %1657 = vmatprep.subr.mxu0 0.0
    %1658 = vmatpush2.msra.mxu0 0.0
    %1659 = vmatprep.subr.mxu0 0.0
    %1660 = vmatpush2.msra.mxu0 0.0
    %1661 = vmatprep.subr.mxu0 0.0
    %1662 = vmatpush2.msra.mxu0 0.0
    %1663 = vmatprep.subr.mxu0 0.0
    %1664 = vmatpush2.msra.mxu0 0.0
    %1665 = vmatprep.subr.mxu0 0.0
    %1666 = vmatpush2.msra.mxu0 0.0
    %1667 = vmatprep.subr.mxu0 0.0
    %1668 = vmatpush2.msra.mxu0 0.0
    %1669 = vmatprep.subr.mxu0 0.0
    %1670 = vmatpush2.msra.mxu0 0.0
    %1671 = vmatprep.subr.mxu0 0.0
    %1672 = vmatpush2.msra.mxu0 0.0
    %1673 = vmatprep.subr.mxu0 0.0
    %1674 = vmatpush2.msra.mxu0 0.0
    %1675 = vmatprep.subr.mxu0 0.0
    %1676 = vmatpush2.msra.mxu0 0.0
    %1677 = vmatprep.subr.mxu0 0.0
    %1678 = vmatpush2.msra.mxu0 0.0
    %1679 = vmatprep.subr.mxu0 0.0
    %1680 = vmatpush2.msra.mxu0 0.0
    %1681 = vmatprep.subr.mxu0 0.0
    %1682 = vmatpush2.msra.mxu0 0.0
    %1683 = vmatprep.subr.mxu0 0.0
    %1684 = vmatpush2.msra.mxu0 0.0
    %1685 = vmatprep.mubr.f32.mxu0 0.0
    %1686 = vmatmul.mubr.f32.gmra.mxu0 %v1619
    %v1687 = vpop.f32.mrf.mxu0
    %v1688 = vadd.f32 0.0, %v1687
    %v1689 = vpop.f32.mrf.mxu0
    %v1690 = vadd.f32 0.0, %v1689
    %1691 = vdwg.mxu0
    %1692 = vmatprep.subr.mxu0 %v147
    %1693 = vmatpush1.msra.mxu0 %v146
    %1694 = vmatprep.subr.mxu0 %v143
    %1695 = vmatpush1.msra.mxu0 %v142
    %1696 = vmatprep.subr.mxu0 %v139
    %1697 = vmatpush1.msra.mxu0 %v138
    %1698 = vmatprep.subr.mxu0 %v135
    %1699 = vmatpush1.msra.mxu0 %v134
    %1700 = vmatprep.subr.mxu0 %v131
    %1701 = vmatpush1.msra.mxu0 %v130
    %1702 = vmatprep.subr.mxu0 %v127
    %1703 = vmatpush1.msra.mxu0 %v126
    %1704 = vmatprep.subr.mxu0 %v123
    %1705 = vmatpush1.msra.mxu0 %v122
    %1706 = vmatprep.subr.mxu0 %v119
    %1707 = vmatpush1.msra.mxu0 %v118
    %1708 = vmatprep.subr.mxu0 %v115
    %1709 = vmatpush1.msra.mxu0 %v114
    %1710 = vmatprep.subr.mxu0 %v111
    %1711 = vmatpush1.msra.mxu0 %v110
    %1712 = vmatprep.subr.mxu0 %v107
    %1713 = vmatpush1.msra.mxu0 %v106
    %1714 = vmatprep.subr.mxu0 %v103
    %1715 = vmatpush1.msra.mxu0 %v102
    %1716 = vmatprep.subr.mxu0 %v99
    %1717 = vmatpush1.msra.mxu0 %v98
    %1718 = vmatprep.subr.mxu0 %v95
    %1719 = vmatpush1.msra.mxu0 %v94
    %1720 = vmatprep.subr.mxu0 %v91
    %1721 = vmatpush1.msra.mxu0 %v90
    %1722 = vmatprep.subr.mxu0 %v87
    %1723 = vmatpush1.msra.mxu0 %v86
    %1724 = vmatprep.subr.mxu0 0.0
    %1725 = vmatpush2.msra.mxu0 0.0
    %1726 = vmatprep.subr.mxu0 0.0
    %1727 = vmatpush2.msra.mxu0 0.0
    %1728 = vmatprep.subr.mxu0 0.0
    %1729 = vmatpush2.msra.mxu0 0.0
    %1730 = vmatprep.subr.mxu0 0.0
    %1731 = vmatpush2.msra.mxu0 0.0
    %1732 = vmatprep.subr.mxu0 0.0
    %1733 = vmatpush2.msra.mxu0 0.0
    %1734 = vmatprep.subr.mxu0 0.0
    %1735 = vmatpush2.msra.mxu0 0.0
    %1736 = vmatprep.subr.mxu0 0.0
    %1737 = vmatpush2.msra.mxu0 0.0
    %1738 = vmatprep.subr.mxu0 0.0
    %1739 = vmatpush2.msra.mxu0 0.0
    %1740 = vmatprep.subr.mxu0 0.0
    %1741 = vmatpush2.msra.mxu0 0.0
    %1742 = vmatprep.subr.mxu0 0.0
    %1743 = vmatpush2.msra.mxu0 0.0
    %1744 = vmatprep.subr.mxu0 0.0
    %1745 = vmatpush2.msra.mxu0 0.0
    %1746 = vmatprep.subr.mxu0 0.0
    %1747 = vmatpush2.msra.mxu0 0.0
    %1748 = vmatprep.subr.mxu0 0.0
    %1749 = vmatpush2.msra.mxu0 0.0
    %1750 = vmatprep.subr.mxu0 0.0
    %1751 = vmatpush2.msra.mxu0 0.0
    %1752 = vmatprep.subr.mxu0 0.0
    %1753 = vmatpush2.msra.mxu0 0.0
    %1754 = vmatprep.subr.mxu0 0.0
    %1755 = vmatpush2.msra.mxu0 0.0
    %1756 = vmatprep.mubr.f32.mxu0 0.0
    %1757 = vmatmul.mubr.f32.gmra.mxu0 %v1619
    %v1758 = vpop.f32.mrf.mxu0
    %v1759 = vadd.f32 0.0, %v1758
    %v1760 = vpop.f32.mrf.mxu0
    %v1761 = vadd.f32 0.0, %v1760
    %1762 = vdwg.mxu0
    %v1767 = vrot.slane %v1688, 2
    %v1768 = vrot.slane %v1690, 2
    %v1769 = vrot.slane %v1759, 2
    %v1770 = vrot.slane %v1761, 2
    %v1775 = vadd.f32 %v250, %v1767
    %v1776 = vadd.f32 %v252, %v1768
    %v1777 = vadd.f32 %v327, %v1769
    %v1778 = vadd.f32 %v329, %v1770
    %v1779 = vxor.u32 %v1775, 2147483648
    %v1780 = vmul.f32 %v1779, 1.442695
    %v1781 = vpow.pop %v1780
    %v1782 = vadd.f32 %v1781, 1.0
    %v1783 = vrcp.pop %v1782
    %v1784 = vmul.f32 1.0, %v1783
    %v1785 = vxor.u32 %v1776, 2147483648
    %v1786 = vmul.f32 %v1785, 1.442695
    %v1787 = vpow.pop %v1786
    %v1788 = vadd.f32 %v1787, 1.0
    %v1789 = vrcp.pop %v1788
    %v1790 = vmul.f32 1.0, %v1789
    %v1791 = vtanh.pop %v1777
    %v1792 = vxor.u32 %v1778, 2147483648
    %v1793 = vmul.f32 %v1792, 1.442695
    %v1794 = vpow.pop %v1793
    %v1795 = vadd.f32 %v1794, 1.0
    %v1796 = vrcp.pop %v1795
    %v1797 = vmul.f32 1.0, %v1796
    %v1799 = vrot.slane %v1614, 6
    %v1801 = vmul.f32 %v1790, %v1799
    %v1802 = vmul.f32 %v1784, %v1791
    %v1803 = vadd.f32 %v1801, %v1802
    %v1804 = vtanh.pop %v1803
    %v1805 = vmul.f32 %v1797, %v1804
    %1806 = vst [vmem:[#allocation2 + $0x8] sm:$0xc0] %v1805
    %v1807 = vld [vmem:[#allocation2] sm:$0xff]
    %v1808 = vld [vmem:[#allocation2 + $0x8] sm:$0xff]
    %v1809 = vld [vmem:[#allocation6] sm:$0xff]
    %v1810 = vld [vmem:[#allocation6 + $0x8] sm:$0xff]
    %v1811 = vld [vmem:[#allocation6 + $0x10] sm:$0xff]
    %v1812 = vld [vmem:[#allocation6 + $0x18] sm:$0xff]
    %v1813 = vld [vmem:[#allocation6 + $0x20] sm:$0xff]
    %v1814 = vld [vmem:[#allocation6 + $0x28] sm:$0xff]
    %v1815 = vld [vmem:[#allocation6 + $0x30] sm:$0xff]
    %v1816 = vld [vmem:[#allocation6 + $0x38] sm:$0xff]
    %v1817 = vld [vmem:[#allocation6 + $0x40] sm:$0xff]
    %v1818 = vld [vmem:[#allocation6 + $0x48] sm:$0xff]
    %v1819 = vld [vmem:[#allocation6 + $0x50] sm:$0xff]
    %v1820 = vld [vmem:[#allocation6 + $0x58] sm:$0xff]
    %v1821 = vld [vmem:[#allocation6 + $0x60] sm:$0xff]
    %v1822 = vld [vmem:[#allocation6 + $0x68] sm:$0xff]
    %v1823 = vld [vmem:[#allocation6 + $0x70] sm:$0xff]
    %v1824 = vld [vmem:[#allocation6 + $0x78] sm:$0xff]
    %v1825 = vld [vmem:[#allocation6 + $0x80] sm:$0xff]
    %v1826 = vld [vmem:[#allocation6 + $0x88] sm:$0xff]
    %v1827 = vld [vmem:[#allocation6 + $0x90] sm:$0xff]
    %v1828 = vld [vmem:[#allocation6 + $0x98] sm:$0xff]
    %v1829 = vld [vmem:[#allocation6 + $0xa0] sm:$0xff]
    %v1830 = vld [vmem:[#allocation6 + $0xa8] sm:$0xff]
    %v1831 = vld [vmem:[#allocation6 + $0xb0] sm:$0xff]
    %v1832 = vld [vmem:[#allocation6 + $0xb8] sm:$0xff]
    %v1833 = vld [vmem:[#allocation6 + $0xc0] sm:$0xff]
    %v1834 = vld [vmem:[#allocation6 + $0xc8] sm:$0xff]
    %v1835 = vld [vmem:[#allocation6 + $0xd0] sm:$0xff]
    %v1836 = vld [vmem:[#allocation6 + $0xd8] sm:$0xff]
    %v1837 = vld [vmem:[#allocation6 + $0xe0] sm:$0xff]
    %v1838 = vld [vmem:[#allocation6 + $0xe8] sm:$0xff]
    %v1839 = vld [vmem:[#allocation6 + $0xf0] sm:$0xff]
    %v1840 = vld [vmem:[#allocation6 + $0xf8] sm:$0xff]
    %v1841 = vld [vmem:[#allocation6 + $0x100] sm:$0xff]
    %v1842 = vld [vmem:[#allocation6 + $0x108] sm:$0xff]
    %v1843 = vld [vmem:[#allocation6 + $0x110] sm:$0xff]
    %v1844 = vld [vmem:[#allocation6 + $0x118] sm:$0xff]
    %v1845 = vld [vmem:[#allocation6 + $0x120] sm:$0xff]
    %v1846 = vld [vmem:[#allocation6 + $0x128] sm:$0xff]
    %v1847 = vld [vmem:[#allocation6 + $0x130] sm:$0xff]
    %v1848 = vld [vmem:[#allocation6 + $0x138] sm:$0xff]
    %v1849 = vld [vmem:[#allocation6 + $0x140] sm:$0xff]
    %v1850 = vld [vmem:[#allocation6 + $0x148] sm:$0xff]
    %v1851 = vld [vmem:[#allocation6 + $0x150] sm:$0xff]
    %v1852 = vld [vmem:[#allocation6 + $0x158] sm:$0xff]
    %v1853 = vld [vmem:[#allocation6 + $0x160] sm:$0xff]
    %v1854 = vld [vmem:[#allocation6 + $0x168] sm:$0xff]
    %v1855 = vld [vmem:[#allocation6 + $0x170] sm:$0xff]
    %v1856 = vld [vmem:[#allocation6 + $0x178] sm:$0xff]
    %v1857 = vld [vmem:[#allocation6 + $0x180] sm:$0xff]
    %v1858 = vld [vmem:[#allocation6 + $0x188] sm:$0xff]
    %v1859 = vld [vmem:[#allocation6 + $0x190] sm:$0xff]
    %v1860 = vld [vmem:[#allocation6 + $0x198] sm:$0xff]
    %v1861 = vld [vmem:[#allocation6 + $0x1a0] sm:$0xff]
    %v1862 = vld [vmem:[#allocation6 + $0x1a8] sm:$0xff]
    %v1863 = vld [vmem:[#allocation6 + $0x1b0] sm:$0xff]
    %v1864 = vld [vmem:[#allocation6 + $0x1b8] sm:$0xff]
    %v1865 = vld [vmem:[#allocation6 + $0x1c0] sm:$0xff]
    %v1866 = vld [vmem:[#allocation6 + $0x1c8] sm:$0xff]
    %v1867 = vld [vmem:[#allocation6 + $0x1d0] sm:$0xff]
    %v1868 = vld [vmem:[#allocation6 + $0x1d8] sm:$0xff]
    %v1869 = vld [vmem:[#allocation6 + $0x1e0] sm:$0xff]
    %v1870 = vld [vmem:[#allocation6 + $0x1e8] sm:$0xff]
    %v1871 = vld [vmem:[#allocation6 + $0x1f0] sm:$0xff]
    %v1872 = vld [vmem:[#allocation6 + $0x1f8] sm:$0xff]
    %v1873 = vld [vmem:[#allocation8] sm:$0xff]
    %v1874 = vld [vmem:[#allocation8 + $0x8] sm:$0xff]
    %v1875 = vld [vmem:[#allocation8 + $0x10] sm:$0xff]
    %v1876 = vld [vmem:[#allocation8 + $0x18] sm:$0xff]
    %v1877 = vld [vmem:[#allocation8 + $0x20] sm:$0xff]
    %v1878 = vld [vmem:[#allocation8 + $0x28] sm:$0xff]
    %v1879 = vld [vmem:[#allocation8 + $0x30] sm:$0xff]
    %v1880 = vld [vmem:[#allocation8 + $0x38] sm:$0xff]
    %v1881 = vld [vmem:[#allocation8 + $0x40] sm:$0xff]
    %v1882 = vld [vmem:[#allocation8 + $0x48] sm:$0xff]
    %v1883 = vld [vmem:[#allocation8 + $0x50] sm:$0xff]
    %v1884 = vld [vmem:[#allocation8 + $0x58] sm:$0xff]
    %v1885 = vld [vmem:[#allocation8 + $0x60] sm:$0xff]
    %v1886 = vld [vmem:[#allocation8 + $0x68] sm:$0xff]
    %v1887 = vld [vmem:[#allocation8 + $0x70] sm:$0xff]
    %v1888 = vld [vmem:[#allocation8 + $0x78] sm:$0xff]
    %v1889 = vld [vmem:[#allocation8 + $0x80] sm:$0xff]
    %v1890 = vld [vmem:[#allocation8 + $0x88] sm:$0xff]
    %v1891 = vld [vmem:[#allocation8 + $0x90] sm:$0xff]
    %v1892 = vld [vmem:[#allocation8 + $0x98] sm:$0xff]
    %v1893 = vld [vmem:[#allocation8 + $0xa0] sm:$0xff]
    %v1894 = vld [vmem:[#allocation8 + $0xa8] sm:$0xff]
    %v1895 = vld [vmem:[#allocation8 + $0xb0] sm:$0xff]
    %v1896 = vld [vmem:[#allocation8 + $0xb8] sm:$0xff]
    %v1897 = vld [vmem:[#allocation8 + $0xc0] sm:$0xff]
    %v1898 = vld [vmem:[#allocation8 + $0xc8] sm:$0xff]
    %v1899 = vld [vmem:[#allocation8 + $0xd0] sm:$0xff]
    %v1900 = vld [vmem:[#allocation8 + $0xd8] sm:$0xff]
    %v1901 = vld [vmem:[#allocation8 + $0xe0] sm:$0xff]
    %v1902 = vld [vmem:[#allocation8 + $0xe8] sm:$0xff]
    %v1903 = vld [vmem:[#allocation8 + $0xf0] sm:$0xff]
    %v1904 = vld [vmem:[#allocation8 + $0xf8] sm:$0xff]
    %v1905 = vld [vmem:[#allocation8 + $0x100] sm:$0xff]
    %v1906 = vld [vmem:[#allocation8 + $0x108] sm:$0xff]
    %v1907 = vld [vmem:[#allocation8 + $0x110] sm:$0xff]
    %v1908 = vld [vmem:[#allocation8 + $0x118] sm:$0xff]
    %v1909 = vld [vmem:[#allocation8 + $0x120] sm:$0xff]
    %v1910 = vld [vmem:[#allocation8 + $0x128] sm:$0xff]
    %v1911 = vld [vmem:[#allocation8 + $0x130] sm:$0xff]
    %v1912 = vld [vmem:[#allocation8 + $0x138] sm:$0xff]
    %v1913 = vld [vmem:[#allocation8 + $0x140] sm:$0xff]
    %v1914 = vld [vmem:[#allocation8 + $0x148] sm:$0xff]
    %v1915 = vld [vmem:[#allocation8 + $0x150] sm:$0xff]
    %v1916 = vld [vmem:[#allocation8 + $0x158] sm:$0xff]
    %v1917 = vld [vmem:[#allocation8 + $0x160] sm:$0xff]
    %v1918 = vld [vmem:[#allocation8 + $0x168] sm:$0xff]
    %v1919 = vld [vmem:[#allocation8 + $0x170] sm:$0xff]
    %v1920 = vld [vmem:[#allocation8 + $0x178] sm:$0xff]
    %v1921 = vld [vmem:[#allocation8 + $0x180] sm:$0xff]
    %v1922 = vld [vmem:[#allocation8 + $0x188] sm:$0xff]
    %v1923 = vld [vmem:[#allocation8 + $0x190] sm:$0xff]
    %v1924 = vld [vmem:[#allocation8 + $0x198] sm:$0xff]
    %v1925 = vld [vmem:[#allocation8 + $0x1a0] sm:$0xff]
    %v1926 = vld [vmem:[#allocation8 + $0x1a8] sm:$0xff]
    %v1927 = vld [vmem:[#allocation8 + $0x1b0] sm:$0xff]
    %v1928 = vld [vmem:[#allocation8 + $0x1b8] sm:$0xff]
    %v1929 = vld [vmem:[#allocation8 + $0x1c0] sm:$0xff]
    %v1930 = vld [vmem:[#allocation8 + $0x1c8] sm:$0xff]
    %v1931 = vld [vmem:[#allocation8 + $0x1d0] sm:$0xff]
    %v1932 = vld [vmem:[#allocation8 + $0x1d8] sm:$0xff]
    %v1933 = vld [vmem:[#allocation8 + $0x1e0] sm:$0xff]
    %v1934 = vld [vmem:[#allocation8 + $0x1e8] sm:$0xff]
    %v1935 = vld [vmem:[#allocation8 + $0x1f0] sm:$0xff]
    %v1936 = vld [vmem:[#allocation8 + $0x1f8] sm:$0xff]
    %v1937 = vld [vmem:[%s6] sm:$0xf]
    %v1939 = vlaneseq
    %v1940 = vshrl.u32 %v1939, 7
    %v1941 = vsub.s32 0, %v1940
    %v1942 = vrot.slane %v1937, %v1941
    %v1943 = vlaneseq
    %v1944 = vshrl.u32 %v1943, 7
    %v1945 = vsub.s32 1, %v1944
    %v1946 = vrot.slane %v1937, %v1945
    %v1947 = vlaneseq
    %v1948 = vshrl.u32 %v1947, 7
    %v1949 = vsub.s32 2, %v1948
    %v1950 = vrot.slane %v1937, %v1949
    %v1951 = vlaneseq
    %v1952 = vshrl.u32 %v1951, 7
    %v1953 = vsub.s32 3, %v1952
    %v1954 = vrot.slane %v1937, %v1953
    %1959 = vmatprep.subr.mxu0 %v1870
    %1960 = vmatpush1.msra.mxu0 %v1869
    %1961 = vmatprep.subr.mxu0 %v1866
    %1962 = vmatpush1.msra.mxu0 %v1865
    %1963 = vmatprep.subr.mxu0 %v1862
    %1964 = vmatpush1.msra.mxu0 %v1861
    %1965 = vmatprep.subr.mxu0 %v1858
    %1966 = vmatpush1.msra.mxu0 %v1857
    %1967 = vmatprep.subr.mxu0 %v1854
    %1968 = vmatpush1.msra.mxu0 %v1853
    %1969 = vmatprep.subr.mxu0 %v1850
    %1970 = vmatpush1.msra.mxu0 %v1849
    %1971 = vmatprep.subr.mxu0 %v1846
    %1972 = vmatpush1.msra.mxu0 %v1845
    %1973 = vmatprep.subr.mxu0 %v1842
    %1974 = vmatpush1.msra.mxu0 %v1841
    %1975 = vmatprep.subr.mxu0 %v1838
    %1976 = vmatpush1.msra.mxu0 %v1837
    %1977 = vmatprep.subr.mxu0 %v1834
    %1978 = vmatpush1.msra.mxu0 %v1833
    %1979 = vmatprep.subr.mxu0 %v1830
    %1980 = vmatpush1.msra.mxu0 %v1829
    %1981 = vmatprep.subr.mxu0 %v1826
    %1982 = vmatpush1.msra.mxu0 %v1825
    %1983 = vmatprep.subr.mxu0 %v1822
    %1984 = vmatpush1.msra.mxu0 %v1821
    %1985 = vmatprep.subr.mxu0 %v1818
    %1986 = vmatpush1.msra.mxu0 %v1817
    %1987 = vmatprep.subr.mxu0 %v1814
    %1988 = vmatpush1.msra.mxu0 %v1813
    %1989 = vmatprep.subr.mxu0 %v1810
    %1990 = vmatpush1.msra.mxu0 %v1809
    %1991 = vmatprep.subr.mxu0 0.0
    %1992 = vmatpush2.msra.mxu0 0.0
    %1993 = vmatprep.subr.mxu0 0.0
    %1994 = vmatpush2.msra.mxu0 0.0
    %1995 = vmatprep.subr.mxu0 0.0
    %1996 = vmatpush2.msra.mxu0 0.0
    %1997 = vmatprep.subr.mxu0 0.0
    %1998 = vmatpush2.msra.mxu0 0.0
    %1999 = vmatprep.subr.mxu0 0.0
    %2000 = vmatpush2.msra.mxu0 0.0
    %2001 = vmatprep.subr.mxu0 0.0
    %2002 = vmatpush2.msra.mxu0 0.0
    %2003 = vmatprep.subr.mxu0 0.0
    %2004 = vmatpush2.msra.mxu0 0.0
    %2005 = vmatprep.subr.mxu0 0.0
    %2006 = vmatpush2.msra.mxu0 0.0
    %2007 = vmatprep.subr.mxu0 0.0
    %2008 = vmatpush2.msra.mxu0 0.0
    %2009 = vmatprep.subr.mxu0 0.0
    %2010 = vmatpush2.msra.mxu0 0.0
    %2011 = vmatprep.subr.mxu0 0.0
    %2012 = vmatpush2.msra.mxu0 0.0
    %2013 = vmatprep.subr.mxu0 0.0
    %2014 = vmatpush2.msra.mxu0 0.0
    %2015 = vmatprep.subr.mxu0 0.0
    %2016 = vmatpush2.msra.mxu0 0.0
    %2017 = vmatprep.subr.mxu0 0.0
    %2018 = vmatpush2.msra.mxu0 0.0
    %2019 = vmatprep.subr.mxu0 0.0
    %2020 = vmatpush2.msra.mxu0 0.0
    %2021 = vmatprep.subr.mxu0 0.0
    %2022 = vmatpush2.msra.mxu0 0.0
    %2023 = vmatprep.mubr.f32.mxu0 0.0
    %2024 = vmatmul.mubr.f32.gmra.mxu0 %v1807
    %v2025 = vpop.f32.mrf.mxu0
    %v2026 = vadd.f32 %v1942, %v2025
    %v2027 = vpop.f32.mrf.mxu0
    %v2028 = vadd.f32 %v1946, %v2027
    %2029 = vmatprep.mubr.f32.mxu0 0.0
    %2030 = vmatmul.mubr.f32.gmra.mxu0 %v1808
    %v2031 = vpop.f32.mrf.mxu0
    %v2032 = vadd.f32 %v1942, %v2031
    %v2033 = vpop.f32.mrf.mxu0
    %v2034 = vadd.f32 %v1946, %v2033
    %2035 = vdwg.mxu0
    %2036 = vmatprep.subr.mxu0 %v1872
    %2037 = vmatpush1.msra.mxu0 %v1871
    %2038 = vmatprep.subr.mxu0 %v1868
    %2039 = vmatpush1.msra.mxu0 %v1867
    %2040 = vmatprep.subr.mxu0 %v1864
    %2041 = vmatpush1.msra.mxu0 %v1863
    %2042 = vmatprep.subr.mxu0 %v1860
    %2043 = vmatpush1.msra.mxu0 %v1859
    %2044 = vmatprep.subr.mxu0 %v1856
    %2045 = vmatpush1.msra.mxu0 %v1855
    %2046 = vmatprep.subr.mxu0 %v1852
    %2047 = vmatpush1.msra.mxu0 %v1851
    %2048 = vmatprep.subr.mxu0 %v1848
    %2049 = vmatpush1.msra.mxu0 %v1847
    %2050 = vmatprep.subr.mxu0 %v1844
    %2051 = vmatpush1.msra.mxu0 %v1843
    %2052 = vmatprep.subr.mxu0 %v1840
    %2053 = vmatpush1.msra.mxu0 %v1839
    %2054 = vmatprep.subr.mxu0 %v1836
    %2055 = vmatpush1.msra.mxu0 %v1835
    %2056 = vmatprep.subr.mxu0 %v1832
    %2057 = vmatpush1.msra.mxu0 %v1831
    %2058 = vmatprep.subr.mxu0 %v1828
    %2059 = vmatpush1.msra.mxu0 %v1827
    %2060 = vmatprep.subr.mxu0 %v1824
    %2061 = vmatpush1.msra.mxu0 %v1823
    %2062 = vmatprep.subr.mxu0 %v1820
    %2063 = vmatpush1.msra.mxu0 %v1819
    %2064 = vmatprep.subr.mxu0 %v1816
    %2065 = vmatpush1.msra.mxu0 %v1815
    %2066 = vmatprep.subr.mxu0 %v1812
    %2067 = vmatpush1.msra.mxu0 %v1811
    %2068 = vmatprep.subr.mxu0 0.0
    %2069 = vmatpush2.msra.mxu0 0.0
    %2070 = vmatprep.subr.mxu0 0.0
    %2071 = vmatpush2.msra.mxu0 0.0
    %2072 = vmatprep.subr.mxu0 0.0
    %2073 = vmatpush2.msra.mxu0 0.0
    %2074 = vmatprep.subr.mxu0 0.0
    %2075 = vmatpush2.msra.mxu0 0.0
    %2076 = vmatprep.subr.mxu0 0.0
    %2077 = vmatpush2.msra.mxu0 0.0
    %2078 = vmatprep.subr.mxu0 0.0
    %2079 = vmatpush2.msra.mxu0 0.0
    %2080 = vmatprep.subr.mxu0 0.0
    %2081 = vmatpush2.msra.mxu0 0.0
    %2082 = vmatprep.subr.mxu0 0.0
    %2083 = vmatpush2.msra.mxu0 0.0
    %2084 = vmatprep.subr.mxu0 0.0
    %2085 = vmatpush2.msra.mxu0 0.0
    %2086 = vmatprep.subr.mxu0 0.0
    %2087 = vmatpush2.msra.mxu0 0.0
    %2088 = vmatprep.subr.mxu0 0.0
    %2089 = vmatpush2.msra.mxu0 0.0
    %2090 = vmatprep.subr.mxu0 0.0
    %2091 = vmatpush2.msra.mxu0 0.0
    %2092 = vmatprep.subr.mxu0 0.0
    %2093 = vmatpush2.msra.mxu0 0.0
    %2094 = vmatprep.subr.mxu0 0.0
    %2095 = vmatpush2.msra.mxu0 0.0
    %2096 = vmatprep.subr.mxu0 0.0
    %2097 = vmatpush2.msra.mxu0 0.0
    %2098 = vmatprep.subr.mxu0 0.0
    %2099 = vmatpush2.msra.mxu0 0.0
    %2100 = vmatprep.mubr.f32.mxu0 0.0
    %2101 = vmatmul.mubr.f32.gmra.mxu0 %v1807
    %v2102 = vpop.f32.mrf.mxu0
    %v2103 = vadd.f32 %v1950, %v2102
    %v2104 = vpop.f32.mrf.mxu0
    %v2105 = vadd.f32 %v1954, %v2104
    %2106 = vmatprep.mubr.f32.mxu0 0.0
    %2107 = vmatmul.mubr.f32.gmra.mxu0 %v1808
    %v2108 = vpop.f32.mrf.mxu0
    %v2109 = vadd.f32 %v1950, %v2108
    %v2110 = vpop.f32.mrf.mxu0
    %v2111 = vadd.f32 %v1954, %v2110
    %2112 = vdwg.mxu0
    %2113 = vmatprep.subr.mxu0 %v1934
    %2114 = vmatpush1.msra.mxu0 %v1933
    %2115 = vmatprep.subr.mxu0 %v1930
    %2116 = vmatpush1.msra.mxu0 %v1929
    %2117 = vmatprep.subr.mxu0 %v1926
    %2118 = vmatpush1.msra.mxu0 %v1925
    %2119 = vmatprep.subr.mxu0 %v1922
    %2120 = vmatpush1.msra.mxu0 %v1921
    %2121 = vmatprep.subr.mxu0 %v1918
    %2122 = vmatpush1.msra.mxu0 %v1917
    %2123 = vmatprep.subr.mxu0 %v1914
    %2124 = vmatpush1.msra.mxu0 %v1913
    %2125 = vmatprep.subr.mxu0 %v1910
    %2126 = vmatpush1.msra.mxu0 %v1909
    %2127 = vmatprep.subr.mxu0 %v1906
    %2128 = vmatpush1.msra.mxu0 %v1905
    %2129 = vmatprep.subr.mxu0 %v1902
    %2130 = vmatpush1.msra.mxu0 %v1901
    %2131 = vmatprep.subr.mxu0 %v1898
    %2132 = vmatpush1.msra.mxu0 %v1897
    %2133 = vmatprep.subr.mxu0 %v1894
    %2134 = vmatpush1.msra.mxu0 %v1893
    %2135 = vmatprep.subr.mxu0 %v1890
    %2136 = vmatpush1.msra.mxu0 %v1889
    %2137 = vmatprep.subr.mxu0 %v1886
    %2138 = vmatpush1.msra.mxu0 %v1885
    %2139 = vmatprep.subr.mxu0 %v1882
    %2140 = vmatpush1.msra.mxu0 %v1881
    %2141 = vmatprep.subr.mxu0 %v1878
    %2142 = vmatpush1.msra.mxu0 %v1877
    %2143 = vmatprep.subr.mxu0 %v1874
    %2144 = vmatpush1.msra.mxu0 %v1873
    %2145 = vmatprep.subr.mxu0 0.0
    %2146 = vmatpush2.msra.mxu0 0.0
    %2147 = vmatprep.subr.mxu0 0.0
    %2148 = vmatpush2.msra.mxu0 0.0
    %2149 = vmatprep.subr.mxu0 0.0
    %2150 = vmatpush2.msra.mxu0 0.0
    %2151 = vmatprep.subr.mxu0 0.0
    %2152 = vmatpush2.msra.mxu0 0.0
    %2153 = vmatprep.subr.mxu0 0.0
    %2154 = vmatpush2.msra.mxu0 0.0
    %2155 = vmatprep.subr.mxu0 0.0
    %2156 = vmatpush2.msra.mxu0 0.0
    %2157 = vmatprep.subr.mxu0 0.0
    %2158 = vmatpush2.msra.mxu0 0.0
    %2159 = vmatprep.subr.mxu0 0.0
    %2160 = vmatpush2.msra.mxu0 0.0
    %2161 = vmatprep.subr.mxu0 0.0
    %2162 = vmatpush2.msra.mxu0 0.0
    %2163 = vmatprep.subr.mxu0 0.0
    %2164 = vmatpush2.msra.mxu0 0.0
    %2165 = vmatprep.subr.mxu0 0.0
    %2166 = vmatpush2.msra.mxu0 0.0
    %2167 = vmatprep.subr.mxu0 0.0
    %2168 = vmatpush2.msra.mxu0 0.0
    %2169 = vmatprep.subr.mxu0 0.0
    %2170 = vmatpush2.msra.mxu0 0.0
    %2171 = vmatprep.subr.mxu0 0.0
    %2172 = vmatpush2.msra.mxu0 0.0
    %2173 = vmatprep.subr.mxu0 0.0
    %2174 = vmatpush2.msra.mxu0 0.0
    %2175 = vmatprep.subr.mxu0 0.0
    %2176 = vmatpush2.msra.mxu0 0.0
    %2177 = vmatprep.mubr.f32.mxu0 0.0
    %2178 = vmatmul.mubr.f32.gmra.mxu0 0.0
    %v2179 = vpop.f32.mrf.mxu0
    %v2180 = vadd.f32 0.0, %v2179
    %v2181 = vpop.f32.mrf.mxu0
    %v2182 = vadd.f32 0.0, %v2181
    %2183 = vdwg.mxu0
    %2184 = vmatprep.subr.mxu0 %v1936
    %2185 = vmatpush1.msra.mxu0 %v1935
    %2186 = vmatprep.subr.mxu0 %v1932
    %2187 = vmatpush1.msra.mxu0 %v1931
    %2188 = vmatprep.subr.mxu0 %v1928
    %2189 = vmatpush1.msra.mxu0 %v1927
    %2190 = vmatprep.subr.mxu0 %v1924
    %2191 = vmatpush1.msra.mxu0 %v1923
    %2192 = vmatprep.subr.mxu0 %v1920
    %2193 = vmatpush1.msra.mxu0 %v1919
    %2194 = vmatprep.subr.mxu0 %v1916
    %2195 = vmatpush1.msra.mxu0 %v1915
    %2196 = vmatprep.subr.mxu0 %v1912
    %2197 = vmatpush1.msra.mxu0 %v1911
    %2198 = vmatprep.subr.mxu0 %v1908
    %2199 = vmatpush1.msra.mxu0 %v1907
    %2200 = vmatprep.subr.mxu0 %v1904
    %2201 = vmatpush1.msra.mxu0 %v1903
    %2202 = vmatprep.subr.mxu0 %v1900
    %2203 = vmatpush1.msra.mxu0 %v1899
    %2204 = vmatprep.subr.mxu0 %v1896
    %2205 = vmatpush1.msra.mxu0 %v1895
    %2206 = vmatprep.subr.mxu0 %v1892
    %2207 = vmatpush1.msra.mxu0 %v1891
    %2208 = vmatprep.subr.mxu0 %v1888
    %2209 = vmatpush1.msra.mxu0 %v1887
    %2210 = vmatprep.subr.mxu0 %v1884
    %2211 = vmatpush1.msra.mxu0 %v1883
    %2212 = vmatprep.subr.mxu0 %v1880
    %2213 = vmatpush1.msra.mxu0 %v1879
    %2214 = vmatprep.subr.mxu0 %v1876
    %2215 = vmatpush1.msra.mxu0 %v1875
    %2216 = vmatprep.subr.mxu0 0.0
    %2217 = vmatpush2.msra.mxu0 0.0
    %2218 = vmatprep.subr.mxu0 0.0
    %2219 = vmatpush2.msra.mxu0 0.0
    %2220 = vmatprep.subr.mxu0 0.0
    %2221 = vmatpush2.msra.mxu0 0.0
    %2222 = vmatprep.subr.mxu0 0.0
    %2223 = vmatpush2.msra.mxu0 0.0
    %2224 = vmatprep.subr.mxu0 0.0
    %2225 = vmatpush2.msra.mxu0 0.0
    %2226 = vmatprep.subr.mxu0 0.0
    %2227 = vmatpush2.msra.mxu0 0.0
    %2228 = vmatprep.subr.mxu0 0.0
    %2229 = vmatpush2.msra.mxu0 0.0
    %2230 = vmatprep.subr.mxu0 0.0
    %2231 = vmatpush2.msra.mxu0 0.0
    %2232 = vmatprep.subr.mxu0 0.0
    %2233 = vmatpush2.msra.mxu0 0.0
    %2234 = vmatprep.subr.mxu0 0.0
    %2235 = vmatpush2.msra.mxu0 0.0
    %2236 = vmatprep.subr.mxu0 0.0
    %2237 = vmatpush2.msra.mxu0 0.0
    %2238 = vmatprep.subr.mxu0 0.0
    %2239 = vmatpush2.msra.mxu0 0.0
    %2240 = vmatprep.subr.mxu0 0.0
    %2241 = vmatpush2.msra.mxu0 0.0
    %2242 = vmatprep.subr.mxu0 0.0
    %2243 = vmatpush2.msra.mxu0 0.0
    %2244 = vmatprep.subr.mxu0 0.0
    %2245 = vmatpush2.msra.mxu0 0.0
    %2246 = vmatprep.subr.mxu0 0.0
    %2247 = vmatpush2.msra.mxu0 0.0
    %2248 = vmatprep.mubr.f32.mxu0 0.0
    %2249 = vmatmul.mubr.f32.gmra.mxu0 0.0
    %v2250 = vpop.f32.mrf.mxu0
    %v2251 = vadd.f32 0.0, %v2250
    %v2252 = vpop.f32.mrf.mxu0
    %v2253 = vadd.f32 0.0, %v2252
    %2254 = vdwg.mxu0
    %v2255 = vadd.f32 %v2026, %v2180
    %v2256 = vadd.f32 %v2028, %v2182
    %v2257 = vadd.f32 %v2103, %v2251
    %v2258 = vadd.f32 %v2105, %v2253
    %v2259 = vxor.u32 %v2255, 2147483648
    %v2260 = vmul.f32 %v2259, 1.442695
    %v2261 = vpow.pop %v2260
    %v2262 = vadd.f32 %v2261, 1.0
    %v2263 = vrcp.pop %v2262
    %v2264 = vmul.f32 1.0, %v2263
    %v2265 = vxor.u32 %v2256, 2147483648
    %v2266 = vmul.f32 %v2265, 1.442695
    %v2267 = vpow.pop %v2266
    %v2268 = vadd.f32 %v2267, 1.0
    %v2269 = vrcp.pop %v2268
    %v2270 = vmul.f32 1.0, %v2269
    %v2271 = vtanh.pop %v2257
    %v2272 = vxor.u32 %v2258, 2147483648
    %v2273 = vmul.f32 %v2272, 1.442695
    %v2274 = vpow.pop %v2273
    %v2275 = vadd.f32 %v2274, 1.0
    %v2276 = vrcp.pop %v2275
    %v2277 = vmul.f32 1.0, %v2276
    %v2278 = vmul.f32 %v2270, 0.0
    %v2279 = vmul.f32 %v2264, %v2271
    %v2280 = vadd.f32 %v2278, %v2279
    %v2281 = vtanh.pop %v2280
    %v2282 = vmul.f32 %v2277, %v2281
    %2283 = vmatprep.subr.mxu0 %v1934
    %2284 = vmatpush1.msra.mxu0 %v1933
    %2285 = vmatprep.subr.mxu0 %v1930
    %2286 = vmatpush1.msra.mxu0 %v1929
    %2287 = vmatprep.subr.mxu0 %v1926
    %2288 = vmatpush1.msra.mxu0 %v1925
    %2289 = vmatprep.subr.mxu0 %v1922
    %2290 = vmatpush1.msra.mxu0 %v1921
    %2291 = vmatprep.subr.mxu0 %v1918
    %2292 = vmatpush1.msra.mxu0 %v1917
    %2293 = vmatprep.subr.mxu0 %v1914
    %2294 = vmatpush1.msra.mxu0 %v1913
    %2295 = vmatprep.subr.mxu0 %v1910
    %2296 = vmatpush1.msra.mxu0 %v1909
    %2297 = vmatprep.subr.mxu0 %v1906
    %2298 = vmatpush1.msra.mxu0 %v1905
    %2299 = vmatprep.subr.mxu0 %v1902
    %2300 = vmatpush1.msra.mxu0 %v1901
    %2301 = vmatprep.subr.mxu0 %v1898
    %2302 = vmatpush1.msra.mxu0 %v1897
    %2303 = vmatprep.subr.mxu0 %v1894
    %2304 = vmatpush1.msra.mxu0 %v1893
    %2305 = vmatprep.subr.mxu0 %v1890
    %2306 = vmatpush1.msra.mxu0 %v1889
    %2307 = vmatprep.subr.mxu0 %v1886
    %2308 = vmatpush1.msra.mxu0 %v1885
    %2309 = vmatprep.subr.mxu0 %v1882
    %2310 = vmatpush1.msra.mxu0 %v1881
    %2311 = vmatprep.subr.mxu0 %v1878
    %2312 = vmatpush1.msra.mxu0 %v1877
    %2313 = vmatprep.subr.mxu0 %v1874
    %2314 = vmatpush1.msra.mxu0 %v1873
    %2315 = vmatprep.subr.mxu0 0.0
    %2316 = vmatpush2.msra.mxu0 0.0
    %2317 = vmatprep.subr.mxu0 0.0
    %2318 = vmatpush2.msra.mxu0 0.0
    %2319 = vmatprep.subr.mxu0 0.0
    %2320 = vmatpush2.msra.mxu0 0.0
    %2321 = vmatprep.subr.mxu0 0.0
    %2322 = vmatpush2.msra.mxu0 0.0
    %2323 = vmatprep.subr.mxu0 0.0
    %2324 = vmatpush2.msra.mxu0 0.0
    %2325 = vmatprep.subr.mxu0 0.0
    %2326 = vmatpush2.msra.mxu0 0.0
    %2327 = vmatprep.subr.mxu0 0.0
    %2328 = vmatpush2.msra.mxu0 0.0
    %2329 = vmatprep.subr.mxu0 0.0
    %2330 = vmatpush2.msra.mxu0 0.0
    %2331 = vmatprep.subr.mxu0 0.0
    %2332 = vmatpush2.msra.mxu0 0.0
    %2333 = vmatprep.subr.mxu0 0.0
    %2334 = vmatpush2.msra.mxu0 0.0
    %2335 = vmatprep.subr.mxu0 0.0
    %2336 = vmatpush2.msra.mxu0 0.0
    %2337 = vmatprep.subr.mxu0 0.0
    %2338 = vmatpush2.msra.mxu0 0.0
    %2339 = vmatprep.subr.mxu0 0.0
    %2340 = vmatpush2.msra.mxu0 0.0
    %2341 = vmatprep.subr.mxu0 0.0
    %2342 = vmatpush2.msra.mxu0 0.0
    %2343 = vmatprep.subr.mxu0 0.0
    %2344 = vmatpush2.msra.mxu0 0.0
    %2345 = vmatprep.subr.mxu0 0.0
    %2346 = vmatpush2.msra.mxu0 0.0
    %2347 = vmatprep.mubr.f32.mxu0 0.0
    %2348 = vmatmul.mubr.f32.gmra.mxu0 %v2282
    %v2349 = vpop.f32.mrf.mxu0
    %v2350 = vadd.f32 0.0, %v2349
    %v2351 = vpop.f32.mrf.mxu0
    %v2352 = vadd.f32 0.0, %v2351
    %2353 = vdwg.mxu0
    %2354 = vmatprep.subr.mxu0 %v1936
    %2355 = vmatpush1.msra.mxu0 %v1935
    %2356 = vmatprep.subr.mxu0 %v1932
    %2357 = vmatpush1.msra.mxu0 %v1931
    %2358 = vmatprep.subr.mxu0 %v1928
    %2359 = vmatpush1.msra.mxu0 %v1927
    %2360 = vmatprep.subr.mxu0 %v1924
    %2361 = vmatpush1.msra.mxu0 %v1923
    %2362 = vmatprep.subr.mxu0 %v1920
    %2363 = vmatpush1.msra.mxu0 %v1919
    %2364 = vmatprep.subr.mxu0 %v1916
    %2365 = vmatpush1.msra.mxu0 %v1915
    %2366 = vmatprep.subr.mxu0 %v1912
    %2367 = vmatpush1.msra.mxu0 %v1911
    %2368 = vmatprep.subr.mxu0 %v1908
    %2369 = vmatpush1.msra.mxu0 %v1907
    %2370 = vmatprep.subr.mxu0 %v1904
    %2371 = vmatpush1.msra.mxu0 %v1903
    %2372 = vmatprep.subr.mxu0 %v1900
    %2373 = vmatpush1.msra.mxu0 %v1899
    %2374 = vmatprep.subr.mxu0 %v1896
    %2375 = vmatpush1.msra.mxu0 %v1895
    %2376 = vmatprep.subr.mxu0 %v1892
    %2377 = vmatpush1.msra.mxu0 %v1891
    %2378 = vmatprep.subr.mxu0 %v1888
    %2379 = vmatpush1.msra.mxu0 %v1887
    %2380 = vmatprep.subr.mxu0 %v1884
    %2381 = vmatpush1.msra.mxu0 %v1883
    %2382 = vmatprep.subr.mxu0 %v1880
    %2383 = vmatpush1.msra.mxu0 %v1879
    %2384 = vmatprep.subr.mxu0 %v1876
    %2385 = vmatpush1.msra.mxu0 %v1875
    %2386 = vmatprep.subr.mxu0 0.0
    %2387 = vmatpush2.msra.mxu0 0.0
    %2388 = vmatprep.subr.mxu0 0.0
    %2389 = vmatpush2.msra.mxu0 0.0
    %2390 = vmatprep.subr.mxu0 0.0
    %2391 = vmatpush2.msra.mxu0 0.0
    %2392 = vmatprep.subr.mxu0 0.0
    %2393 = vmatpush2.msra.mxu0 0.0
    %2394 = vmatprep.subr.mxu0 0.0
    %2395 = vmatpush2.msra.mxu0 0.0
    %2396 = vmatprep.subr.mxu0 0.0
    %2397 = vmatpush2.msra.mxu0 0.0
    %2398 = vmatprep.subr.mxu0 0.0
    %2399 = vmatpush2.msra.mxu0 0.0
    %2400 = vmatprep.subr.mxu0 0.0
    %2401 = vmatpush2.msra.mxu0 0.0
    %2402 = vmatprep.subr.mxu0 0.0
    %2403 = vmatpush2.msra.mxu0 0.0
    %2404 = vmatprep.subr.mxu0 0.0
    %2405 = vmatpush2.msra.mxu0 0.0
    %2406 = vmatprep.subr.mxu0 0.0
    %2407 = vmatpush2.msra.mxu0 0.0
    %2408 = vmatprep.subr.mxu0 0.0
    %2409 = vmatpush2.msra.mxu0 0.0
    %2410 = vmatprep.subr.mxu0 0.0
    %2411 = vmatpush2.msra.mxu0 0.0
    %2412 = vmatprep.subr.mxu0 0.0
    %2413 = vmatpush2.msra.mxu0 0.0
    %2414 = vmatprep.subr.mxu0 0.0
    %2415 = vmatpush2.msra.mxu0 0.0
    %2416 = vmatprep.subr.mxu0 0.0
    %2417 = vmatpush2.msra.mxu0 0.0
    %2418 = vmatprep.mubr.f32.mxu0 0.0
    %2419 = vmatmul.mubr.f32.gmra.mxu0 %v2282
    %v2420 = vpop.f32.mrf.mxu0
    %v2421 = vadd.f32 0.0, %v2420
    %v2422 = vpop.f32.mrf.mxu0
    %v2423 = vadd.f32 0.0, %v2422
    %2424 = vdwg.mxu0
    %v2429 = vrot.slane %v2350, 6
    %v2430 = vrot.slane %v2352, 6
    %v2431 = vrot.slane %v2421, 6
    %v2432 = vrot.slane %v2423, 6
    %v2437 = vadd.f32 %v2026, %v2429
    %v2438 = vadd.f32 %v2028, %v2430
    %v2439 = vadd.f32 %v2103, %v2431
    %v2440 = vadd.f32 %v2105, %v2432
    %v2441 = vxor.u32 %v2437, 2147483648
    %v2442 = vmul.f32 %v2441, 1.442695
    %v2443 = vpow.pop %v2442
    %v2444 = vadd.f32 %v2443, 1.0
    %v2445 = vrcp.pop %v2444
    %v2446 = vmul.f32 1.0, %v2445
    %v2447 = vxor.u32 %v2438, 2147483648
    %v2448 = vmul.f32 %v2447, 1.442695
    %v2449 = vpow.pop %v2448
    %v2450 = vadd.f32 %v2449, 1.0
    %v2451 = vrcp.pop %v2450
    %v2452 = vmul.f32 1.0, %v2451
    %v2453 = vtanh.pop %v2439
    %v2454 = vxor.u32 %v2440, 2147483648
    %v2455 = vmul.f32 %v2454, 1.442695
    %v2456 = vpow.pop %v2455
    %v2457 = vadd.f32 %v2456, 1.0
    %v2458 = vrcp.pop %v2457
    %v2459 = vmul.f32 1.0, %v2458
    %v2461 = vrot.slane %v2280, 6
    %v2463 = vmul.f32 %v2452, %v2461
    %v2464 = vmul.f32 %v2446, %v2453
    %v2465 = vadd.f32 %v2463, %v2464
    %v2466 = vtanh.pop %v2465
    %v2467 = vmul.f32 %v2459, %v2466
    %v2469 = vrot.slane %v2467, 2
    %2471 = vmatprep.subr.mxu0 %v1934
    %2472 = vmatpush1.msra.mxu0 %v1933
    %2473 = vmatprep.subr.mxu0 %v1930
    %2474 = vmatpush1.msra.mxu0 %v1929
    %2475 = vmatprep.subr.mxu0 %v1926
    %2476 = vmatpush1.msra.mxu0 %v1925
    %2477 = vmatprep.subr.mxu0 %v1922
    %2478 = vmatpush1.msra.mxu0 %v1921
    %2479 = vmatprep.subr.mxu0 %v1918
    %2480 = vmatpush1.msra.mxu0 %v1917
    %2481 = vmatprep.subr.mxu0 %v1914
    %2482 = vmatpush1.msra.mxu0 %v1913
    %2483 = vmatprep.subr.mxu0 %v1910
    %2484 = vmatpush1.msra.mxu0 %v1909
    %2485 = vmatprep.subr.mxu0 %v1906
    %2486 = vmatpush1.msra.mxu0 %v1905
    %2487 = vmatprep.subr.mxu0 %v1902
    %2488 = vmatpush1.msra.mxu0 %v1901
    %2489 = vmatprep.subr.mxu0 %v1898
    %2490 = vmatpush1.msra.mxu0 %v1897
    %2491 = vmatprep.subr.mxu0 %v1894
    %2492 = vmatpush1.msra.mxu0 %v1893
    %2493 = vmatprep.subr.mxu0 %v1890
    %2494 = vmatpush1.msra.mxu0 %v1889
    %2495 = vmatprep.subr.mxu0 %v1886
    %2496 = vmatpush1.msra.mxu0 %v1885
    %2497 = vmatprep.subr.mxu0 %v1882
    %2498 = vmatpush1.msra.mxu0 %v1881
    %2499 = vmatprep.subr.mxu0 %v1878
    %2500 = vmatpush1.msra.mxu0 %v1877
    %2501 = vmatprep.subr.mxu0 %v1874
    %2502 = vmatpush1.msra.mxu0 %v1873
    %2503 = vmatprep.subr.mxu0 0.0
    %2504 = vmatpush2.msra.mxu0 0.0
    %2505 = vmatprep.subr.mxu0 0.0
    %2506 = vmatpush2.msra.mxu0 0.0
    %2507 = vmatprep.subr.mxu0 0.0
    %2508 = vmatpush2.msra.mxu0 0.0
    %2509 = vmatprep.subr.mxu0 0.0
    %2510 = vmatpush2.msra.mxu0 0.0
    %2511 = vmatprep.subr.mxu0 0.0
    %2512 = vmatpush2.msra.mxu0 0.0
    %2513 = vmatprep.subr.mxu0 0.0
    %2514 = vmatpush2.msra.mxu0 0.0
    %2515 = vmatprep.subr.mxu0 0.0
    %2516 = vmatpush2.msra.mxu0 0.0
    %2517 = vmatprep.subr.mxu0 0.0
    %2518 = vmatpush2.msra.mxu0 0.0
    %2519 = vmatprep.subr.mxu0 0.0
    %2520 = vmatpush2.msra.mxu0 0.0
    %2521 = vmatprep.subr.mxu0 0.0
    %2522 = vmatpush2.msra.mxu0 0.0
    %2523 = vmatprep.subr.mxu0 0.0
    %2524 = vmatpush2.msra.mxu0 0.0
    %2525 = vmatprep.subr.mxu0 0.0
    %2526 = vmatpush2.msra.mxu0 0.0
    %2527 = vmatprep.subr.mxu0 0.0
    %2528 = vmatpush2.msra.mxu0 0.0
    %2529 = vmatprep.subr.mxu0 0.0
    %2530 = vmatpush2.msra.mxu0 0.0
    %2531 = vmatprep.subr.mxu0 0.0
    %2532 = vmatpush2.msra.mxu0 0.0
    %2533 = vmatprep.subr.mxu0 0.0
    %2534 = vmatpush2.msra.mxu0 0.0
    %2535 = vmatprep.mubr.f32.mxu0 0.0
    %2536 = vmatmul.mubr.f32.gmra.mxu0 %v2469
    %v2537 = vpop.f32.mrf.mxu0
    %v2538 = vadd.f32 0.0, %v2537
    %v2539 = vpop.f32.mrf.mxu0
    %v2540 = vadd.f32 0.0, %v2539
    %2541 = vdwg.mxu0
    %2542 = vmatprep.subr.mxu0 %v1936
    %2543 = vmatpush1.msra.mxu0 %v1935
    %2544 = vmatprep.subr.mxu0 %v1932
    %2545 = vmatpush1.msra.mxu0 %v1931
    %2546 = vmatprep.subr.mxu0 %v1928
    %2547 = vmatpush1.msra.mxu0 %v1927
    %2548 = vmatprep.subr.mxu0 %v1924
    %2549 = vmatpush1.msra.mxu0 %v1923
    %2550 = vmatprep.subr.mxu0 %v1920
    %2551 = vmatpush1.msra.mxu0 %v1919
    %2552 = vmatprep.subr.mxu0 %v1916
    %2553 = vmatpush1.msra.mxu0 %v1915
    %2554 = vmatprep.subr.mxu0 %v1912
    %2555 = vmatpush1.msra.mxu0 %v1911
    %2556 = vmatprep.subr.mxu0 %v1908
    %2557 = vmatpush1.msra.mxu0 %v1907
    %2558 = vmatprep.subr.mxu0 %v1904
    %2559 = vmatpush1.msra.mxu0 %v1903
    %2560 = vmatprep.subr.mxu0 %v1900
    %2561 = vmatpush1.msra.mxu0 %v1899
    %2562 = vmatprep.subr.mxu0 %v1896
    %2563 = vmatpush1.msra.mxu0 %v1895
    %2564 = vmatprep.subr.mxu0 %v1892
    %2565 = vmatpush1.msra.mxu0 %v1891
    %2566 = vmatprep.subr.mxu0 %v1888
    %2567 = vmatpush1.msra.mxu0 %v1887
    %2568 = vmatprep.subr.mxu0 %v1884
    %2569 = vmatpush1.msra.mxu0 %v1883
    %2570 = vmatprep.subr.mxu0 %v1880
    %2571 = vmatpush1.msra.mxu0 %v1879
    %2572 = vmatprep.subr.mxu0 %v1876
    %2573 = vmatpush1.msra.mxu0 %v1875
    %2574 = vmatprep.subr.mxu0 0.0
    %2575 = vmatpush2.msra.mxu0 0.0
    %2576 = vmatprep.subr.mxu0 0.0
    %2577 = vmatpush2.msra.mxu0 0.0
    %2578 = vmatprep.subr.mxu0 0.0
    %2579 = vmatpush2.msra.mxu0 0.0
    %2580 = vmatprep.subr.mxu0 0.0
    %2581 = vmatpush2.msra.mxu0 0.0
    %2582 = vmatprep.subr.mxu0 0.0
    %2583 = vmatpush2.msra.mxu0 0.0
    %2584 = vmatprep.subr.mxu0 0.0
    %2585 = vmatpush2.msra.mxu0 0.0
    %2586 = vmatprep.subr.mxu0 0.0
    %2587 = vmatpush2.msra.mxu0 0.0
    %2588 = vmatprep.subr.mxu0 0.0
    %2589 = vmatpush2.msra.mxu0 0.0
    %2590 = vmatprep.subr.mxu0 0.0
    %2591 = vmatpush2.msra.mxu0 0.0
    %2592 = vmatprep.subr.mxu0 0.0
    %2593 = vmatpush2.msra.mxu0 0.0
    %2594 = vmatprep.subr.mxu0 0.0
    %2595 = vmatpush2.msra.mxu0 0.0
    %2596 = vmatprep.subr.mxu0 0.0
    %2597 = vmatpush2.msra.mxu0 0.0
    %2598 = vmatprep.subr.mxu0 0.0
    %2599 = vmatpush2.msra.mxu0 0.0
    %2600 = vmatprep.subr.mxu0 0.0
    %2601 = vmatpush2.msra.mxu0 0.0
    %2602 = vmatprep.subr.mxu0 0.0
    %2603 = vmatpush2.msra.mxu0 0.0
    %2604 = vmatprep.subr.mxu0 0.0
    %2605 = vmatpush2.msra.mxu0 0.0
    %2606 = vmatprep.mubr.f32.mxu0 0.0
    %2607 = vmatmul.mubr.f32.gmra.mxu0 %v2469
    %v2608 = vpop.f32.mrf.mxu0
    %v2609 = vadd.f32 0.0, %v2608
    %v2610 = vpop.f32.mrf.mxu0
    %v2611 = vadd.f32 0.0, %v2610
    %2612 = vdwg.mxu0
    %v2617 = vrot.slane %v2538, 4
    %v2618 = vrot.slane %v2540, 4
    %v2619 = vrot.slane %v2609, 4
    %v2620 = vrot.slane %v2611, 4
    %v2625 = vadd.f32 %v2026, %v2617
    %v2626 = vadd.f32 %v2028, %v2618
    %v2627 = vadd.f32 %v2103, %v2619
    %v2628 = vadd.f32 %v2105, %v2620
    %v2629 = vxor.u32 %v2625, 2147483648
    %v2630 = vmul.f32 %v2629, 1.442695
    %v2631 = vpow.pop %v2630
    %v2632 = vadd.f32 %v2631, 1.0
    %v2633 = vrcp.pop %v2632
    %v2634 = vmul.f32 1.0, %v2633
    %v2635 = vxor.u32 %v2626, 2147483648
    %v2636 = vmul.f32 %v2635, 1.442695
    %v2637 = vpow.pop %v2636
    %v2638 = vadd.f32 %v2637, 1.0
    %v2639 = vrcp.pop %v2638
    %v2640 = vmul.f32 1.0, %v2639
    %v2641 = vtanh.pop %v2627
    %v2642 = vxor.u32 %v2628, 2147483648
    %v2643 = vmul.f32 %v2642, 1.442695
    %v2644 = vpow.pop %v2643
    %v2645 = vadd.f32 %v2644, 1.0
    %v2646 = vrcp.pop %v2645
    %v2647 = vmul.f32 1.0, %v2646
    %v2649 = vrot.slane %v2465, 6
    %v2651 = vmul.f32 %v2640, %v2649
    %v2652 = vmul.f32 %v2634, %v2641
    %v2653 = vadd.f32 %v2651, %v2652
    %v2654 = vtanh.pop %v2653
    %v2655 = vmul.f32 %v2647, %v2654
    %v2657 = vrot.slane %v2655, 4
    %2659 = vmatprep.subr.mxu0 %v1934
    %2660 = vmatpush1.msra.mxu0 %v1933
    %2661 = vmatprep.subr.mxu0 %v1930
    %2662 = vmatpush1.msra.mxu0 %v1929
    %2663 = vmatprep.subr.mxu0 %v1926
    %2664 = vmatpush1.msra.mxu0 %v1925
    %2665 = vmatprep.subr.mxu0 %v1922
    %2666 = vmatpush1.msra.mxu0 %v1921
    %2667 = vmatprep.subr.mxu0 %v1918
    %2668 = vmatpush1.msra.mxu0 %v1917
    %2669 = vmatprep.subr.mxu0 %v1914
    %2670 = vmatpush1.msra.mxu0 %v1913
    %2671 = vmatprep.subr.mxu0 %v1910
    %2672 = vmatpush1.msra.mxu0 %v1909
    %2673 = vmatprep.subr.mxu0 %v1906
    %2674 = vmatpush1.msra.mxu0 %v1905
    %2675 = vmatprep.subr.mxu0 %v1902
    %2676 = vmatpush1.msra.mxu0 %v1901
    %2677 = vmatprep.subr.mxu0 %v1898
    %2678 = vmatpush1.msra.mxu0 %v1897
    %2679 = vmatprep.subr.mxu0 %v1894
    %2680 = vmatpush1.msra.mxu0 %v1893
    %2681 = vmatprep.subr.mxu0 %v1890
    %2682 = vmatpush1.msra.mxu0 %v1889
    %2683 = vmatprep.subr.mxu0 %v1886
    %2684 = vmatpush1.msra.mxu0 %v1885
    %2685 = vmatprep.subr.mxu0 %v1882
    %2686 = vmatpush1.msra.mxu0 %v1881
    %2687 = vmatprep.subr.mxu0 %v1878
    %2688 = vmatpush1.msra.mxu0 %v1877
    %2689 = vmatprep.subr.mxu0 %v1874
    %2690 = vmatpush1.msra.mxu0 %v1873
    %2691 = vmatprep.subr.mxu0 0.0
    %2692 = vmatpush2.msra.mxu0 0.0
    %2693 = vmatprep.subr.mxu0 0.0
    %2694 = vmatpush2.msra.mxu0 0.0
    %2695 = vmatprep.subr.mxu0 0.0
    %2696 = vmatpush2.msra.mxu0 0.0
    %2697 = vmatprep.subr.mxu0 0.0
    %2698 = vmatpush2.msra.mxu0 0.0
    %2699 = vmatprep.subr.mxu0 0.0
    %2700 = vmatpush2.msra.mxu0 0.0
    %2701 = vmatprep.subr.mxu0 0.0
    %2702 = vmatpush2.msra.mxu0 0.0
    %2703 = vmatprep.subr.mxu0 0.0
    %2704 = vmatpush2.msra.mxu0 0.0
    %2705 = vmatprep.subr.mxu0 0.0
    %2706 = vmatpush2.msra.mxu0 0.0
    %2707 = vmatprep.subr.mxu0 0.0
    %2708 = vmatpush2.msra.mxu0 0.0
    %2709 = vmatprep.subr.mxu0 0.0
    %2710 = vmatpush2.msra.mxu0 0.0
    %2711 = vmatprep.subr.mxu0 0.0
    %2712 = vmatpush2.msra.mxu0 0.0
    %2713 = vmatprep.subr.mxu0 0.0
    %2714 = vmatpush2.msra.mxu0 0.0
    %2715 = vmatprep.subr.mxu0 0.0
    %2716 = vmatpush2.msra.mxu0 0.0
    %2717 = vmatprep.subr.mxu0 0.0
    %2718 = vmatpush2.msra.mxu0 0.0
    %2719 = vmatprep.subr.mxu0 0.0
    %2720 = vmatpush2.msra.mxu0 0.0
    %2721 = vmatprep.subr.mxu0 0.0
    %2722 = vmatpush2.msra.mxu0 0.0
    %2723 = vmatprep.mubr.f32.mxu0 0.0
    %2724 = vmatmul.mubr.f32.gmra.mxu0 %v2657
    %v2725 = vpop.f32.mrf.mxu0
    %v2726 = vadd.f32 0.0, %v2725
    %v2727 = vpop.f32.mrf.mxu0
    %v2728 = vadd.f32 0.0, %v2727
    %2729 = vdwg.mxu0
    %2730 = vmatprep.subr.mxu0 %v1936
    %2731 = vmatpush1.msra.mxu0 %v1935
    %2732 = vmatprep.subr.mxu0 %v1932
    %2733 = vmatpush1.msra.mxu0 %v1931
    %2734 = vmatprep.subr.mxu0 %v1928
    %2735 = vmatpush1.msra.mxu0 %v1927
    %2736 = vmatprep.subr.mxu0 %v1924
    %2737 = vmatpush1.msra.mxu0 %v1923
    %2738 = vmatprep.subr.mxu0 %v1920
    %2739 = vmatpush1.msra.mxu0 %v1919
    %2740 = vmatprep.subr.mxu0 %v1916
    %2741 = vmatpush1.msra.mxu0 %v1915
    %2742 = vmatprep.subr.mxu0 %v1912
    %2743 = vmatpush1.msra.mxu0 %v1911
    %2744 = vmatprep.subr.mxu0 %v1908
    %2745 = vmatpush1.msra.mxu0 %v1907
    %2746 = vmatprep.subr.mxu0 %v1904
    %2747 = vmatpush1.msra.mxu0 %v1903
    %2748 = vmatprep.subr.mxu0 %v1900
    %2749 = vmatpush1.msra.mxu0 %v1899
    %2750 = vmatprep.subr.mxu0 %v1896
    %2751 = vmatpush1.msra.mxu0 %v1895
    %2752 = vmatprep.subr.mxu0 %v1892
    %2753 = vmatpush1.msra.mxu0 %v1891
    %2754 = vmatprep.subr.mxu0 %v1888
    %2755 = vmatpush1.msra.mxu0 %v1887
    %2756 = vmatprep.subr.mxu0 %v1884
    %2757 = vmatpush1.msra.mxu0 %v1883
    %2758 = vmatprep.subr.mxu0 %v1880
    %2759 = vmatpush1.msra.mxu0 %v1879
    %2760 = vmatprep.subr.mxu0 %v1876
    %2761 = vmatpush1.msra.mxu0 %v1875
    %2762 = vmatprep.subr.mxu0 0.0
    %2763 = vmatpush2.msra.mxu0 0.0
    %2764 = vmatprep.subr.mxu0 0.0
    %2765 = vmatpush2.msra.mxu0 0.0
    %2766 = vmatprep.subr.mxu0 0.0
    %2767 = vmatpush2.msra.mxu0 0.0
    %2768 = vmatprep.subr.mxu0 0.0
    %2769 = vmatpush2.msra.mxu0 0.0
    %2770 = vmatprep.subr.mxu0 0.0
    %2771 = vmatpush2.msra.mxu0 0.0
    %2772 = vmatprep.subr.mxu0 0.0
    %2773 = vmatpush2.msra.mxu0 0.0
    %2774 = vmatprep.subr.mxu0 0.0
    %2775 = vmatpush2.msra.mxu0 0.0
    %2776 = vmatprep.subr.mxu0 0.0
    %2777 = vmatpush2.msra.mxu0 0.0
    %2778 = vmatprep.subr.mxu0 0.0
    %2779 = vmatpush2.msra.mxu0 0.0
    %2780 = vmatprep.subr.mxu0 0.0
    %2781 = vmatpush2.msra.mxu0 0.0
    %2782 = vmatprep.subr.mxu0 0.0
    %2783 = vmatpush2.msra.mxu0 0.0
    %2784 = vmatprep.subr.mxu0 0.0
    %2785 = vmatpush2.msra.mxu0 0.0
    %2786 = vmatprep.subr.mxu0 0.0
    %2787 = vmatpush2.msra.mxu0 0.0
    %2788 = vmatprep.subr.mxu0 0.0
    %2789 = vmatpush2.msra.mxu0 0.0
    %2790 = vmatprep.subr.mxu0 0.0
    %2791 = vmatpush2.msra.mxu0 0.0
    %2792 = vmatprep.subr.mxu0 0.0
    %2793 = vmatpush2.msra.mxu0 0.0
    %2794 = vmatprep.mubr.f32.mxu0 0.0
    %2795 = vmatmul.mubr.f32.gmra.mxu0 %v2657
    %v2796 = vpop.f32.mrf.mxu0
    %v2797 = vadd.f32 0.0, %v2796
    %v2798 = vpop.f32.mrf.mxu0
    %v2799 = vadd.f32 0.0, %v2798
    %2800 = vdwg.mxu0
    %v2805 = vrot.slane %v2726, 2
    %v2806 = vrot.slane %v2728, 2
    %v2807 = vrot.slane %v2797, 2
    %v2808 = vrot.slane %v2799, 2
    %v2813 = vadd.f32 %v2026, %v2805
    %v2814 = vadd.f32 %v2028, %v2806
    %v2815 = vadd.f32 %v2103, %v2807
    %v2816 = vadd.f32 %v2105, %v2808
    %v2817 = vxor.u32 %v2813, 2147483648
    %v2818 = vmul.f32 %v2817, 1.442695
    %v2819 = vpow.pop %v2818
    %v2820 = vadd.f32 %v2819, 1.0
    %v2821 = vrcp.pop %v2820
    %v2822 = vmul.f32 1.0, %v2821
    %v2823 = vxor.u32 %v2814, 2147483648
    %v2824 = vmul.f32 %v2823, 1.442695
    %v2825 = vpow.pop %v2824
    %v2826 = vadd.f32 %v2825, 1.0
    %v2827 = vrcp.pop %v2826
    %v2828 = vmul.f32 1.0, %v2827
    %v2829 = vtanh.pop %v2815
    %v2830 = vxor.u32 %v2816, 2147483648
    %v2831 = vmul.f32 %v2830, 1.442695
    %v2832 = vpow.pop %v2831
    %v2833 = vadd.f32 %v2832, 1.0
    %v2834 = vrcp.pop %v2833
    %v2835 = vmul.f32 1.0, %v2834
    %v2837 = vrot.slane %v2653, 6
    %v2839 = vmul.f32 %v2828, %v2837
    %v2840 = vmul.f32 %v2822, %v2829
    %v2841 = vadd.f32 %v2839, %v2840
    %v2842 = vtanh.pop %v2841
    %v2843 = vmul.f32 %v2835, %v2842
    %v2845 = vrot.slane %v2843, 6
    %2847 = vmatprep.subr.mxu0 %v1934
    %2848 = vmatpush1.msra.mxu0 %v1933
    %2849 = vmatprep.subr.mxu0 %v1930
    %2850 = vmatpush1.msra.mxu0 %v1929
    %2851 = vmatprep.subr.mxu0 %v1926
    %2852 = vmatpush1.msra.mxu0 %v1925
    %2853 = vmatprep.subr.mxu0 %v1922
    %2854 = vmatpush1.msra.mxu0 %v1921
    %2855 = vmatprep.subr.mxu0 %v1918
    %2856 = vmatpush1.msra.mxu0 %v1917
    %2857 = vmatprep.subr.mxu0 %v1914
    %2858 = vmatpush1.msra.mxu0 %v1913
    %2859 = vmatprep.subr.mxu0 %v1910
    %2860 = vmatpush1.msra.mxu0 %v1909
    %2861 = vmatprep.subr.mxu0 %v1906
    %2862 = vmatpush1.msra.mxu0 %v1905
    %2863 = vmatprep.subr.mxu0 %v1902
    %2864 = vmatpush1.msra.mxu0 %v1901
    %2865 = vmatprep.subr.mxu0 %v1898
    %2866 = vmatpush1.msra.mxu0 %v1897
    %2867 = vmatprep.subr.mxu0 %v1894
    %2868 = vmatpush1.msra.mxu0 %v1893
    %2869 = vmatprep.subr.mxu0 %v1890
    %2870 = vmatpush1.msra.mxu0 %v1889
    %2871 = vmatprep.subr.mxu0 %v1886
    %2872 = vmatpush1.msra.mxu0 %v1885
    %2873 = vmatprep.subr.mxu0 %v1882
    %2874 = vmatpush1.msra.mxu0 %v1881
    %2875 = vmatprep.subr.mxu0 %v1878
    %2876 = vmatpush1.msra.mxu0 %v1877
    %2877 = vmatprep.subr.mxu0 %v1874
    %2878 = vmatpush1.msra.mxu0 %v1873
    %2879 = vmatprep.subr.mxu0 0.0
    %2880 = vmatpush2.msra.mxu0 0.0
    %2881 = vmatprep.subr.mxu0 0.0
    %2882 = vmatpush2.msra.mxu0 0.0
    %2883 = vmatprep.subr.mxu0 0.0
    %2884 = vmatpush2.msra.mxu0 0.0
    %2885 = vmatprep.subr.mxu0 0.0
    %2886 = vmatpush2.msra.mxu0 0.0
    %2887 = vmatprep.subr.mxu0 0.0
    %2888 = vmatpush2.msra.mxu0 0.0
    %2889 = vmatprep.subr.mxu0 0.0
    %2890 = vmatpush2.msra.mxu0 0.0
    %2891 = vmatprep.subr.mxu0 0.0
    %2892 = vmatpush2.msra.mxu0 0.0
    %2893 = vmatprep.subr.mxu0 0.0
    %2894 = vmatpush2.msra.mxu0 0.0
    %2895 = vmatprep.subr.mxu0 0.0
    %2896 = vmatpush2.msra.mxu0 0.0
    %2897 = vmatprep.subr.mxu0 0.0
    %2898 = vmatpush2.msra.mxu0 0.0
    %2899 = vmatprep.subr.mxu0 0.0
    %2900 = vmatpush2.msra.mxu0 0.0
    %2901 = vmatprep.subr.mxu0 0.0
    %2902 = vmatpush2.msra.mxu0 0.0
    %2903 = vmatprep.subr.mxu0 0.0
    %2904 = vmatpush2.msra.mxu0 0.0
    %2905 = vmatprep.subr.mxu0 0.0
    %2906 = vmatpush2.msra.mxu0 0.0
    %2907 = vmatprep.subr.mxu0 0.0
    %2908 = vmatpush2.msra.mxu0 0.0
    %2909 = vmatprep.subr.mxu0 0.0
    %2910 = vmatpush2.msra.mxu0 0.0
    %2911 = vmatprep.mubr.f32.mxu0 0.0
    %2912 = vmatmul.mubr.f32.gmra.mxu0 %v2845
    %v2913 = vpop.f32.mrf.mxu0
    %v2914 = vadd.f32 0.0, %v2913
    %v2915 = vpop.f32.mrf.mxu0
    %v2916 = vadd.f32 0.0, %v2915
    %2917 = vdwg.mxu0
    %2918 = vmatprep.subr.mxu0 %v1936
    %2919 = vmatpush1.msra.mxu0 %v1935
    %2920 = vmatprep.subr.mxu0 %v1932
    %2921 = vmatpush1.msra.mxu0 %v1931
    %2922 = vmatprep.subr.mxu0 %v1928
    %2923 = vmatpush1.msra.mxu0 %v1927
    %2924 = vmatprep.subr.mxu0 %v1924
    %2925 = vmatpush1.msra.mxu0 %v1923
    %2926 = vmatprep.subr.mxu0 %v1920
    %2927 = vmatpush1.msra.mxu0 %v1919
    %2928 = vmatprep.subr.mxu0 %v1916
    %2929 = vmatpush1.msra.mxu0 %v1915
    %2930 = vmatprep.subr.mxu0 %v1912
    %2931 = vmatpush1.msra.mxu0 %v1911
    %2932 = vmatprep.subr.mxu0 %v1908
    %2933 = vmatpush1.msra.mxu0 %v1907
    %2934 = vmatprep.subr.mxu0 %v1904
    %2935 = vmatpush1.msra.mxu0 %v1903
    %2936 = vmatprep.subr.mxu0 %v1900
    %2937 = vmatpush1.msra.mxu0 %v1899
    %2938 = vmatprep.subr.mxu0 %v1896
    %2939 = vmatpush1.msra.mxu0 %v1895
    %2940 = vmatprep.subr.mxu0 %v1892
    %2941 = vmatpush1.msra.mxu0 %v1891
    %2942 = vmatprep.subr.mxu0 %v1888
    %2943 = vmatpush1.msra.mxu0 %v1887
    %2944 = vmatprep.subr.mxu0 %v1884
    %2945 = vmatpush1.msra.mxu0 %v1883
    %2946 = vmatprep.subr.mxu0 %v1880
    %2947 = vmatpush1.msra.mxu0 %v1879
    %2948 = vmatprep.subr.mxu0 %v1876
    %2949 = vmatpush1.msra.mxu0 %v1875
    %2950 = vmatprep.subr.mxu0 0.0
    %2951 = vmatpush2.msra.mxu0 0.0
    %2952 = vmatprep.subr.mxu0 0.0
    %2953 = vmatpush2.msra.mxu0 0.0
    %2954 = vmatprep.subr.mxu0 0.0
    %2955 = vmatpush2.msra.mxu0 0.0
    %2956 = vmatprep.subr.mxu0 0.0
    %2957 = vmatpush2.msra.mxu0 0.0
    %2958 = vmatprep.subr.mxu0 0.0
    %2959 = vmatpush2.msra.mxu0 0.0
    %2960 = vmatprep.subr.mxu0 0.0
    %2961 = vmatpush2.msra.mxu0 0.0
    %2962 = vmatprep.subr.mxu0 0.0
    %2963 = vmatpush2.msra.mxu0 0.0
    %2964 = vmatprep.subr.mxu0 0.0
    %2965 = vmatpush2.msra.mxu0 0.0
    %2966 = vmatprep.subr.mxu0 0.0
    %2967 = vmatpush2.msra.mxu0 0.0
    %2968 = vmatprep.subr.mxu0 0.0
    %2969 = vmatpush2.msra.mxu0 0.0
    %2970 = vmatprep.subr.mxu0 0.0
    %2971 = vmatpush2.msra.mxu0 0.0
    %2972 = vmatprep.subr.mxu0 0.0
    %2973 = vmatpush2.msra.mxu0 0.0
    %2974 = vmatprep.subr.mxu0 0.0
    %2975 = vmatpush2.msra.mxu0 0.0
    %2976 = vmatprep.subr.mxu0 0.0
    %2977 = vmatpush2.msra.mxu0 0.0
    %2978 = vmatprep.subr.mxu0 0.0
    %2979 = vmatpush2.msra.mxu0 0.0
    %2980 = vmatprep.subr.mxu0 0.0
    %2981 = vmatpush2.msra.mxu0 0.0
    %2982 = vmatprep.mubr.f32.mxu0 0.0
    %2983 = vmatmul.mubr.f32.gmra.mxu0 %v2845
    %v2984 = vpop.f32.mrf.mxu0
    %v2985 = vadd.f32 0.0, %v2984
    %v2986 = vpop.f32.mrf.mxu0
    %v2987 = vadd.f32 0.0, %v2986
    %2988 = vdwg.mxu0
    %v2989 = vadd.f32 %v2032, %v2914
    %v2990 = vadd.f32 %v2034, %v2916
    %v2991 = vadd.f32 %v2109, %v2985
    %v2992 = vadd.f32 %v2111, %v2987
    %v2993 = vxor.u32 %v2989, 2147483648
    %v2994 = vmul.f32 %v2993, 1.442695
    %v2995 = vpow.pop %v2994
    %v2996 = vadd.f32 %v2995, 1.0
    %v2997 = vrcp.pop %v2996
    %v2998 = vmul.f32 1.0, %v2997
    %v2999 = vxor.u32 %v2990, 2147483648
    %v3000 = vmul.f32 %v2999, 1.442695
    %v3001 = vpow.pop %v3000
    %v3002 = vadd.f32 %v3001, 1.0
    %v3003 = vrcp.pop %v3002
    %v3004 = vmul.f32 1.0, %v3003
    %v3005 = vtanh.pop %v2991
    %v3006 = vxor.u32 %v2992, 2147483648
    %v3007 = vmul.f32 %v3006, 1.442695
    %v3008 = vpow.pop %v3007
    %v3009 = vadd.f32 %v3008, 1.0
    %v3010 = vrcp.pop %v3009
    %v3011 = vmul.f32 1.0, %v3010
    %v3013 = vrot.slane %v2841, 6
    %v3015 = vmul.f32 %v3004, %v3013
    %v3016 = vmul.f32 %v2998, %v3005
    %v3017 = vadd.f32 %v3015, %v3016
    %v3018 = vtanh.pop %v3017
    %v3019 = vmul.f32 %v3011, %v3018
    %3020 = vmatprep.subr.mxu0 %v1934
    %3021 = vmatpush1.msra.mxu0 %v1933
    %3022 = vmatprep.subr.mxu0 %v1930
    %3023 = vmatpush1.msra.mxu0 %v1929
    %3024 = vmatprep.subr.mxu0 %v1926
    %3025 = vmatpush1.msra.mxu0 %v1925
    %3026 = vmatprep.subr.mxu0 %v1922
    %3027 = vmatpush1.msra.mxu0 %v1921
    %3028 = vmatprep.subr.mxu0 %v1918
    %3029 = vmatpush1.msra.mxu0 %v1917
    %3030 = vmatprep.subr.mxu0 %v1914
    %3031 = vmatpush1.msra.mxu0 %v1913
    %3032 = vmatprep.subr.mxu0 %v1910
    %3033 = vmatpush1.msra.mxu0 %v1909
    %3034 = vmatprep.subr.mxu0 %v1906
    %3035 = vmatpush1.msra.mxu0 %v1905
    %3036 = vmatprep.subr.mxu0 %v1902
    %3037 = vmatpush1.msra.mxu0 %v1901
    %3038 = vmatprep.subr.mxu0 %v1898
    %3039 = vmatpush1.msra.mxu0 %v1897
    %3040 = vmatprep.subr.mxu0 %v1894
    %3041 = vmatpush1.msra.mxu0 %v1893
    %3042 = vmatprep.subr.mxu0 %v1890
    %3043 = vmatpush1.msra.mxu0 %v1889
    %3044 = vmatprep.subr.mxu0 %v1886
    %3045 = vmatpush1.msra.mxu0 %v1885
    %3046 = vmatprep.subr.mxu0 %v1882
    %3047 = vmatpush1.msra.mxu0 %v1881
    %3048 = vmatprep.subr.mxu0 %v1878
    %3049 = vmatpush1.msra.mxu0 %v1877
    %3050 = vmatprep.subr.mxu0 %v1874
    %3051 = vmatpush1.msra.mxu0 %v1873
    %3052 = vmatprep.subr.mxu0 0.0
    %3053 = vmatpush2.msra.mxu0 0.0
    %3054 = vmatprep.subr.mxu0 0.0
    %3055 = vmatpush2.msra.mxu0 0.0
    %3056 = vmatprep.subr.mxu0 0.0
    %3057 = vmatpush2.msra.mxu0 0.0
    %3058 = vmatprep.subr.mxu0 0.0
    %3059 = vmatpush2.msra.mxu0 0.0
    %3060 = vmatprep.subr.mxu0 0.0
    %3061 = vmatpush2.msra.mxu0 0.0
    %3062 = vmatprep.subr.mxu0 0.0
    %3063 = vmatpush2.msra.mxu0 0.0
    %3064 = vmatprep.subr.mxu0 0.0
    %3065 = vmatpush2.msra.mxu0 0.0
    %3066 = vmatprep.subr.mxu0 0.0
    %3067 = vmatpush2.msra.mxu0 0.0
    %3068 = vmatprep.subr.mxu0 0.0
    %3069 = vmatpush2.msra.mxu0 0.0
    %3070 = vmatprep.subr.mxu0 0.0
    %3071 = vmatpush2.msra.mxu0 0.0
    %3072 = vmatprep.subr.mxu0 0.0
    %3073 = vmatpush2.msra.mxu0 0.0
    %3074 = vmatprep.subr.mxu0 0.0
    %3075 = vmatpush2.msra.mxu0 0.0
    %3076 = vmatprep.subr.mxu0 0.0
    %3077 = vmatpush2.msra.mxu0 0.0
    %3078 = vmatprep.subr.mxu0 0.0
    %3079 = vmatpush2.msra.mxu0 0.0
    %3080 = vmatprep.subr.mxu0 0.0
    %3081 = vmatpush2.msra.mxu0 0.0
    %3082 = vmatprep.subr.mxu0 0.0
    %3083 = vmatpush2.msra.mxu0 0.0
    %3084 = vmatprep.mubr.f32.mxu0 0.0
    %3085 = vmatmul.mubr.f32.gmra.mxu0 %v3019
    %v3086 = vpop.f32.mrf.mxu0
    %v3087 = vadd.f32 0.0, %v3086
    %v3088 = vpop.f32.mrf.mxu0
    %v3089 = vadd.f32 0.0, %v3088
    %3090 = vdwg.mxu0
    %3091 = vmatprep.subr.mxu0 %v1936
    %3092 = vmatpush1.msra.mxu0 %v1935
    %3093 = vmatprep.subr.mxu0 %v1932
    %3094 = vmatpush1.msra.mxu0 %v1931
    %3095 = vmatprep.subr.mxu0 %v1928
    %3096 = vmatpush1.msra.mxu0 %v1927
    %3097 = vmatprep.subr.mxu0 %v1924
    %3098 = vmatpush1.msra.mxu0 %v1923
    %3099 = vmatprep.subr.mxu0 %v1920
    %3100 = vmatpush1.msra.mxu0 %v1919
    %3101 = vmatprep.subr.mxu0 %v1916
    %3102 = vmatpush1.msra.mxu0 %v1915
    %3103 = vmatprep.subr.mxu0 %v1912
    %3104 = vmatpush1.msra.mxu0 %v1911
    %3105 = vmatprep.subr.mxu0 %v1908
    %3106 = vmatpush1.msra.mxu0 %v1907
    %3107 = vmatprep.subr.mxu0 %v1904
    %3108 = vmatpush1.msra.mxu0 %v1903
    %3109 = vmatprep.subr.mxu0 %v1900
    %3110 = vmatpush1.msra.mxu0 %v1899
    %3111 = vmatprep.subr.mxu0 %v1896
    %3112 = vmatpush1.msra.mxu0 %v1895
    %3113 = vmatprep.subr.mxu0 %v1892
    %3114 = vmatpush1.msra.mxu0 %v1891
    %3115 = vmatprep.subr.mxu0 %v1888
    %3116 = vmatpush1.msra.mxu0 %v1887
    %3117 = vmatprep.subr.mxu0 %v1884
    %3118 = vmatpush1.msra.mxu0 %v1883
    %3119 = vmatprep.subr.mxu0 %v1880
    %3120 = vmatpush1.msra.mxu0 %v1879
    %3121 = vmatprep.subr.mxu0 %v1876
    %3122 = vmatpush1.msra.mxu0 %v1875
    %3123 = vmatprep.subr.mxu0 0.0
    %3124 = vmatpush2.msra.mxu0 0.0
    %3125 = vmatprep.subr.mxu0 0.0
    %3126 = vmatpush2.msra.mxu0 0.0
    %3127 = vmatprep.subr.mxu0 0.0
    %3128 = vmatpush2.msra.mxu0 0.0
    %3129 = vmatprep.subr.mxu0 0.0
    %3130 = vmatpush2.msra.mxu0 0.0
    %3131 = vmatprep.subr.mxu0 0.0
    %3132 = vmatpush2.msra.mxu0 0.0
    %3133 = vmatprep.subr.mxu0 0.0
    %3134 = vmatpush2.msra.mxu0 0.0
    %3135 = vmatprep.subr.mxu0 0.0
    %3136 = vmatpush2.msra.mxu0 0.0
    %3137 = vmatprep.subr.mxu0 0.0
    %3138 = vmatpush2.msra.mxu0 0.0
    %3139 = vmatprep.subr.mxu0 0.0
    %3140 = vmatpush2.msra.mxu0 0.0
    %3141 = vmatprep.subr.mxu0 0.0
    %3142 = vmatpush2.msra.mxu0 0.0
    %3143 = vmatprep.subr.mxu0 0.0
    %3144 = vmatpush2.msra.mxu0 0.0
    %3145 = vmatprep.subr.mxu0 0.0
    %3146 = vmatpush2.msra.mxu0 0.0
    %3147 = vmatprep.subr.mxu0 0.0
    %3148 = vmatpush2.msra.mxu0 0.0
    %3149 = vmatprep.subr.mxu0 0.0
    %3150 = vmatpush2.msra.mxu0 0.0
    %3151 = vmatprep.subr.mxu0 0.0
    %3152 = vmatpush2.msra.mxu0 0.0
    %3153 = vmatprep.subr.mxu0 0.0
    %3154 = vmatpush2.msra.mxu0 0.0
    %3155 = vmatprep.mubr.f32.mxu0 0.0
    %3156 = vmatmul.mubr.f32.gmra.mxu0 %v3019
    %v3157 = vpop.f32.mrf.mxu0
    %v3158 = vadd.f32 0.0, %v3157
    %v3159 = vpop.f32.mrf.mxu0
    %v3160 = vadd.f32 0.0, %v3159
    %3161 = vdwg.mxu0
    %v3166 = vrot.slane %v3087, 6
    %v3167 = vrot.slane %v3089, 6
    %v3168 = vrot.slane %v3158, 6
    %v3169 = vrot.slane %v3160, 6
    %v3174 = vadd.f32 %v2032, %v3166
    %v3175 = vadd.f32 %v2034, %v3167
    %v3176 = vadd.f32 %v2109, %v3168
    %v3177 = vadd.f32 %v2111, %v3169
    %v3178 = vxor.u32 %v3174, 2147483648
    %v3179 = vmul.f32 %v3178, 1.442695
    %v3180 = vpow.pop %v3179
    %v3181 = vadd.f32 %v3180, 1.0
    %v3182 = vrcp.pop %v3181
    %v3183 = vmul.f32 1.0, %v3182
    %v3184 = vxor.u32 %v3175, 2147483648
    %v3185 = vmul.f32 %v3184, 1.442695
    %v3186 = vpow.pop %v3185
    %v3187 = vadd.f32 %v3186, 1.0
    %v3188 = vrcp.pop %v3187
    %v3189 = vmul.f32 1.0, %v3188
    %v3190 = vtanh.pop %v3176
    %v3191 = vxor.u32 %v3177, 2147483648
    %v3192 = vmul.f32 %v3191, 1.442695
    %v3193 = vpow.pop %v3192
    %v3194 = vadd.f32 %v3193, 1.0
    %v3195 = vrcp.pop %v3194
    %v3196 = vmul.f32 1.0, %v3195
    %v3198 = vrot.slane %v3017, 6
    %v3200 = vmul.f32 %v3189, %v3198
    %v3201 = vmul.f32 %v3183, %v3190
    %v3202 = vadd.f32 %v3200, %v3201
    %v3203 = vtanh.pop %v3202
    %v3204 = vmul.f32 %v3196, %v3203
    %v3206 = vrot.slane %v3204, 2
    %3208 = vmatprep.subr.mxu0 %v1934
    %3209 = vmatpush1.msra.mxu0 %v1933
    %3210 = vmatprep.subr.mxu0 %v1930
    %3211 = vmatpush1.msra.mxu0 %v1929
    %3212 = vmatprep.subr.mxu0 %v1926
    %3213 = vmatpush1.msra.mxu0 %v1925
    %3214 = vmatprep.subr.mxu0 %v1922
    %3215 = vmatpush1.msra.mxu0 %v1921
    %3216 = vmatprep.subr.mxu0 %v1918
    %3217 = vmatpush1.msra.mxu0 %v1917
    %3218 = vmatprep.subr.mxu0 %v1914
    %3219 = vmatpush1.msra.mxu0 %v1913
    %3220 = vmatprep.subr.mxu0 %v1910
    %3221 = vmatpush1.msra.mxu0 %v1909
    %3222 = vmatprep.subr.mxu0 %v1906
    %3223 = vmatpush1.msra.mxu0 %v1905
    %3224 = vmatprep.subr.mxu0 %v1902
    %3225 = vmatpush1.msra.mxu0 %v1901
    %3226 = vmatprep.subr.mxu0 %v1898
    %3227 = vmatpush1.msra.mxu0 %v1897
    %3228 = vmatprep.subr.mxu0 %v1894
    %3229 = vmatpush1.msra.mxu0 %v1893
    %3230 = vmatprep.subr.mxu0 %v1890
    %3231 = vmatpush1.msra.mxu0 %v1889
    %3232 = vmatprep.subr.mxu0 %v1886
    %3233 = vmatpush1.msra.mxu0 %v1885
    %3234 = vmatprep.subr.mxu0 %v1882
    %3235 = vmatpush1.msra.mxu0 %v1881
    %3236 = vmatprep.subr.mxu0 %v1878
    %3237 = vmatpush1.msra.mxu0 %v1877
    %3238 = vmatprep.subr.mxu0 %v1874
    %3239 = vmatpush1.msra.mxu0 %v1873
    %3240 = vmatprep.subr.mxu0 0.0
    %3241 = vmatpush2.msra.mxu0 0.0
    %3242 = vmatprep.subr.mxu0 0.0
    %3243 = vmatpush2.msra.mxu0 0.0
    %3244 = vmatprep.subr.mxu0 0.0
    %3245 = vmatpush2.msra.mxu0 0.0
    %3246 = vmatprep.subr.mxu0 0.0
    %3247 = vmatpush2.msra.mxu0 0.0
    %3248 = vmatprep.subr.mxu0 0.0
    %3249 = vmatpush2.msra.mxu0 0.0
    %3250 = vmatprep.subr.mxu0 0.0
    %3251 = vmatpush2.msra.mxu0 0.0
    %3252 = vmatprep.subr.mxu0 0.0
    %3253 = vmatpush2.msra.mxu0 0.0
    %3254 = vmatprep.subr.mxu0 0.0
    %3255 = vmatpush2.msra.mxu0 0.0
    %3256 = vmatprep.subr.mxu0 0.0
    %3257 = vmatpush2.msra.mxu0 0.0
    %3258 = vmatprep.subr.mxu0 0.0
    %3259 = vmatpush2.msra.mxu0 0.0
    %3260 = vmatprep.subr.mxu0 0.0
    %3261 = vmatpush2.msra.mxu0 0.0
    %3262 = vmatprep.subr.mxu0 0.0
    %3263 = vmatpush2.msra.mxu0 0.0
    %3264 = vmatprep.subr.mxu0 0.0
    %3265 = vmatpush2.msra.mxu0 0.0
    %3266 = vmatprep.subr.mxu0 0.0
    %3267 = vmatpush2.msra.mxu0 0.0
    %3268 = vmatprep.subr.mxu0 0.0
    %3269 = vmatpush2.msra.mxu0 0.0
    %3270 = vmatprep.subr.mxu0 0.0
    %3271 = vmatpush2.msra.mxu0 0.0
    %3272 = vmatprep.mubr.f32.mxu0 0.0
    %3273 = vmatmul.mubr.f32.gmra.mxu0 %v3206
    %v3274 = vpop.f32.mrf.mxu0
    %v3275 = vadd.f32 0.0, %v3274
    %v3276 = vpop.f32.mrf.mxu0
    %v3277 = vadd.f32 0.0, %v3276
    %3278 = vdwg.mxu0
    %3279 = vmatprep.subr.mxu0 %v1936
    %3280 = vmatpush1.msra.mxu0 %v1935
    %3281 = vmatprep.subr.mxu0 %v1932
    %3282 = vmatpush1.msra.mxu0 %v1931
    %3283 = vmatprep.subr.mxu0 %v1928
    %3284 = vmatpush1.msra.mxu0 %v1927
    %3285 = vmatprep.subr.mxu0 %v1924
    %3286 = vmatpush1.msra.mxu0 %v1923
    %3287 = vmatprep.subr.mxu0 %v1920
    %3288 = vmatpush1.msra.mxu0 %v1919
    %3289 = vmatprep.subr.mxu0 %v1916
    %3290 = vmatpush1.msra.mxu0 %v1915
    %3291 = vmatprep.subr.mxu0 %v1912
    %3292 = vmatpush1.msra.mxu0 %v1911
    %3293 = vmatprep.subr.mxu0 %v1908
    %3294 = vmatpush1.msra.mxu0 %v1907
    %3295 = vmatprep.subr.mxu0 %v1904
    %3296 = vmatpush1.msra.mxu0 %v1903
    %3297 = vmatprep.subr.mxu0 %v1900
    %3298 = vmatpush1.msra.mxu0 %v1899
    %3299 = vmatprep.subr.mxu0 %v1896
    %3300 = vmatpush1.msra.mxu0 %v1895
    %3301 = vmatprep.subr.mxu0 %v1892
    %3302 = vmatpush1.msra.mxu0 %v1891
    %3303 = vmatprep.subr.mxu0 %v1888
    %3304 = vmatpush1.msra.mxu0 %v1887
    %3305 = vmatprep.subr.mxu0 %v1884
    %3306 = vmatpush1.msra.mxu0 %v1883
    %3307 = vmatprep.subr.mxu0 %v1880
    %3308 = vmatpush1.msra.mxu0 %v1879
    %3309 = vmatprep.subr.mxu0 %v1876
    %3310 = vmatpush1.msra.mxu0 %v1875
    %3311 = vmatprep.subr.mxu0 0.0
    %3312 = vmatpush2.msra.mxu0 0.0
    %3313 = vmatprep.subr.mxu0 0.0
    %3314 = vmatpush2.msra.mxu0 0.0
    %3315 = vmatprep.subr.mxu0 0.0
    %3316 = vmatpush2.msra.mxu0 0.0
    %3317 = vmatprep.subr.mxu0 0.0
    %3318 = vmatpush2.msra.mxu0 0.0
    %3319 = vmatprep.subr.mxu0 0.0
    %3320 = vmatpush2.msra.mxu0 0.0
    %3321 = vmatprep.subr.mxu0 0.0
    %3322 = vmatpush2.msra.mxu0 0.0
    %3323 = vmatprep.subr.mxu0 0.0
    %3324 = vmatpush2.msra.mxu0 0.0
    %3325 = vmatprep.subr.mxu0 0.0
    %3326 = vmatpush2.msra.mxu0 0.0
    %3327 = vmatprep.subr.mxu0 0.0
    %3328 = vmatpush2.msra.mxu0 0.0
    %3329 = vmatprep.subr.mxu0 0.0
    %3330 = vmatpush2.msra.mxu0 0.0
    %3331 = vmatprep.subr.mxu0 0.0
    %3332 = vmatpush2.msra.mxu0 0.0
    %3333 = vmatprep.subr.mxu0 0.0
    %3334 = vmatpush2.msra.mxu0 0.0
    %3335 = vmatprep.subr.mxu0 0.0
    %3336 = vmatpush2.msra.mxu0 0.0
    %3337 = vmatprep.subr.mxu0 0.0
    %3338 = vmatpush2.msra.mxu0 0.0
    %3339 = vmatprep.subr.mxu0 0.0
    %3340 = vmatpush2.msra.mxu0 0.0
    %3341 = vmatprep.subr.mxu0 0.0
    %3342 = vmatpush2.msra.mxu0 0.0
    %3343 = vmatprep.mubr.f32.mxu0 0.0
    %3344 = vmatmul.mubr.f32.gmra.mxu0 %v3206
    %v3345 = vpop.f32.mrf.mxu0
    %v3346 = vadd.f32 0.0, %v3345
    %v3347 = vpop.f32.mrf.mxu0
    %v3348 = vadd.f32 0.0, %v3347
    %3349 = vdwg.mxu0
    %v3354 = vrot.slane %v3275, 4
    %v3355 = vrot.slane %v3277, 4
    %v3356 = vrot.slane %v3346, 4
    %v3357 = vrot.slane %v3348, 4
    %v3362 = vadd.f32 %v2032, %v3354
    %v3363 = vadd.f32 %v2034, %v3355
    %v3364 = vadd.f32 %v2109, %v3356
    %v3365 = vadd.f32 %v2111, %v3357
    %v3366 = vxor.u32 %v3362, 2147483648
    %v3367 = vmul.f32 %v3366, 1.442695
    %v3368 = vpow.pop %v3367
    %v3369 = vadd.f32 %v3368, 1.0
    %v3370 = vrcp.pop %v3369
    %v3371 = vmul.f32 1.0, %v3370
    %v3372 = vxor.u32 %v3363, 2147483648
    %v3373 = vmul.f32 %v3372, 1.442695
    %v3374 = vpow.pop %v3373
    %v3375 = vadd.f32 %v3374, 1.0
    %v3376 = vrcp.pop %v3375
    %v3377 = vmul.f32 1.0, %v3376
    %v3378 = vtanh.pop %v3364
    %v3379 = vxor.u32 %v3365, 2147483648
    %v3380 = vmul.f32 %v3379, 1.442695
    %v3381 = vpow.pop %v3380
    %v3382 = vadd.f32 %v3381, 1.0
    %v3383 = vrcp.pop %v3382
    %v3384 = vmul.f32 1.0, %v3383
    %v3386 = vrot.slane %v3202, 6
    %v3388 = vmul.f32 %v3377, %v3386
    %v3389 = vmul.f32 %v3371, %v3378
    %v3390 = vadd.f32 %v3388, %v3389
    %v3391 = vtanh.pop %v3390
    %v3392 = vmul.f32 %v3384, %v3391
    %v3394 = vrot.slane %v3392, 4
    %3396 = vmatprep.subr.mxu0 %v1934
    %3397 = vmatpush1.msra.mxu0 %v1933
    %3398 = vmatprep.subr.mxu0 %v1930
    %3399 = vmatpush1.msra.mxu0 %v1929
    %3400 = vmatprep.subr.mxu0 %v1926
    %3401 = vmatpush1.msra.mxu0 %v1925
    %3402 = vmatprep.subr.mxu0 %v1922
    %3403 = vmatpush1.msra.mxu0 %v1921
    %3404 = vmatprep.subr.mxu0 %v1918
    %3405 = vmatpush1.msra.mxu0 %v1917
    %3406 = vmatprep.subr.mxu0 %v1914
    %3407 = vmatpush1.msra.mxu0 %v1913
    %3408 = vmatprep.subr.mxu0 %v1910
    %3409 = vmatpush1.msra.mxu0 %v1909
    %3410 = vmatprep.subr.mxu0 %v1906
    %3411 = vmatpush1.msra.mxu0 %v1905
    %3412 = vmatprep.subr.mxu0 %v1902
    %3413 = vmatpush1.msra.mxu0 %v1901
    %3414 = vmatprep.subr.mxu0 %v1898
    %3415 = vmatpush1.msra.mxu0 %v1897
    %3416 = vmatprep.subr.mxu0 %v1894
    %3417 = vmatpush1.msra.mxu0 %v1893
    %3418 = vmatprep.subr.mxu0 %v1890
    %3419 = vmatpush1.msra.mxu0 %v1889
    %3420 = vmatprep.subr.mxu0 %v1886
    %3421 = vmatpush1.msra.mxu0 %v1885
    %3422 = vmatprep.subr.mxu0 %v1882
    %3423 = vmatpush1.msra.mxu0 %v1881
    %3424 = vmatprep.subr.mxu0 %v1878
    %3425 = vmatpush1.msra.mxu0 %v1877
    %3426 = vmatprep.subr.mxu0 %v1874
    %3427 = vmatpush1.msra.mxu0 %v1873
    %3428 = vmatprep.subr.mxu0 0.0
    %3429 = vmatpush2.msra.mxu0 0.0
    %3430 = vmatprep.subr.mxu0 0.0
    %3431 = vmatpush2.msra.mxu0 0.0
    %3432 = vmatprep.subr.mxu0 0.0
    %3433 = vmatpush2.msra.mxu0 0.0
    %3434 = vmatprep.subr.mxu0 0.0
    %3435 = vmatpush2.msra.mxu0 0.0
    %3436 = vmatprep.subr.mxu0 0.0
    %3437 = vmatpush2.msra.mxu0 0.0
    %3438 = vmatprep.subr.mxu0 0.0
    %3439 = vmatpush2.msra.mxu0 0.0
    %3440 = vmatprep.subr.mxu0 0.0
    %3441 = vmatpush2.msra.mxu0 0.0
    %3442 = vmatprep.subr.mxu0 0.0
    %3443 = vmatpush2.msra.mxu0 0.0
    %3444 = vmatprep.subr.mxu0 0.0
    %3445 = vmatpush2.msra.mxu0 0.0
    %3446 = vmatprep.subr.mxu0 0.0
    %3447 = vmatpush2.msra.mxu0 0.0
    %3448 = vmatprep.subr.mxu0 0.0
    %3449 = vmatpush2.msra.mxu0 0.0
    %3450 = vmatprep.subr.mxu0 0.0
    %3451 = vmatpush2.msra.mxu0 0.0
    %3452 = vmatprep.subr.mxu0 0.0
    %3453 = vmatpush2.msra.mxu0 0.0
    %3454 = vmatprep.subr.mxu0 0.0
    %3455 = vmatpush2.msra.mxu0 0.0
    %3456 = vmatprep.subr.mxu0 0.0
    %3457 = vmatpush2.msra.mxu0 0.0
    %3458 = vmatprep.subr.mxu0 0.0
    %3459 = vmatpush2.msra.mxu0 0.0
    %3460 = vmatprep.mubr.f32.mxu0 0.0
    %3461 = vmatmul.mubr.f32.gmra.mxu0 %v3394
    %v3462 = vpop.f32.mrf.mxu0
    %v3463 = vadd.f32 0.0, %v3462
    %v3464 = vpop.f32.mrf.mxu0
    %v3465 = vadd.f32 0.0, %v3464
    %3466 = vdwg.mxu0
    %3467 = vmatprep.subr.mxu0 %v1936
    %3468 = vmatpush1.msra.mxu0 %v1935
    %3469 = vmatprep.subr.mxu0 %v1932
    %3470 = vmatpush1.msra.mxu0 %v1931
    %3471 = vmatprep.subr.mxu0 %v1928
    %3472 = vmatpush1.msra.mxu0 %v1927
    %3473 = vmatprep.subr.mxu0 %v1924
    %3474 = vmatpush1.msra.mxu0 %v1923
    %3475 = vmatprep.subr.mxu0 %v1920
    %3476 = vmatpush1.msra.mxu0 %v1919
    %3477 = vmatprep.subr.mxu0 %v1916
    %3478 = vmatpush1.msra.mxu0 %v1915
    %3479 = vmatprep.subr.mxu0 %v1912
    %3480 = vmatpush1.msra.mxu0 %v1911
    %3481 = vmatprep.subr.mxu0 %v1908
    %3482 = vmatpush1.msra.mxu0 %v1907
    %3483 = vmatprep.subr.mxu0 %v1904
    %3484 = vmatpush1.msra.mxu0 %v1903
    %3485 = vmatprep.subr.mxu0 %v1900
    %3486 = vmatpush1.msra.mxu0 %v1899
    %3487 = vmatprep.subr.mxu0 %v1896
    %3488 = vmatpush1.msra.mxu0 %v1895
    %3489 = vmatprep.subr.mxu0 %v1892
    %3490 = vmatpush1.msra.mxu0 %v1891
    %3491 = vmatprep.subr.mxu0 %v1888
    %3492 = vmatpush1.msra.mxu0 %v1887
    %3493 = vmatprep.subr.mxu0 %v1884
    %3494 = vmatpush1.msra.mxu0 %v1883
    %3495 = vmatprep.subr.mxu0 %v1880
    %3496 = vmatpush1.msra.mxu0 %v1879
    %3497 = vmatprep.subr.mxu0 %v1876
    %3498 = vmatpush1.msra.mxu0 %v1875
    %3499 = vmatprep.subr.mxu0 0.0
    %3500 = vmatpush2.msra.mxu0 0.0
    %3501 = vmatprep.subr.mxu0 0.0
    %3502 = vmatpush2.msra.mxu0 0.0
    %3503 = vmatprep.subr.mxu0 0.0
    %3504 = vmatpush2.msra.mxu0 0.0
    %3505 = vmatprep.subr.mxu0 0.0
    %3506 = vmatpush2.msra.mxu0 0.0
    %3507 = vmatprep.subr.mxu0 0.0
    %3508 = vmatpush2.msra.mxu0 0.0
    %3509 = vmatprep.subr.mxu0 0.0
    %3510 = vmatpush2.msra.mxu0 0.0
    %3511 = vmatprep.subr.mxu0 0.0
    %3512 = vmatpush2.msra.mxu0 0.0
    %3513 = vmatprep.subr.mxu0 0.0
    %3514 = vmatpush2.msra.mxu0 0.0
    %3515 = vmatprep.subr.mxu0 0.0
    %3516 = vmatpush2.msra.mxu0 0.0
    %3517 = vmatprep.subr.mxu0 0.0
    %3518 = vmatpush2.msra.mxu0 0.0
    %3519 = vmatprep.subr.mxu0 0.0
    %3520 = vmatpush2.msra.mxu0 0.0
    %3521 = vmatprep.subr.mxu0 0.0
    %3522 = vmatpush2.msra.mxu0 0.0
    %3523 = vmatprep.subr.mxu0 0.0
    %3524 = vmatpush2.msra.mxu0 0.0
    %3525 = vmatprep.subr.mxu0 0.0
    %3526 = vmatpush2.msra.mxu0 0.0
    %3527 = vmatprep.subr.mxu0 0.0
    %3528 = vmatpush2.msra.mxu0 0.0
    %3529 = vmatprep.subr.mxu0 0.0
    %3530 = vmatpush2.msra.mxu0 0.0
    %3531 = vmatprep.mubr.f32.mxu0 0.0
    %3532 = vmatmul.mubr.f32.gmra.mxu0 %v3394
    %v3533 = vpop.f32.mrf.mxu0
    %v3534 = vadd.f32 0.0, %v3533
    %v3535 = vpop.f32.mrf.mxu0
    %v3536 = vadd.f32 0.0, %v3535
    %3537 = vdwg.mxu0
    %v3542 = vrot.slane %v3463, 2
    %v3543 = vrot.slane %v3465, 2
    %v3544 = vrot.slane %v3534, 2
    %v3545 = vrot.slane %v3536, 2
    %v3550 = vadd.f32 %v2032, %v3542
    %v3551 = vadd.f32 %v2034, %v3543
    %v3552 = vadd.f32 %v2109, %v3544
    %v3553 = vadd.f32 %v2111, %v3545
    %v3554 = vxor.u32 %v3550, 2147483648
    %v3555 = vmul.f32 %v3554, 1.442695
    %v3556 = vpow.pop %v3555
    %v3557 = vadd.f32 %v3556, 1.0
    %v3558 = vrcp.pop %v3557
    %v3559 = vmul.f32 1.0, %v3558
    %v3560 = vxor.u32 %v3551, 2147483648
    %v3561 = vmul.f32 %v3560, 1.442695
    %v3562 = vpow.pop %v3561
    %v3563 = vadd.f32 %v3562, 1.0
    %v3564 = vrcp.pop %v3563
    %v3565 = vmul.f32 1.0, %v3564
    %v3566 = vtanh.pop %v3552
    %v3567 = vxor.u32 %v3553, 2147483648
    %v3568 = vmul.f32 %v3567, 1.442695
    %v3569 = vpow.pop %v3568
    %v3570 = vadd.f32 %v3569, 1.0
    %v3571 = vrcp.pop %v3570
    %v3572 = vmul.f32 1.0, %v3571
    %v3574 = vrot.slane %v3390, 6
    %v3576 = vmul.f32 %v3565, %v3574
    %v3577 = vmul.f32 %v3559, %v3566
    %v3578 = vadd.f32 %v3576, %v3577
    %v3579 = vtanh.pop %v3578
    %v3580 = vmul.f32 %v3572, %v3579
    %v3581 = vld [vmem:[%s7] sm:$0xff]
    %v3582 = vld [vmem:[%s7 + $0x8] sm:$0xff]
    %v3583 = vld [vmem:[%s7 + $0x10] sm:$0xff]
    %v3584 = vld [vmem:[%s7 + $0x18] sm:$0xff]
    %v3585 = vld [vmem:[%s7 + $0x20] sm:$0xff]
    %v3586 = vld [vmem:[%s7 + $0x28] sm:$0xff]
    %v3587 = vld [vmem:[%s7 + $0x30] sm:$0xff]
    %v3588 = vld [vmem:[%s7 + $0x38] sm:$0xff]
    %v3589 = vld [vmem:[%s7 + $0x40] sm:$0xff]
    %v3590 = vld [vmem:[%s7 + $0x48] sm:$0xff]
    %v3591 = vld [vmem:[%s7 + $0x50] sm:$0xff]
    %v3592 = vld [vmem:[%s7 + $0x58] sm:$0xff]
    %v3593 = vld [vmem:[%s7 + $0x60] sm:$0xff]
    %v3594 = vld [vmem:[%s7 + $0x68] sm:$0xff]
    %v3595 = vld [vmem:[%s7 + $0x70] sm:$0xff]
    %v3596 = vld [vmem:[%s7 + $0x78] sm:$0xff]
    %v3597 = vld [vmem:[%s8] sm:$0x1]
    %v3599 = vlaneseq
    %v3600 = vshrl.u32 %v3599, 7
    %v3601 = vsub.s32 0, %v3600
    %v3602 = vrot.slane %v3597, %v3601
    %v3605 = vrot.slane %v3580, 6
    %3607 = vmatprep.subr.mxu0 0.0
    %3608 = vmatpush1.msra.mxu0 %v3596
    %3609 = vmatprep.subr.mxu0 0.0
    %3610 = vmatpush1.msra.mxu0 %v3595
    %3611 = vmatprep.subr.mxu0 0.0
    %3612 = vmatpush1.msra.mxu0 %v3594
    %3613 = vmatprep.subr.mxu0 0.0
    %3614 = vmatpush1.msra.mxu0 %v3593
    %3615 = vmatprep.subr.mxu0 0.0
    %3616 = vmatpush1.msra.mxu0 %v3592
    %3617 = vmatprep.subr.mxu0 0.0
    %3618 = vmatpush1.msra.mxu0 %v3591
    %3619 = vmatprep.subr.mxu0 0.0
    %3620 = vmatpush1.msra.mxu0 %v3590
    %3621 = vmatprep.subr.mxu0 0.0
    %3622 = vmatpush1.msra.mxu0 %v3589
    %3623 = vmatprep.subr.mxu0 0.0
    %3624 = vmatpush1.msra.mxu0 %v3588
    %3625 = vmatprep.subr.mxu0 0.0
    %3626 = vmatpush1.msra.mxu0 %v3587
    %3627 = vmatprep.subr.mxu0 0.0
    %3628 = vmatpush1.msra.mxu0 %v3586
    %3629 = vmatprep.subr.mxu0 0.0
    %3630 = vmatpush1.msra.mxu0 %v3585
    %3631 = vmatprep.subr.mxu0 0.0
    %3632 = vmatpush1.msra.mxu0 %v3584
    %3633 = vmatprep.subr.mxu0 0.0
    %3634 = vmatpush1.msra.mxu0 %v3583
    %3635 = vmatprep.subr.mxu0 0.0
    %3636 = vmatpush1.msra.mxu0 %v3582
    %3637 = vmatprep.subr.mxu0 0.0
    %3638 = vmatpush1.msra.mxu0 %v3581
    %3639 = vmatprep.subr.mxu0 0.0
    %3640 = vmatpush2.msra.mxu0 0.0
    %3641 = vmatprep.subr.mxu0 0.0
    %3642 = vmatpush2.msra.mxu0 0.0
    %3643 = vmatprep.subr.mxu0 0.0
    %3644 = vmatpush2.msra.mxu0 0.0
    %3645 = vmatprep.subr.mxu0 0.0
    %3646 = vmatpush2.msra.mxu0 0.0
    %3647 = vmatprep.subr.mxu0 0.0
    %3648 = vmatpush2.msra.mxu0 0.0
    %3649 = vmatprep.subr.mxu0 0.0
    %3650 = vmatpush2.msra.mxu0 0.0
    %3651 = vmatprep.subr.mxu0 0.0
    %3652 = vmatpush2.msra.mxu0 0.0
    %3653 = vmatprep.subr.mxu0 0.0
    %3654 = vmatpush2.msra.mxu0 0.0
    %3655 = vmatprep.subr.mxu0 0.0
    %3656 = vmatpush2.msra.mxu0 0.0
    %3657 = vmatprep.subr.mxu0 0.0
    %3658 = vmatpush2.msra.mxu0 0.0
    %3659 = vmatprep.subr.mxu0 0.0
    %3660 = vmatpush2.msra.mxu0 0.0
    %3661 = vmatprep.subr.mxu0 0.0
    %3662 = vmatpush2.msra.mxu0 0.0
    %3663 = vmatprep.subr.mxu0 0.0
    %3664 = vmatpush2.msra.mxu0 0.0
    %3665 = vmatprep.subr.mxu0 0.0
    %3666 = vmatpush2.msra.mxu0 0.0
    %3667 = vmatprep.subr.mxu0 0.0
    %3668 = vmatpush2.msra.mxu0 0.0
    %3669 = vmatprep.subr.mxu0 0.0
    %3670 = vmatpush2.msra.mxu0 0.0
    %3671 = vmatprep.mubr.f32.mxu0 0.0
    %3672 = vmatmul.mubr.f32.gmra.mxu0 %v3605
    %v3673 = vpop.f32.mrf.mxu0
    %v3674 = vadd.f32 %v3602, %v3673
    %v3675 = vpop.f32.mrf.mxu0
    %3676 = vdwg.mxu0
    %vm3677 = vcmask 25600
    %3678 = vst.msk [vmem:[#allocation9] sm:$0x3] %vm3677, %v3674
    // Predicated region
    $region50: #{fused_lstm_forward.1} parent=1 // pred_check
      _
    $region51: #{fused_lstm_forward.1} parent=1 // pred_check_branch
      %3680 = sbr.rel (0) target = $region53
    $region52: #{fused_lstm_forward.1} parent=1 // pred_region
      %s3682 = ssub.s32 32, 32
      %3683 = vsyncadd [#allocation5], %s3682
      %s3685 = sshll.u32 [#allocation9], 4
      %s3686 = int_to_ptr.vmem [resolvable:$true] %s3685
      %3688 = dma.vmem_to_hbm [thread:$0]  %s3686, 32, %s9, [#allocation5]
    $region53: #{fused_lstm_forward.1} parent=1 // pred_fallthru
      _
    // Predicated region
    $region54: #{fused_lstm_forward.1} parent=1 // pred_check
      _
    $region55: #{fused_lstm_forward.1} parent=1 // pred_check_branch
      %3690 = sbr.rel (0) target = $region57
    $region56: #{fused_lstm_forward.1} parent=1 // pred_region
      %3691 = dma.done [#allocation5], 32
    $region57: #{fused_lstm_forward.1} parent=1 // pred_fallthru
      _
    %3692 = vsyncpa [#allocation4], 1
    %3693 = vsyncpa [#allocation7], 1
    %3694 = vsyncpa [#allocation5], 1

</llo_original>
